<compile_context>
chip_gen: v7x
topology: tpu7x:2x2x1
jax: 0.10.0
libtpu: 0.0.40
codegen_flags: <defaults>
</compile_context>

<pallas_src>
import math
import jax
import jax.numpy as jnp
from jax.experimental import pallas as pl
from jax.experimental.pallas import tpu as pltpu

_LANES = 128


def _adj_apply(adj, s):
    """h[b,n,f] = sum_m adj[b,n,m] * s[b,m,f] as an unrolled VPU contraction.

    N is tiny, so a batched (N,N)@(N,F) dot_general would serialize into BG
    matmuls that each use only N of the 128/256 MXU rows and pay the full MXU
    push/drain latency.  A broadcast-mul-accumulate on the VPU is far cheaper
    and keeps the adjacency in f32.
    """
    n = adj.shape[-1]
    out = adj[:, :, 0:1] * s[:, 0:1, :]
    for m in range(1, n):
        out = out + adj[:, :, m:m + 1] * s[:, m:m + 1, :]
    return out


def _graph_classifier_kernel(x_ref, adj_ref, w1_ref, w2_ref, wm1_ref, wm2_ref,
                             out_ref):
    # x_ref  : (BG, N, F_in)    f32
    # adj_ref: (BG, N, N)       f32
    # w1_ref : (F_in,  F_out)   f32
    # w2_ref : (F_out, F_out)   f32
    # wm1_ref: (F_out+1, F_hid) f32  (bm1 folded into the last row)
    # wm2_ref: (F_hid+1, L_pad) f32  (bm2 folded into the last row)
    # out_ref: (BG, L_pad)      f32  lane-dense padded logits
    BG, N, F_in = x_ref.shape
    F_out = w1_ref.shape[1]
    F_hid = wm1_ref.shape[1]
    inv_n = 1.0 / N

    x = x_ref[...]
    adj = adj_ref[...]

    # bf16 MXU operands, f32 accumulation; casts ride the free VPU slot.
    w1 = w1_ref[...].astype(jnp.bfloat16)
    w2 = w2_ref[...].astype(jnp.bfloat16)

    # --- GCN layer 1: relu(adj @ (x @ W1)) ---
    # One stacked (BG*N, F_in) @ (F_in, F_out) matmul for the whole group.
    xw = jnp.dot(x.reshape(BG * N, F_in).astype(jnp.bfloat16), w1,
                 preferred_element_type=jnp.float32)
    h1 = jnp.maximum(_adj_apply(adj, xw.reshape(BG, N, F_out)), 0.0)

    # --- GCN layer 2: relu(adj @ (h1 @ W2)) ---
    hw = jnp.dot(h1.reshape(BG * N, F_out).astype(jnp.bfloat16), w2,
                 preferred_element_type=jnp.float32)
    h2 = jnp.maximum(_adj_apply(adj, hw.reshape(BG, N, F_out)), 0.0)

    # --- mean pooling over nodes (dim=1 in PyTorch), kept in f32 ---
    pooled = jnp.sum(h2, axis=1) * inv_n                        # (BG, F_out)

    # --- MLP: Linear -> ReLU -> Dropout(eval: identity) -> Linear ---
    # TODO(synk): Dropout(0.5) is identity in eval mode; training-mode RNG
    #             mask (pltpu.prng_*) not implemented.
    wm1 = wm1_ref[0:F_out, :].astype(jnp.bfloat16)
    bm1 = wm1_ref[F_out:F_out + 1, :]                           # (1, F_hid) f32
    z = jnp.dot(pooled.astype(jnp.bfloat16), wm1,
                preferred_element_type=jnp.float32) + bm1
    z = jnp.maximum(z, 0.0)                                     # (BG, F_hid)

    wm2 = wm2_ref[0:F_hid, :].astype(jnp.bfloat16)
    bm2 = wm2_ref[F_hid:F_hid + 1, :]                           # (1, L_pad) f32
    logits = jnp.dot(z.astype(jnp.bfloat16), wm2,
                     preferred_element_type=jnp.float32) + bm2

    out_ref[...] = logits.astype(out_ref.dtype)                 # (BG, L_pad)


def _pick_block_batch(B, N):
    """Choose BG so BG*N >= 256 stacked rows, sublane-aligned, grid >= 2."""
    bg = -(-256 // max(N, 1))              # ceil(256 / N)
    bg = ((bg + 7) // 8) * 8               # multiple of 8 (output sublane dim)
    half = max(8, (B // 2) // 8 * 8)       # keep >= 2 grid steps (v7x: 2 TCs)
    return max(8, min(bg, half))


def graph_classifier_forward(x, adj, params, *, block_batch=None):
    """x: (B, N, F_in) f32, adj: (B, N, N) f32 -> logits (B, n_labels) f32."""
    B, N, F_in = x.shape
    w1, w2 = params["w1"], params["w2"]
    wm1, bm1 = params["wm1"], params["bm1"]
    wm2, bm2 = params["wm2"], params["bm2"]
    F_out = w1.shape[1]
    F_hid = wm1.shape[1]
    n_labels = wm2.shape[1]

    # --- batch grouping ---
    BG = block_batch if block_batch is not None else _pick_block_batch(B, N)
    assert BG % 8 == 0, "block_batch must be a multiple of 8"
    B_pad = pl.cdiv(B, BG) * BG
    if B_pad != B:
        pad_b = B_pad - B
        x = jnp.concatenate([x, jnp.zeros((pad_b, N, F_in), x.dtype)], axis=0)
        adj = jnp.concatenate([adj, jnp.zeros((pad_b, N, N), adj.dtype)], axis=0)

    # --- lane-dense output: pad label dim to 128 lanes with zero columns ---
    L_pad = pl.cdiv(n_labels, _LANES) * _LANES

    # --- fold biases into the MLP weights as an extra (last) row ---
    wm1_aug = jnp.concatenate(
        [wm1.astype(jnp.float32), bm1.reshape(1, F_hid).astype(jnp.float32)],
        axis=0)                                                 # (F_out+1, F_hid)
    wm2_p = jnp.zeros((F_hid, L_pad), jnp.float32).at[:, :n_labels].set(
        wm2.astype(jnp.float32))
    bm2_p = jnp.zeros((1, L_pad), jnp.float32).at[:, :n_labels].set(
        bm2.reshape(1, n_labels).astype(jnp.float32))
    wm2_aug = jnp.concatenate([wm2_p, bm2_p], axis=0)           # (F_hid+1, L_pad)

    # Inputs stay f32 at the call boundary; in-kernel casts feed the MXU.
    x_f = x.astype(jnp.float32)
    adj_f = adj.astype(jnp.float32)
    w1_f = w1.astype(jnp.float32)
    w2_f = w2.astype(jnp.float32)

    grid = (B_pad // BG,)

    flops = B_pad * (2 * N * F_in * F_out + 2 * N * N * F_out +
                     2 * N * F_out * F_out + 2 * N * N * F_out +
                     2 * F_out * F_hid + 2 * F_hid * L_pad)
    bytes_accessed = 4 * (B_pad * N * F_in + B_pad * N * N + B_pad * L_pad +
                          F_in * F_out + F_out * F_out +
                          (F_out + 1) * F_hid + (F_hid + 1) * L_pad)

    grid_spec = pltpu.PrefetchScalarGridSpec(
        num_scalar_prefetch=0,
        grid=grid,
        in_specs=[
            pl.BlockSpec((BG, N, F_in), lambda g: (g, 0, 0)),
            pl.BlockSpec((BG, N, N), lambda g: (g, 0, 0)),
            pl.BlockSpec((F_in, F_out), lambda g: (0, 0)),
            pl.BlockSpec((F_out, F_out), lambda g: (0, 0)),
            pl.BlockSpec((F_out + 1, F_hid), lambda g: (0, 0)),
            pl.BlockSpec((F_hid + 1, L_pad), lambda g: (0, 0)),
        ],
        out_specs=pl.BlockSpec((BG, L_pad), lambda g: (g, 0)),
    )

    out_padded = pl.pallas_call(
        _graph_classifier_kernel,
        out_shape=jax.ShapeDtypeStruct((B_pad, L_pad), jnp.float32),
        grid_spec=grid_spec,
        compiler_params=pltpu.CompilerParams(
            dimension_semantics=("parallel",),
            vmem_limit_bytes=32 * 1024 * 1024,
        ),
        cost_estimate=pl.CostEstimate(flops=flops, transcendentals=0,
                                      bytes_accessed=bytes_accessed),
    )(x_f, adj_f, w1_f, w2_f, wm1_aug, wm2_aug)

    return out_padded[:B, :n_labels]


def init_params(key, in_features, out_features, n_labels):
    """Deterministic init mirroring the PyTorch module's parameter shapes."""
    k1, k2, k3, k4, k5, k6 = jax.random.split(key, 6)
    hid = out_features // 4

    # GraphConvolution: uniform(-stdv, stdv), stdv = 1/sqrt(out_features); bias=False
    stdv = 1.0 / math.sqrt(out_features)
    w1 = jax.random.uniform(k1, (in_features, out_features), jnp.float32,
                            -stdv, stdv)
    w2 = jax.random.uniform(k2, (out_features, out_features), jnp.float32,
                            -stdv, stdv)

    # nn.Linear default init: uniform(-1/sqrt(fan_in), 1/sqrt(fan_in))
    bnd1 = 1.0 / math.sqrt(out_features)
    wm1 = jax.random.uniform(k3, (out_features, hid), jnp.float32, -bnd1, bnd1)
    bm1 = jax.random.uniform(k4, (1, hid), jnp.float32, -bnd1, bnd1)
    bnd2 = 1.0 / math.sqrt(hid)
    wm2 = jax.random.uniform(k5, (hid, n_labels), jnp.float32, -bnd2, bnd2)
    bm2 = jax.random.uniform(k6, (1, n_labels), jnp.float32, -bnd2, bnd2)

    return {"w1": w1, "w2": w2, "wm1": wm1, "bm1": bm1, "wm2": wm2, "bm2": bm2}


def reference_forward(x, adj, params):
    """Pure-JAX f32 reference of the PyTorch forward (eval mode)."""
    h = jnp.maximum(jnp.einsum("bnm,bmf->bnf", adj, x @ params["w1"]), 0.0)
    h = jnp.maximum(jnp.einsum("bnm,bmf->bnf", adj, h @ params["w2"]), 0.0)
    g = h.mean(axis=1)
    z = jnp.maximum(g @ params["wm1"] + params["bm1"], 0.0)
    return z @ params["wm2"] + params["bm2"]


if __name__ == "__main__":
    key = jax.random.PRNGKey(0)
    k_x, k_adj, k_p = jax.random.split(key, 3)

    B, N = 128, 8
    in_features, out_features, n_labels = 16, 32, 4

    x = jax.random.normal(k_x, (B, N, in_features), jnp.float32)
    # symmetric row-normalized adjacency (values only matter for numerics)
    a = jax.random.uniform(k_adj, (B, N, N), jnp.float32)
    adj = (a + jnp.swapaxes(a, 1, 2)) * 0.5
    adj = adj / jnp.sum(adj, axis=-1, keepdims=True)

    params = init_params(k_p, in_features, out_features, n_labels)

    out = graph_classifier_forward(x, adj, params)   # auto BG -> 32, grid = 4
    out = jax.block_until_ready(out)

    ref = reference_forward(x, adj, params)
    assert out.shape == (B, n_labels), out.shape
    # bf16 MXU operands (f32 accumulation, f32 adjacency path) vs f32 reference
    assert jnp.allclose(out, ref, atol=3e-2, rtol=3e-2), (
        float(jnp.max(jnp.abs(out - ref))))

    print("KERNEL_OK")
</pallas_src>

<mosaic_0001>
module attributes {stable_mosaic.version = 11 : i64} {
  func.func @_graph_classifier_kernel(%arg0: i32, %arg1: memref<32x8x16xf32, #tpu.memory_space<vmem>>, %arg2: memref<32x8x8xf32, #tpu.memory_space<vmem>>, %arg3: memref<16x32xf32, #tpu.memory_space<vmem>>, %arg4: memref<32x32xf32, #tpu.memory_space<vmem>>, %arg5: memref<33x8xf32, #tpu.memory_space<vmem>>, %arg6: memref<9x128xf32, #tpu.memory_space<vmem>>, %arg7: memref<32x128xf32, #tpu.memory_space<vmem>>) attributes {dimension_semantics = [#tpu.dimension_semantics<parallel>], iteration_bounds = array<i64: 4>, scalar_prefetch = 0 : i64, scratch_operands = 0 : i64, tpu.core_type = #tpu.core_type<tc>, window_params = [{transform_indices = @transform_0, window_bounds = array<i64: 32, 8, 16>}, {transform_indices = @transform_1, window_bounds = array<i64: 32, 8, 8>}, {pipeline_mode = #tpu.pipeline_mode<synchronous>, transform_indices = @transform_2, window_bounds = array<i64: 16, 32>}, {pipeline_mode = #tpu.pipeline_mode<synchronous>, transform_indices = @transform_3, window_bounds = array<i64: 32, 32>}, {pipeline_mode = #tpu.pipeline_mode<synchronous>, transform_indices = @transform_4, window_bounds = array<i64: 33, 8>}, {pipeline_mode = #tpu.pipeline_mode<synchronous>, transform_indices = @transform_5, window_bounds = array<i64: 9, 128>}, {transform_indices = @transform_6, window_bounds = array<i64: 32, 128>}]} {
    %c0 = arith.constant 0 : index
    %c0_0 = arith.constant 0 : index
    %c0_1 = arith.constant 0 : index
    %0 = vector.load %arg1[%c0, %c0_0, %c0_1] : memref<32x8x16xf32, #tpu.memory_space<vmem>>, vector<32x8x16xf32>
    %c0_2 = arith.constant 0 : index
    %c0_3 = arith.constant 0 : index
    %c0_4 = arith.constant 0 : index
    %1 = vector.load %arg2[%c0_2, %c0_3, %c0_4] : memref<32x8x8xf32, #tpu.memory_space<vmem>>, vector<32x8x8xf32>
    %c0_5 = arith.constant 0 : index
    %c0_6 = arith.constant 0 : index
    %2 = vector.load %arg3[%c0_5, %c0_6] : memref<16x32xf32, #tpu.memory_space<vmem>>, vector<16x32xf32>
    %3 = arith.truncf %2 : vector<16x32xf32> to vector<16x32xbf16>
    %c0_7 = arith.constant 0 : index
    %c0_8 = arith.constant 0 : index
    %4 = vector.load %arg4[%c0_7, %c0_8] : memref<32x32xf32, #tpu.memory_space<vmem>>, vector<32x32xf32>
    %5 = arith.truncf %4 : vector<32x32xf32> to vector<32x32xbf16>
    %6 = vector.shape_cast %0 : vector<32x8x16xf32> to vector<256x16xf32>
    %7 = arith.truncf %6 : vector<256x16xf32> to vector<256x16xbf16>
    %cst = arith.constant dense<0.000000e+00> : vector<256x32xf32>
    %8 = tpu.matmul %7, %3, %cst {dimension_numbers = #tpu.dot_dimension_numbers<[1], [0], [0], [1], [0, 0, 1, 1], [], []>} : vector<256x16xbf16>, vector<16x32xbf16>, vector<256x32xf32> -> vector<256x32xf32>
    %9 = vector.shape_cast %8 : vector<256x32xf32> to vector<32x8x32xf32>
    %10 = vector.extract_strided_slice %1 {offsets = [0, 0, 0], sizes = [32, 8, 1], strides = [1, 1, 1]} : vector<32x8x8xf32> to vector<32x8x1xf32>
    %11 = vector.extract_strided_slice %9 {offsets = [0, 0, 0], sizes = [32, 1, 32], strides = [1, 1, 1]} : vector<32x8x32xf32> to vector<32x1x32xf32>
    %12 = vector.broadcast %10 : vector<32x8x1xf32> to vector<32x8x32xf32>
    %13 = vector.broadcast %11 : vector<32x1x32xf32> to vector<32x8x32xf32>
    %14 = arith.mulf %12, %13 : vector<32x8x32xf32>
    %15 = vector.extract_strided_slice %1 {offsets = [0, 0, 1], sizes = [32, 8, 1], strides = [1, 1, 1]} : vector<32x8x8xf32> to vector<32x8x1xf32>
    %16 = vector.extract_strided_slice %9 {offsets = [0, 1, 0], sizes = [32, 1, 32], strides = [1, 1, 1]} : vector<32x8x32xf32> to vector<32x1x32xf32>
    %17 = vector.broadcast %15 : vector<32x8x1xf32> to vector<32x8x32xf32>
    %18 = vector.broadcast %16 : vector<32x1x32xf32> to vector<32x8x32xf32>
    %19 = arith.mulf %17, %18 : vector<32x8x32xf32>
    %20 = arith.addf %14, %19 : vector<32x8x32xf32>
    %21 = vector.extract_strided_slice %1 {offsets = [0, 0, 2], sizes = [32, 8, 1], strides = [1, 1, 1]} : vector<32x8x8xf32> to vector<32x8x1xf32>
    %22 = vector.extract_strided_slice %9 {offsets = [0, 2, 0], sizes = [32, 1, 32], strides = [1, 1, 1]} : vector<32x8x32xf32> to vector<32x1x32xf32>
    %23 = vector.broadcast %21 : vector<32x8x1xf32> to vector<32x8x32xf32>
    %24 = vector.broadcast %22 : vector<32x1x32xf32> to vector<32x8x32xf32>
    %25 = arith.mulf %23, %24 : vector<32x8x32xf32>
    %26 = arith.addf %20, %25 : vector<32x8x32xf32>
    %27 = vector.extract_strided_slice %1 {offsets = [0, 0, 3], sizes = [32, 8, 1], strides = [1, 1, 1]} : vector<32x8x8xf32> to vector<32x8x1xf32>
    %28 = vector.extract_strided_slice %9 {offsets = [0, 3, 0], sizes = [32, 1, 32], strides = [1, 1, 1]} : vector<32x8x32xf32> to vector<32x1x32xf32>
    %29 = vector.broadcast %27 : vector<32x8x1xf32> to vector<32x8x32xf32>
    %30 = vector.broadcast %28 : vector<32x1x32xf32> to vector<32x8x32xf32>
    %31 = arith.mulf %29, %30 : vector<32x8x32xf32>
    %32 = arith.addf %26, %31 : vector<32x8x32xf32>
    %33 = vector.extract_strided_slice %1 {offsets = [0, 0, 4], sizes = [32, 8, 1], strides = [1, 1, 1]} : vector<32x8x8xf32> to vector<32x8x1xf32>
    %34 = vector.extract_strided_slice %9 {offsets = [0, 4, 0], sizes = [32, 1, 32], strides = [1, 1, 1]} : vector<32x8x32xf32> to vector<32x1x32xf32>
    %35 = vector.broadcast %33 : vector<32x8x1xf32> to vector<32x8x32xf32>
    %36 = vector.broadcast %34 : vector<32x1x32xf32> to vector<32x8x32xf32>
    %37 = arith.mulf %35, %36 : vector<32x8x32xf32>
    %38 = arith.addf %32, %37 : vector<32x8x32xf32>
    %39 = vector.extract_strided_slice %1 {offsets = [0, 0, 5], sizes = [32, 8, 1], strides = [1, 1, 1]} : vector<32x8x8xf32> to vector<32x8x1xf32>
    %40 = vector.extract_strided_slice %9 {offsets = [0, 5, 0], sizes = [32, 1, 32], strides = [1, 1, 1]} : vector<32x8x32xf32> to vector<32x1x32xf32>
    %41 = vector.broadcast %39 : vector<32x8x1xf32> to vector<32x8x32xf32>
    %42 = vector.broadcast %40 : vector<32x1x32xf32> to vector<32x8x32xf32>
    %43 = arith.mulf %41, %42 : vector<32x8x32xf32>
    %44 = arith.addf %38, %43 : vector<32x8x32xf32>
    %45 = vector.extract_strided_slice %1 {offsets = [0, 0, 6], sizes = [32, 8, 1], strides = [1, 1, 1]} : vector<32x8x8xf32> to vector<32x8x1xf32>
    %46 = vector.extract_strided_slice %9 {offsets = [0, 6, 0], sizes = [32, 1, 32], strides = [1, 1, 1]} : vector<32x8x32xf32> to vector<32x1x32xf32>
    %47 = vector.broadcast %45 : vector<32x8x1xf32> to vector<32x8x32xf32>
    %48 = vector.broadcast %46 : vector<32x1x32xf32> to vector<32x8x32xf32>
    %49 = arith.mulf %47, %48 : vector<32x8x32xf32>
    %50 = arith.addf %44, %49 : vector<32x8x32xf32>
    %51 = vector.extract_strided_slice %1 {offsets = [0, 0, 7], sizes = [32, 8, 1], strides = [1, 1, 1]} : vector<32x8x8xf32> to vector<32x8x1xf32>
    %52 = vector.extract_strided_slice %9 {offsets = [0, 7, 0], sizes = [32, 1, 32], strides = [1, 1, 1]} : vector<32x8x32xf32> to vector<32x1x32xf32>
    %53 = vector.broadcast %51 : vector<32x8x1xf32> to vector<32x8x32xf32>
    %54 = vector.broadcast %52 : vector<32x1x32xf32> to vector<32x8x32xf32>
    %55 = arith.mulf %53, %54 : vector<32x8x32xf32>
    %56 = arith.addf %50, %55 : vector<32x8x32xf32>
    %cst_9 = arith.constant 0.000000e+00 : f32
    %57 = vector.broadcast %cst_9 : f32 to vector<32x8x32xf32>
    %58 = arith.maximumf %56, %57 : vector<32x8x32xf32>
    %59 = vector.shape_cast %58 : vector<32x8x32xf32> to vector<256x32xf32>
    %60 = arith.truncf %59 : vector<256x32xf32> to vector<256x32xbf16>
    %cst_10 = arith.constant dense<0.000000e+00> : vector<256x32xf32>
    %61 = tpu.matmul %60, %5, %cst_10 {dimension_numbers = #tpu.dot_dimension_numbers<[1], [0], [0], [1], [0, 0, 1, 1], [], []>} : vector<256x32xbf16>, vector<32x32xbf16>, vector<256x32xf32> -> vector<256x32xf32>
    %62 = vector.shape_cast %61 : vector<256x32xf32> to vector<32x8x32xf32>
    %63 = vector.extract_strided_slice %1 {offsets = [0, 0, 0], sizes = [32, 8, 1], strides = [1, 1, 1]} : vector<32x8x8xf32> to vector<32x8x1xf32>
    %64 = vector.extract_strided_slice %62 {offsets = [0, 0, 0], sizes = [32, 1, 32], strides = [1, 1, 1]} : vector<32x8x32xf32> to vector<32x1x32xf32>
    %65 = vector.broadcast %63 : vector<32x8x1xf32> to vector<32x8x32xf32>
    %66 = vector.broadcast %64 : vector<32x1x32xf32> to vector<32x8x32xf32>
    %67 = arith.mulf %65, %66 : vector<32x8x32xf32>
    %68 = vector.extract_strided_slice %1 {offsets = [0, 0, 1], sizes = [32, 8, 1], strides = [1, 1, 1]} : vector<32x8x8xf32> to vector<32x8x1xf32>
    %69 = vector.extract_strided_slice %62 {offsets = [0, 1, 0], sizes = [32, 1, 32], strides = [1, 1, 1]} : vector<32x8x32xf32> to vector<32x1x32xf32>
    %70 = vector.broadcast %68 : vector<32x8x1xf32> to vector<32x8x32xf32>
    %71 = vector.broadcast %69 : vector<32x1x32xf32> to vector<32x8x32xf32>
    %72 = arith.mulf %70, %71 : vector<32x8x32xf32>
    %73 = arith.addf %67, %72 : vector<32x8x32xf32>
    %74 = vector.extract_strided_slice %1 {offsets = [0, 0, 2], sizes = [32, 8, 1], strides = [1, 1, 1]} : vector<32x8x8xf32> to vector<32x8x1xf32>
    %75 = vector.extract_strided_slice %62 {offsets = [0, 2, 0], sizes = [32, 1, 32], strides = [1, 1, 1]} : vector<32x8x32xf32> to vector<32x1x32xf32>
    %76 = vector.broadcast %74 : vector<32x8x1xf32> to vector<32x8x32xf32>
    %77 = vector.broadcast %75 : vector<32x1x32xf32> to vector<32x8x32xf32>
    %78 = arith.mulf %76, %77 : vector<32x8x32xf32>
    %79 = arith.addf %73, %78 : vector<32x8x32xf32>
    %80 = vector.extract_strided_slice %1 {offsets = [0, 0, 3], sizes = [32, 8, 1], strides = [1, 1, 1]} : vector<32x8x8xf32> to vector<32x8x1xf32>
    %81 = vector.extract_strided_slice %62 {offsets = [0, 3, 0], sizes = [32, 1, 32], strides = [1, 1, 1]} : vector<32x8x32xf32> to vector<32x1x32xf32>
    %82 = vector.broadcast %80 : vector<32x8x1xf32> to vector<32x8x32xf32>
    %83 = vector.broadcast %81 : vector<32x1x32xf32> to vector<32x8x32xf32>
    %84 = arith.mulf %82, %83 : vector<32x8x32xf32>
    %85 = arith.addf %79, %84 : vector<32x8x32xf32>
    %86 = vector.extract_strided_slice %1 {offsets = [0, 0, 4], sizes = [32, 8, 1], strides = [1, 1, 1]} : vector<32x8x8xf32> to vector<32x8x1xf32>
    %87 = vector.extract_strided_slice %62 {offsets = [0, 4, 0], sizes = [32, 1, 32], strides = [1, 1, 1]} : vector<32x8x32xf32> to vector<32x1x32xf32>
    %88 = vector.broadcast %86 : vector<32x8x1xf32> to vector<32x8x32xf32>
    %89 = vector.broadcast %87 : vector<32x1x32xf32> to vector<32x8x32xf32>
    %90 = arith.mulf %88, %89 : vector<32x8x32xf32>
    %91 = arith.addf %85, %90 : vector<32x8x32xf32>
    %92 = vector.extract_strided_slice %1 {offsets = [0, 0, 5], sizes = [32, 8, 1], strides = [1, 1, 1]} : vector<32x8x8xf32> to vector<32x8x1xf32>
    %93 = vector.extract_strided_slice %62 {offsets = [0, 5, 0], sizes = [32, 1, 32], strides = [1, 1, 1]} : vector<32x8x32xf32> to vector<32x1x32xf32>
    %94 = vector.broadcast %92 : vector<32x8x1xf32> to vector<32x8x32xf32>
    %95 = vector.broadcast %93 : vector<32x1x32xf32> to vector<32x8x32xf32>
    %96 = arith.mulf %94, %95 : vector<32x8x32xf32>
    %97 = arith.addf %91, %96 : vector<32x8x32xf32>
    %98 = vector.extract_strided_slice %1 {offsets = [0, 0, 6], sizes = [32, 8, 1], strides = [1, 1, 1]} : vector<32x8x8xf32> to vector<32x8x1xf32>
    %99 = vector.extract_strided_slice %62 {offsets = [0, 6, 0], sizes = [32, 1, 32], strides = [1, 1, 1]} : vector<32x8x32xf32> to vector<32x1x32xf32>
    %100 = vector.broadcast %98 : vector<32x8x1xf32> to vector<32x8x32xf32>
    %101 = vector.broadcast %99 : vector<32x1x32xf32> to vector<32x8x32xf32>
    %102 = arith.mulf %100, %101 : vector<32x8x32xf32>
    %103 = arith.addf %97, %102 : vector<32x8x32xf32>
    %104 = vector.extract_strided_slice %1 {offsets = [0, 0, 7], sizes = [32, 8, 1], strides = [1, 1, 1]} : vector<32x8x8xf32> to vector<32x8x1xf32>
    %105 = vector.extract_strided_slice %62 {offsets = [0, 7, 0], sizes = [32, 1, 32], strides = [1, 1, 1]} : vector<32x8x32xf32> to vector<32x1x32xf32>
    %106 = vector.broadcast %104 : vector<32x8x1xf32> to vector<32x8x32xf32>
    %107 = vector.broadcast %105 : vector<32x1x32xf32> to vector<32x8x32xf32>
    %108 = arith.mulf %106, %107 : vector<32x8x32xf32>
    %109 = arith.addf %103, %108 : vector<32x8x32xf32>
    %cst_11 = arith.constant 0.000000e+00 : f32
    %110 = vector.broadcast %cst_11 : f32 to vector<32x8x32xf32>
    %111 = arith.maximumf %109, %110 : vector<32x8x32xf32>
    %cst_12 = arith.constant dense<0.000000e+00> : vector<32x32xf32>
    %112 = vector.multi_reduction <add>, %111, %cst_12 [1] : vector<32x8x32xf32> to vector<32x32xf32>
    %cst_13 = arith.constant 1.250000e-01 : f32
    %113 = vector.broadcast %cst_13 : f32 to vector<32x32xf32>
    %114 = arith.mulf %112, %113 : vector<32x32xf32>
    %c0_14 = arith.constant 0 : index
    %c0_15 = arith.constant 0 : index
    %115 = vector.load %arg5[%c0_14, %c0_15] : memref<33x8xf32, #tpu.memory_space<vmem>>, vector<32x8xf32>
    %116 = arith.truncf %115 : vector<32x8xf32> to vector<32x8xbf16>
    %c32 = arith.constant 32 : index
    %c0_16 = arith.constant 0 : index
    %117 = vector.load %arg5[%c32, %c0_16] : memref<33x8xf32, #tpu.memory_space<vmem>>, vector<1x8xf32>
    %118 = arith.truncf %114 : vector<32x32xf32> to vector<32x32xbf16>
    %cst_17 = arith.constant dense<0.000000e+00> : vector<32x8xf32>
    %119 = tpu.matmul %118, %116, %cst_17 {dimension_numbers = #tpu.dot_dimension_numbers<[1], [0], [0], [1], [0, 0, 1, 1], [], []>} : vector<32x32xbf16>, vector<32x8xbf16>, vector<32x8xf32> -> vector<32x8xf32>
    %120 = vector.broadcast %117 : vector<1x8xf32> to vector<32x8xf32>
    %121 = arith.addf %119, %120 : vector<32x8xf32>
    %cst_18 = arith.constant 0.000000e+00 : f32
    %122 = vector.broadcast %cst_18 : f32 to vector<32x8xf32>
    %123 = arith.maximumf %121, %122 : vector<32x8xf32>
    %c0_19 = arith.constant 0 : index
    %c0_20 = arith.constant 0 : index
    %124 = vector.load %arg6[%c0_19, %c0_20] : memref<9x128xf32, #tpu.memory_space<vmem>>, vector<8x128xf32>
    %125 = arith.truncf %124 : vector<8x128xf32> to vector<8x128xbf16>
    %c8 = arith.constant 8 : index
    %c0_21 = arith.constant 0 : index
    %126 = vector.load %arg6[%c8, %c0_21] : memref<9x128xf32, #tpu.memory_space<vmem>>, vector<1x128xf32>
    %127 = arith.truncf %123 : vector<32x8xf32> to vector<32x8xbf16>
    %cst_22 = arith.constant dense<0.000000e+00> : vector<32x128xf32>
    %128 = tpu.matmul %127, %125, %cst_22 {dimension_numbers = #tpu.dot_dimension_numbers<[1], [0], [0], [1], [0, 0, 1, 1], [], []>} : vector<32x8xbf16>, vector<8x128xbf16>, vector<32x128xf32> -> vector<32x128xf32>
    %129 = vector.broadcast %126 : vector<1x128xf32> to vector<32x128xf32>
    %130 = arith.addf %128, %129 : vector<32x128xf32>
    %c0_23 = arith.constant 0 : index
    %c0_24 = arith.constant 0 : index
    %131 = vector.load %arg7[%c0_23, %c0_24] : memref<32x128xf32, #tpu.memory_space<vmem>>, vector<32x128xf32>
    tpu.vector_store %arg7[%c0_23, %c0_24], %130 {strides = array<i32>} : memref<32x128xf32, #tpu.memory_space<vmem>>, vector<32x128xf32>,
    return
  }
  func.func @transform_0(%arg0: i32) -> (i32, i32, i32) {
    %c0_i32 = arith.constant 0 : i32
    %c0_i32_0 = arith.constant 0 : i32
    %c0_i32_1 = arith.constant 0 : i32
    return %arg0, %c0_i32, %c0_i32_0 : i32, i32, i32
  }
  func.func @transform_1(%arg0: i32) -> (i32, i32, i32) {
    %c0_i32 = arith.constant 0 : i32
    %c0_i32_0 = arith.constant 0 : i32
    %c0_i32_1 = arith.constant 0 : i32
    return %arg0, %c0_i32, %c0_i32_0 : i32, i32, i32
  }
  func.func @transform_2(%arg0: i32) -> (i32, i32) {
    %c0_i32 = arith.constant 0 : i32
    %c0_i32_0 = arith.constant 0 : i32
    %c0_i32_1 = arith.constant 0 : i32
    return %c0_i32, %c0_i32_0 : i32, i32
  }
  func.func @transform_3(%arg0: i32) -> (i32, i32) {
    %c0_i32 = arith.constant 0 : i32
    %c0_i32_0 = arith.constant 0 : i32
    %c0_i32_1 = arith.constant 0 : i32
    return %c0_i32, %c0_i32_0 : i32, i32
  }
  func.func @transform_4(%arg0: i32) -> (i32, i32) {
    %c0_i32 = arith.constant 0 : i32
    %c0_i32_0 = arith.constant 0 : i32
    %c0_i32_1 = arith.constant 0 : i32
    return %c0_i32, %c0_i32_0 : i32, i32
  }
  func.func @transform_5(%arg0: i32) -> (i32, i32) {
    %c0_i32 = arith.constant 0 : i32
    %c0_i32_0 = arith.constant 0 : i32
    %c0_i32_1 = arith.constant 0 : i32
    return %c0_i32, %c0_i32_0 : i32, i32
  }
  func.func @transform_6(%arg0: i32) -> (i32, i32) {
    %c0_i32 = arith.constant 0 : i32
    %c0_i32_0 = arith.constant 0 : i32
    return %arg0, %c0_i32 : i32, i32
  }
}

</mosaic_0001>

<llo_original>
// kernel: tpu_custom_call.1
$region0: #{tpu_custom_call.1}
  #allocation0 [shape = 'u32[]', space=smem, size = 0x4, offset = 0x4, fixed_abs, tag = 'smem constant byte address 0x4 - core index']
  #allocation1 [shape = 'u32[144,128]{1,0:T(1,128)}', space=vmem, size = 0x12000, scoped, tag = 'internal scratch']
  %s0 = inlined_call_operand.vmem [shape: f32[128,8,16], index: 0, kind: input, shape index: {}]
  %s1 = inlined_call_operand.vmem [shape: f32[128,8,8], index: 1, kind: input, shape index: {}]
  %s2 = inlined_call_operand.vmem [shape: f32[16,32], index: 2, kind: input, shape index: {}]
  %s3 = inlined_call_operand.vmem [shape: f32[32,32], index: 3, kind: input, shape index: {}]
  %s4 = inlined_call_operand.vmem [shape: f32[33,8], index: 4, kind: input, shape index: {}]
  %s5 = inlined_call_operand.vmem [shape: f32[9,128], index: 5, kind: input, shape index: {}]
  %s6 = inlined_call_operand.hbm [shape: f32[128,128], index: 6, kind: output, shape index: {}]
  %s7 = sld [smem:[#allocation0]]
  $region57: #{tpu_custom_call.1} parent=0
    _
  %s9 = ssub.s32 1, %s7
  %s10 = scalar_select 0, %s9, %s7
  $region1: #{tpu_custom_call.1} parent=0
    #allocation2 [shape = 'u8[32768]{0}', space=vmem, size = 0x8000, scoped, tag = 'output window, operand 0']
    #allocation3 [shape = 's32[2]{0}', space=sflag, size = 0x8, scoped, tag = 'scoped memory for tpu_custom_call.1']
    %11 = vsyncpa [#allocation3], 0
    %s12 = scalar_lea.sflag [#allocation3], 1
    %13 = vsyncpa %s12, 0
    loop: start=0, step=1, limit=6
    $region2: #{tpu_custom_call.1} parent=1 // loop_pre_header
      _
    $region3: #{tpu_custom_call.1} parent=1 // loop_header
      %s15 = sphi 0, %s19
      %p16 = scmp.ge.s32.totalorder %s15, 6
      %s25 = sphi 0, %s27
      %s28 = sphi 0, %s25
      %s29 = sphi 0, %s28
      %s45 = sphi 0, %s29
      %s51 = sphi 0, %s53
      %s54 = sphi 0, %s51
      %s55 = sphi 0, %s54
      %s71 = sphi 0, %s55
      %s75 = sphi 0, %s75
      %s77 = sphi 0, %s75
      %s78 = sphi 0, %s77
      %s92 = sphi 0, %s78
      %s96 = sphi 0, %s96
      %s98 = sphi 0, %s96
      %s99 = sphi 0, %s98
      %s113 = sphi 0, %s99
      %s117 = sphi 0, %s117
      %s119 = sphi 0, %s117
      %s120 = sphi 0, %s119
      %s134 = sphi 0, %s120
      %s138 = sphi 0, %s138
      %s140 = sphi 0, %s138
      %s141 = sphi 0, %s140
      %s155 = sphi 0, %s141
      %s161 = sphi 0, %s163
      %s164 = sphi 0, %s161
      %s165 = sphi 0, %s164
      %s181 = sphi 0, %s165
    $region4: #{tpu_custom_call.1} parent=1 // loop_header_branch
      %18 = sbr.rel (%p16) target = $region8
    $region5: #{tpu_custom_call.1} parent=1 // loop_body
      %s20 = ssub.s32 %s15, 1
      %s21 = ssub.s32 %s15, 2
      %s22 = sadd.s32 %s15, 1
      %s23 = ssub.s32 %s15, %s22
      %p24 = scmp.eq.s32.totalorder %s23, 0
      %s26 = sadd.s32 %s25, 1
      %s27 = scalar_select %p24, %s25, %s26
      %p30 = pneg %p24
      %p31 = scmp.eq.s32.totalorder %s15, 3
      %p32 = por %p30, %p31
      %p33 = scmp.ne.s32.totalorder %s25, %s28
      %p34 = scmp.eq.s32.totalorder %s15, 0
      %p35 = por %p33, %p34
      %p36 = scmp.ne.s32.totalorder %s25, %s28
      %p37 = scmp.eq.s32.totalorder %s20, 3
      %p38 = por %p36, %p37
      %p39 = scmp.ne.s32.totalorder %s28, %s29
      %p40 = scmp.eq.s32.totalorder %s20, 0
      %p41 = por %p39, %p40
      %p42 = scmp.ne.s32.totalorder %s28, %s29
      %p43 = scmp.eq.s32.totalorder %s21, 3
      %p44 = por %p42, %p43
      %p46 = scmp.ne.s32.totalorder %s29, %s45
      %p47 = scmp.eq.s32.totalorder %s21, 0
      %p48 = por %p46, %p47
      %s49 = ssub.s32 %s15, %s22
      %p50 = scmp.eq.s32.totalorder %s49, 0
      %s52 = sadd.s32 %s51, 1
      %s53 = scalar_select %p50, %s51, %s52
      %p56 = pneg %p50
      %p57 = scmp.eq.s32.totalorder %s15, 3
      %p58 = por %p56, %p57
      %p59 = scmp.ne.s32.totalorder %s51, %s54
      %p60 = scmp.eq.s32.totalorder %s15, 0
      %p61 = por %p59, %p60
      %p62 = scmp.ne.s32.totalorder %s51, %s54
      %p63 = scmp.eq.s32.totalorder %s20, 3
      %p64 = por %p62, %p63
      %p65 = scmp.ne.s32.totalorder %s54, %s55
      %p66 = scmp.eq.s32.totalorder %s20, 0
      %p67 = por %p65, %p66
      %p68 = scmp.ne.s32.totalorder %s54, %s55
      %p69 = scmp.eq.s32.totalorder %s21, 3
      %p70 = por %p68, %p69
      %p72 = scmp.ne.s32.totalorder %s55, %s71
      %p73 = scmp.eq.s32.totalorder %s21, 0
      %p74 = por %p72, %p73
      %s76 = sadd.s32 %s75, 1
      %p79 = scmp.eq.s32.totalorder %s15, 3
      %p80 = scmp.ne.s32.totalorder %s75, %s77
      %p81 = scmp.eq.s32.totalorder %s15, 0
      %p82 = por %p80, %p81
      %p83 = scmp.ne.s32.totalorder %s75, %s77
      %p84 = scmp.eq.s32.totalorder %s20, 3
      %p85 = por %p83, %p84
      %p86 = scmp.ne.s32.totalorder %s77, %s78
      %p87 = scmp.eq.s32.totalorder %s20, 0
      %p88 = por %p86, %p87
      %p89 = scmp.ne.s32.totalorder %s77, %s78
      %p90 = scmp.eq.s32.totalorder %s21, 3
      %p91 = por %p89, %p90
      %p93 = scmp.ne.s32.totalorder %s78, %s92
      %p94 = scmp.eq.s32.totalorder %s21, 0
      %p95 = por %p93, %p94
      %s97 = sadd.s32 %s96, 1
      %p100 = scmp.eq.s32.totalorder %s15, 3
      %p101 = scmp.ne.s32.totalorder %s96, %s98
      %p102 = scmp.eq.s32.totalorder %s15, 0
      %p103 = por %p101, %p102
      %p104 = scmp.ne.s32.totalorder %s96, %s98
      %p105 = scmp.eq.s32.totalorder %s20, 3
      %p106 = por %p104, %p105
      %p107 = scmp.ne.s32.totalorder %s98, %s99
      %p108 = scmp.eq.s32.totalorder %s20, 0
      %p109 = por %p107, %p108
      %p110 = scmp.ne.s32.totalorder %s98, %s99
      %p111 = scmp.eq.s32.totalorder %s21, 3
      %p112 = por %p110, %p111
      %p114 = scmp.ne.s32.totalorder %s99, %s113
      %p115 = scmp.eq.s32.totalorder %s21, 0
      %p116 = por %p114, %p115
      %s118 = sadd.s32 %s117, 1
      %p121 = scmp.eq.s32.totalorder %s15, 3
      %p122 = scmp.ne.s32.totalorder %s117, %s119
      %p123 = scmp.eq.s32.totalorder %s15, 0
      %p124 = por %p122, %p123
      %p125 = scmp.ne.s32.totalorder %s117, %s119
      %p126 = scmp.eq.s32.totalorder %s20, 3
      %p127 = por %p125, %p126
      %p128 = scmp.ne.s32.totalorder %s119, %s120
      %p129 = scmp.eq.s32.totalorder %s20, 0
      %p130 = por %p128, %p129
      %p131 = scmp.ne.s32.totalorder %s119, %s120
      %p132 = scmp.eq.s32.totalorder %s21, 3
      %p133 = por %p131, %p132
      %p135 = scmp.ne.s32.totalorder %s120, %s134
      %p136 = scmp.eq.s32.totalorder %s21, 0
      %p137 = por %p135, %p136
      %s139 = sadd.s32 %s138, 1
      %p142 = scmp.eq.s32.totalorder %s15, 3
      %p143 = scmp.ne.s32.totalorder %s138, %s140
      %p144 = scmp.eq.s32.totalorder %s15, 0
      %p145 = por %p143, %p144
      %p146 = scmp.ne.s32.totalorder %s138, %s140
      %p147 = scmp.eq.s32.totalorder %s20, 3
      %p148 = por %p146, %p147
      %p149 = scmp.ne.s32.totalorder %s140, %s141
      %p150 = scmp.eq.s32.totalorder %s20, 0
      %p151 = por %p149, %p150
      %p152 = scmp.ne.s32.totalorder %s140, %s141
      %p153 = scmp.eq.s32.totalorder %s21, 3
      %p154 = por %p152, %p153
      %p156 = scmp.ne.s32.totalorder %s141, %s155
      %p157 = scmp.eq.s32.totalorder %s21, 0
      %p158 = por %p156, %p157
      %s159 = ssub.s32 %s15, %s22
      %p160 = scmp.eq.s32.totalorder %s159, 0
      %s162 = sadd.s32 %s161, 1
      %s163 = scalar_select %p160, %s161, %s162
      %p166 = pneg %p160
      %p167 = scmp.eq.s32.totalorder %s15, 3
      %p168 = por %p166, %p167
      %p169 = scmp.ne.s32.totalorder %s161, %s164
      %p170 = scmp.eq.s32.totalorder %s15, 0
      %p171 = por %p169, %p170
      %p172 = scmp.ne.s32.totalorder %s161, %s164
      %p173 = scmp.eq.s32.totalorder %s20, 3
      %p174 = por %p172, %p173
      %p175 = scmp.ne.s32.totalorder %s164, %s165
      %p176 = scmp.eq.s32.totalorder %s20, 0
      %p177 = por %p175, %p176
      %p178 = scmp.ne.s32.totalorder %s164, %s165
      %p179 = scmp.eq.s32.totalorder %s21, 3
      %p180 = por %p178, %p179
      %p182 = scmp.ne.s32.totalorder %s165, %s181
      %p183 = scmp.eq.s32.totalorder %s21, 0
      %p184 = por %p182, %p183
      %p185 = scmp.le.s32.totalorder 1, %s15
      %p186 = scmp.lt.s32.totalorder %s15, 5
      %p187 = pnand %p185, %p186
      %p188 = pneg %p187
      // Predicated region
      $region9: #{tpu_custom_call.1} parent=5 // pred_check
        _
      $region10: #{tpu_custom_call.1} parent=5 // pred_check_branch
        %190 = sbr.rel (%p187) target = $region12
      $region11: #{tpu_custom_call.1} parent=5 // pred_region
        %s191 = ssub.s32 %s15, 1
        // Predicated region
        $region13: #{tpu_custom_call.1} parent=11 // pred_check
          %p192 = pneg %p88
        $region14: #{tpu_custom_call.1} parent=11 // pred_check_branch
          %194 = sbr.rel (%p192) target = $region16
        $region15: #{tpu_custom_call.1} parent=11 // pred_region
          _
        $region16: #{tpu_custom_call.1} parent=11 // pred_fallthru
          _
        // Predicated region
        $region17: #{tpu_custom_call.1} parent=11 // pred_check
          %p195 = pneg %p109
        $region18: #{tpu_custom_call.1} parent=11 // pred_check_branch
          %197 = sbr.rel (%p195) target = $region20
        $region19: #{tpu_custom_call.1} parent=11 // pred_region
          _
        $region20: #{tpu_custom_call.1} parent=11 // pred_fallthru
          _
        // Predicated region
        $region21: #{tpu_custom_call.1} parent=11 // pred_check
          %p198 = pneg %p130
        $region22: #{tpu_custom_call.1} parent=11 // pred_check_branch
          %200 = sbr.rel (%p198) target = $region24
        $region23: #{tpu_custom_call.1} parent=11 // pred_region
          _
        $region24: #{tpu_custom_call.1} parent=11 // pred_fallthru
          _
        // Predicated region
        $region25: #{tpu_custom_call.1} parent=11 // pred_check
          %p201 = pneg %p151
        $region26: #{tpu_custom_call.1} parent=11 // pred_check_branch
          %203 = sbr.rel (%p201) target = $region28
        $region27: #{tpu_custom_call.1} parent=11 // pred_region
          _
        $region28: #{tpu_custom_call.1} parent=11 // pred_fallthru
          _
      $region12: #{tpu_custom_call.1} parent=5 // pred_fallthru
        _
      %p204 = scmp.lt.s32.totalorder %s15, 4
      // Predicated region
      $region29: #{tpu_custom_call.1} parent=5 // pred_check
        %p205 = pneg %p204
      $region30: #{tpu_custom_call.1} parent=5 // pred_check_branch
        %207 = sbr.rel (%p205) target = $region32
      $region31: #{tpu_custom_call.1} parent=5 // pred_region
        // Predicated region
        $region33: #{tpu_custom_call.1} parent=31 // pred_check
          %p208 = pneg %p35
        $region34: #{tpu_custom_call.1} parent=31 // pred_check_branch
          %210 = sbr.rel (%p208) target = $region36
        $region35: #{tpu_custom_call.1} parent=31 // pred_region
          %s211 = smul.u32 32, %s15
          %p212 = scmp.lt.s32.totalorder %s211, 127
          %s213 = scalar_select %p212, %s211, 127
          %s214 = smul.addr %s213, 8
          %s215 = scalar_lea.vmem %s0, %s214
          %s216 = smul.u32 32, %s15
        $region36: #{tpu_custom_call.1} parent=31 // pred_fallthru
          _
        // Predicated region
        $region37: #{tpu_custom_call.1} parent=31 // pred_check
          %p217 = pneg %p61
        $region38: #{tpu_custom_call.1} parent=31 // pred_check_branch
          %219 = sbr.rel (%p217) target = $region40
        $region39: #{tpu_custom_call.1} parent=31 // pred_region
          %s220 = smul.u32 32, %s15
          %p221 = scmp.lt.s32.totalorder %s220, 127
          %s222 = scalar_select %p221, %s220, 127
          %s223 = smul.addr %s222, 8
          %s224 = scalar_lea.vmem %s1, %s223
          %s225 = smul.u32 32, %s15
        $region40: #{tpu_custom_call.1} parent=31 // pred_fallthru
          _
      $region32: #{tpu_custom_call.1} parent=5 // pred_fallthru
        _
      %p226 = scmp.le.s32.totalorder 1, %s15
      %p227 = scmp.lt.s32.totalorder %s15, 5
      %p228 = pnand %p226, %p227
      %p229 = pneg %p228
      // Predicated region
      $region41: #{tpu_custom_call.1} parent=5 // pred_check
        _
      $region42: #{tpu_custom_call.1} parent=5 // pred_check_branch
        %231 = sbr.rel (%p228) target = $region44
      $region43: #{tpu_custom_call.1} parent=5 // pred_region
        %s232 = ssub.s32 %s15, 1
        %s233 = smul.u32 32, %s20
        %p234 = scmp.lt.s32.totalorder %s233, 127
        %s235 = scalar_select %p234, %s233, 127
        %s236 = smul.addr %s235, 8
        %s237 = scalar_lea.vmem %s0, %s236
        %p238 = pneg %p41
        %p239 = pneg %p38
        %s240 = smul.u32 32, %s20
        %p241 = scmp.lt.s32.totalorder %s240, 127
        %s242 = scalar_select %p241, %s240, 127
        %s243 = smul.addr %s242, 8
        %s244 = scalar_lea.vmem %s1, %s243
        %p245 = pneg %p67
        %p246 = pneg %p64
        %p247 = pneg %p88
        %p248 = pneg %p85
        %p249 = pneg %p109
        %p250 = pneg %p106
        %p251 = pneg %p130
        %p252 = pneg %p127
        %p253 = pneg %p151
        %p254 = pneg %p148
        %p255 = pneg %p177
        %p256 = pneg %p174
        %s257 = sand.u32 %s164, 1
        %s258 = scalar_lea.sflag [#allocation3], %s257
        %s259 = sand.u32 %s164, 1
        %s260 = smul.addr %s259, 32
        %s261 = scalar_lea.vmem [#allocation2], %s260
        %s262 = smul.u32 32, %s20
        %p263 = scmp.lt.s32.totalorder %s262, 127
        %s264 = scalar_select %p263, %s262, 127
        %s265 = smul.addr %s264, 8
        %s266 = scalar_lea.vmem %s0, %s265
        %s267 = smul.u32 32, %s20
        %s268 = smul.u32 32, %s20
        %p269 = scmp.lt.s32.totalorder %s268, 127
        %s270 = scalar_select %p269, %s268, 127
        %s271 = smul.addr %s270, 8
        %s272 = scalar_lea.vmem %s1, %s271
        %s273 = smul.u32 32, %s20
        %s274 = smul.u32 4, %s20
        %v276 = vld [vmem:[%s266] sm:$0xff]
        %v277 = vld [vmem:[%s266 + $0x8] sm:$0xff]
        %v278 = vld [vmem:[%s266 + $0x10] sm:$0xff]
        %v279 = vld [vmem:[%s266 + $0x18] sm:$0xff]
        %v280 = vld [vmem:[%s266 + $0x20] sm:$0xff]
        %v281 = vld [vmem:[%s266 + $0x28] sm:$0xff]
        %v282 = vld [vmem:[%s266 + $0x30] sm:$0xff]
        %v283 = vld [vmem:[%s266 + $0x38] sm:$0xff]
        %v284 = vld [vmem:[%s266 + $0x40] sm:$0xff]
        %v285 = vld [vmem:[%s266 + $0x48] sm:$0xff]
        %v286 = vld [vmem:[%s266 + $0x50] sm:$0xff]
        %v287 = vld [vmem:[%s266 + $0x58] sm:$0xff]
        %v288 = vld [vmem:[%s266 + $0x60] sm:$0xff]
        %v289 = vld [vmem:[%s266 + $0x68] sm:$0xff]
        %v290 = vld [vmem:[%s266 + $0x70] sm:$0xff]
        %v291 = vld [vmem:[%s266 + $0x78] sm:$0xff]
        %v292 = vld [vmem:[%s266 + $0x80] sm:$0xff]
        %v293 = vld [vmem:[%s266 + $0x88] sm:$0xff]
        %v294 = vld [vmem:[%s266 + $0x90] sm:$0xff]
        %v295 = vld [vmem:[%s266 + $0x98] sm:$0xff]
        %v296 = vld [vmem:[%s266 + $0xa0] sm:$0xff]
        %v297 = vld [vmem:[%s266 + $0xa8] sm:$0xff]
        %v298 = vld [vmem:[%s266 + $0xb0] sm:$0xff]
        %v299 = vld [vmem:[%s266 + $0xb8] sm:$0xff]
        %v300 = vld [vmem:[%s266 + $0xc0] sm:$0xff]
        %v301 = vld [vmem:[%s266 + $0xc8] sm:$0xff]
        %v302 = vld [vmem:[%s266 + $0xd0] sm:$0xff]
        %v303 = vld [vmem:[%s266 + $0xd8] sm:$0xff]
        %v304 = vld [vmem:[%s266 + $0xe0] sm:$0xff]
        %v305 = vld [vmem:[%s266 + $0xe8] sm:$0xff]
        %v306 = vld [vmem:[%s266 + $0xf0] sm:$0xff]
        %v307 = vld [vmem:[%s266 + $0xf8] sm:$0xff]
        %v308 = vld [vmem:[%s272] sm:$0xff]
        %v309 = vld [vmem:[%s272 + $0x8] sm:$0xff]
        %v310 = vld [vmem:[%s272 + $0x10] sm:$0xff]
        %v311 = vld [vmem:[%s272 + $0x18] sm:$0xff]
        %v312 = vld [vmem:[%s272 + $0x20] sm:$0xff]
        %v313 = vld [vmem:[%s272 + $0x28] sm:$0xff]
        %v314 = vld [vmem:[%s272 + $0x30] sm:$0xff]
        %v315 = vld [vmem:[%s272 + $0x38] sm:$0xff]
        %v316 = vld [vmem:[%s272 + $0x40] sm:$0xff]
        %v317 = vld [vmem:[%s272 + $0x48] sm:$0xff]
        %v318 = vld [vmem:[%s272 + $0x50] sm:$0xff]
        %v319 = vld [vmem:[%s272 + $0x58] sm:$0xff]
        %v320 = vld [vmem:[%s272 + $0x60] sm:$0xff]
        %v321 = vld [vmem:[%s272 + $0x68] sm:$0xff]
        %v322 = vld [vmem:[%s272 + $0x70] sm:$0xff]
        %v323 = vld [vmem:[%s272 + $0x78] sm:$0xff]
        %v324 = vld [vmem:[%s272 + $0x80] sm:$0xff]
        %v325 = vld [vmem:[%s272 + $0x88] sm:$0xff]
        %v326 = vld [vmem:[%s272 + $0x90] sm:$0xff]
        %v327 = vld [vmem:[%s272 + $0x98] sm:$0xff]
        %v328 = vld [vmem:[%s272 + $0xa0] sm:$0xff]
        %v329 = vld [vmem:[%s272 + $0xa8] sm:$0xff]
        %v330 = vld [vmem:[%s272 + $0xb0] sm:$0xff]
        %v331 = vld [vmem:[%s272 + $0xb8] sm:$0xff]
        %v332 = vld [vmem:[%s272 + $0xc0] sm:$0xff]
        %v333 = vld [vmem:[%s272 + $0xc8] sm:$0xff]
        %v334 = vld [vmem:[%s272 + $0xd0] sm:$0xff]
        %v335 = vld [vmem:[%s272 + $0xd8] sm:$0xff]
        %v336 = vld [vmem:[%s272 + $0xe0] sm:$0xff]
        %v337 = vld [vmem:[%s272 + $0xe8] sm:$0xff]
        %v338 = vld [vmem:[%s272 + $0xf0] sm:$0xff]
        %v339 = vld [vmem:[%s272 + $0xf8] sm:$0xff]
        %v340 = vld [vmem:[%s2] sm:$0xff]
        %v341 = vld [vmem:[%s2 + $0x8] sm:$0xff]
        %v342 = vpack.c.bf16 %v341, %v340
        %v343 = vld [vmem:[%s3] sm:$0xff]
        %v344 = vld [vmem:[%s3 + $0x8] sm:$0xff]
        %v345 = vld [vmem:[%s3 + $0x10] sm:$0xff]
        %v346 = vld [vmem:[%s3 + $0x18] sm:$0xff]
        %v347 = vpack.c.bf16 %v344, %v343
        %v348 = vpack.c.bf16 %v346, %v345
        %v349 = vpack.c.bf16 %v277, %v276
        %v350 = vpack.c.bf16 %v279, %v278
        %v351 = vpack.c.bf16 %v281, %v280
        %v352 = vpack.c.bf16 %v283, %v282
        %v353 = vpack.c.bf16 %v285, %v284
        %v354 = vpack.c.bf16 %v287, %v286
        %v355 = vpack.c.bf16 %v289, %v288
        %v356 = vpack.c.bf16 %v291, %v290
        %v357 = vpack.c.bf16 %v293, %v292
        %v358 = vpack.c.bf16 %v295, %v294
        %v359 = vpack.c.bf16 %v297, %v296
        %v360 = vpack.c.bf16 %v299, %v298
        %v361 = vpack.c.bf16 %v301, %v300
        %v362 = vpack.c.bf16 %v303, %v302
        %v363 = vpack.c.bf16 %v305, %v304
        %v364 = vpack.c.bf16 %v307, %v306
        %vm365 = vcmask 130048
        %v367 = vsel %vm365, %v349, 0
        %v370 = vsel %vm365, %v350, 0
        %v373 = vsel %vm365, %v351, 0
        %v376 = vsel %vm365, %v352, 0
        %v379 = vsel %vm365, %v353, 0
        %v382 = vsel %vm365, %v354, 0
        %v385 = vsel %vm365, %v355, 0
        %v388 = vsel %vm365, %v356, 0
        %v391 = vsel %vm365, %v357, 0
        %v394 = vsel %vm365, %v358, 0
        %v397 = vsel %vm365, %v359, 0
        %v400 = vsel %vm365, %v360, 0
        %v403 = vsel %vm365, %v361, 0
        %v406 = vsel %vm365, %v362, 0
        %v409 = vsel %vm365, %v363, 0
        %v412 = vsel %vm365, %v364, 0
        %414 = vmatprep.subr.bf16.mxu0 0
        %415 = vmatpush1.bf16.msra.mxu0 %v342
        %416 = vmatprep.subr.bf16.mxu0 0
        %417 = vmatpush1.bf16.msra.mxu0 0
        %418 = vmatprep.subr.bf16.mxu0 0
        %419 = vmatpush1.bf16.msra.mxu0 0
        %420 = vmatprep.subr.bf16.mxu0 0
        %421 = vmatpush1.bf16.msra.mxu0 0
        %422 = vmatprep.subr.bf16.mxu0 0
        %423 = vmatpush1.bf16.msra.mxu0 0
        %424 = vmatprep.subr.bf16.mxu0 0
        %425 = vmatpush1.bf16.msra.mxu0 0
        %426 = vmatprep.subr.bf16.mxu0 0
        %427 = vmatpush1.bf16.msra.mxu0 0
        %428 = vmatprep.subr.bf16.mxu0 0
        %429 = vmatpush1.bf16.msra.mxu0 0
        %430 = vmatprep.subr.bf16.mxu0 0
        %431 = vmatpush1.bf16.msra.mxu0 0
        %432 = vmatprep.subr.bf16.mxu0 0
        %433 = vmatpush1.bf16.msra.mxu0 0
        %434 = vmatprep.subr.bf16.mxu0 0
        %435 = vmatpush1.bf16.msra.mxu0 0
        %436 = vmatprep.subr.bf16.mxu0 0
        %437 = vmatpush1.bf16.msra.mxu0 0
        %438 = vmatprep.subr.bf16.mxu0 0
        %439 = vmatpush1.bf16.msra.mxu0 0
        %440 = vmatprep.subr.bf16.mxu0 0
        %441 = vmatpush1.bf16.msra.mxu0 0
        %442 = vmatprep.subr.bf16.mxu0 0
        %443 = vmatpush1.bf16.msra.mxu0 0
        %444 = vmatprep.subr.bf16.mxu0 0
        %445 = vmatpush1.bf16.msra.mxu0 0
        %446 = vmatprep.mubr.bf16.mxu0 0
        %447 = vmatmul.mubr.bf16.gmra.mrb[0].mxu0 %v367
        %v448 = vpop.f32.mrb[0].mxu0
        %v449 = vadd.f32 0.0, %v448
        %v450 = vpop.f32.mrb[0].mxu0
        %v451 = vpop.f32.mrb[0].mxu0
        %v452 = vadd.f32 0.0, %v451
        %v453 = vpop.f32.mrb[0].mxu0
        %454 = vmatprep.mubr.bf16.mxu0 0
        %455 = vmatmul.mubr.bf16.gmra.mrb[0].mxu0 %v370
        %v456 = vpop.f32.mrb[0].mxu0
        %v457 = vadd.f32 0.0, %v456
        %v458 = vpop.f32.mrb[0].mxu0
        %v459 = vpop.f32.mrb[0].mxu0
        %v460 = vadd.f32 0.0, %v459
        %v461 = vpop.f32.mrb[0].mxu0
        %462 = vmatprep.mubr.bf16.mxu0 0
        %463 = vmatmul.mubr.bf16.gmra.mrb[0].mxu0 %v373
        %v464 = vpop.f32.mrb[0].mxu0
        %v465 = vadd.f32 0.0, %v464
        %v466 = vpop.f32.mrb[0].mxu0
        %v467 = vpop.f32.mrb[0].mxu0
        %v468 = vadd.f32 0.0, %v467
        %v469 = vpop.f32.mrb[0].mxu0
        %470 = vmatprep.mubr.bf16.mxu0 0
        %471 = vmatmul.mubr.bf16.gmra.mrb[0].mxu0 %v376
        %v472 = vpop.f32.mrb[0].mxu0
        %v473 = vadd.f32 0.0, %v472
        %v474 = vpop.f32.mrb[0].mxu0
        %v475 = vpop.f32.mrb[0].mxu0
        %v476 = vadd.f32 0.0, %v475
        %v477 = vpop.f32.mrb[0].mxu0
        %478 = vmatprep.mubr.bf16.mxu0 0
        %479 = vmatmul.mubr.bf16.gmra.mrb[0].mxu0 %v379
        %v480 = vpop.f32.mrb[0].mxu0
        %v481 = vadd.f32 0.0, %v480
        %v482 = vpop.f32.mrb[0].mxu0
        %v483 = vpop.f32.mrb[0].mxu0
        %v484 = vadd.f32 0.0, %v483
        %v485 = vpop.f32.mrb[0].mxu0
        %486 = vmatprep.mubr.bf16.mxu0 0
        %487 = vmatmul.mubr.bf16.gmra.mrb[0].mxu0 %v382
        %v488 = vpop.f32.mrb[0].mxu0
        %v489 = vadd.f32 0.0, %v488
        %v490 = vpop.f32.mrb[0].mxu0
        %v491 = vpop.f32.mrb[0].mxu0
        %v492 = vadd.f32 0.0, %v491
        %v493 = vpop.f32.mrb[0].mxu0
        %494 = vmatprep.mubr.bf16.mxu0 0
        %495 = vmatmul.mubr.bf16.gmra.mrb[0].mxu0 %v385
        %v496 = vpop.f32.mrb[0].mxu0
        %v497 = vadd.f32 0.0, %v496
        %v498 = vpop.f32.mrb[0].mxu0
        %v499 = vpop.f32.mrb[0].mxu0
        %v500 = vadd.f32 0.0, %v499
        %v501 = vpop.f32.mrb[0].mxu0
        %502 = vmatprep.mubr.bf16.mxu0 0
        %503 = vmatmul.mubr.bf16.gmra.mrb[0].mxu0 %v388
        %v504 = vpop.f32.mrb[0].mxu0
        %v505 = vadd.f32 0.0, %v504
        %v506 = vpop.f32.mrb[0].mxu0
        %v507 = vpop.f32.mrb[0].mxu0
        %v508 = vadd.f32 0.0, %v507
        %v509 = vpop.f32.mrb[0].mxu0
        %510 = vmatprep.mubr.bf16.mxu0 0
        %511 = vmatmul.mubr.bf16.gmra.mrb[0].mxu0 %v391
        %v512 = vpop.f32.mrb[0].mxu0
        %v513 = vadd.f32 0.0, %v512
        %v514 = vpop.f32.mrb[0].mxu0
        %v515 = vpop.f32.mrb[0].mxu0
        %v516 = vadd.f32 0.0, %v515
        %v517 = vpop.f32.mrb[0].mxu0
        %518 = vmatprep.mubr.bf16.mxu0 0
        %519 = vmatmul.mubr.bf16.gmra.mrb[0].mxu0 %v394
        %v520 = vpop.f32.mrb[0].mxu0
        %v521 = vadd.f32 0.0, %v520
        %v522 = vpop.f32.mrb[0].mxu0
        %v523 = vpop.f32.mrb[0].mxu0
        %v524 = vadd.f32 0.0, %v523
        %v525 = vpop.f32.mrb[0].mxu0
        %526 = vmatprep.mubr.bf16.mxu0 0
        %527 = vmatmul.mubr.bf16.gmra.mrb[0].mxu0 %v397
        %v528 = vpop.f32.mrb[0].mxu0
        %v529 = vadd.f32 0.0, %v528
        %v530 = vpop.f32.mrb[0].mxu0
        %v531 = vpop.f32.mrb[0].mxu0
        %v532 = vadd.f32 0.0, %v531
        %v533 = vpop.f32.mrb[0].mxu0
        %534 = vmatprep.mubr.bf16.mxu0 0
        %535 = vmatmul.mubr.bf16.gmra.mrb[0].mxu0 %v400
        %v536 = vpop.f32.mrb[0].mxu0
        %v537 = vadd.f32 0.0, %v536
        %v538 = vpop.f32.mrb[0].mxu0
        %v539 = vpop.f32.mrb[0].mxu0
        %v540 = vadd.f32 0.0, %v539
        %v541 = vpop.f32.mrb[0].mxu0
        %542 = vmatprep.mubr.bf16.mxu0 0
        %543 = vmatmul.mubr.bf16.gmra.mrb[0].mxu0 %v403
        %v544 = vpop.f32.mrb[0].mxu0
        %v545 = vadd.f32 0.0, %v544
        %v546 = vpop.f32.mrb[0].mxu0
        %v547 = vpop.f32.mrb[0].mxu0
        %v548 = vadd.f32 0.0, %v547
        %v549 = vpop.f32.mrb[0].mxu0
        %550 = vmatprep.mubr.bf16.mxu0 0
        %551 = vmatmul.mubr.bf16.gmra.mrb[0].mxu0 %v406
        %v552 = vpop.f32.mrb[0].mxu0
        %v553 = vadd.f32 0.0, %v552
        %v554 = vpop.f32.mrb[0].mxu0
        %v555 = vpop.f32.mrb[0].mxu0
        %v556 = vadd.f32 0.0, %v555
        %v557 = vpop.f32.mrb[0].mxu0
        %558 = vmatprep.mubr.bf16.mxu0 0
        %559 = vmatmul.mubr.bf16.gmra.mrb[0].mxu0 %v409
        %v560 = vpop.f32.mrb[0].mxu0
        %v561 = vadd.f32 0.0, %v560
        %v562 = vpop.f32.mrb[0].mxu0
        %v563 = vpop.f32.mrb[0].mxu0
        %v564 = vadd.f32 0.0, %v563
        %v565 = vpop.f32.mrb[0].mxu0
        %566 = vmatprep.mubr.bf16.mxu0 0
        %567 = vmatmul.mubr.bf16.gmra.mrb[0].mxu0 %v412
        %v568 = vpop.f32.mrb[0].mxu0
        %v569 = vadd.f32 0.0, %v568
        %v570 = vpop.f32.mrb[0].mxu0
        %v571 = vpop.f32.mrb[0].mxu0
        %v572 = vadd.f32 0.0, %v571
        %v573 = vpop.f32.mrb[0].mxu0
        %574 = vdwg.mxu0
        %576 = vset.pattern.permute.xlu0 0
        %577 = vperm.xlu0 %576, %v308
        %v578 = vpop.permute.xlu0 %577
        %581 = vset.pattern.permute.xlu0 0
        %582 = vperm.xlu0 %581, %v309
        %v583 = vpop.permute.xlu0 %582
        %586 = vset.pattern.permute.xlu0 0
        %587 = vperm.xlu0 %586, %v310
        %v588 = vpop.permute.xlu0 %587
        %591 = vset.pattern.permute.xlu0 0
        %592 = vperm.xlu0 %591, %v311
        %v593 = vpop.permute.xlu0 %592
        %596 = vset.pattern.permute.xlu0 0
        %597 = vperm.xlu0 %596, %v312
        %v598 = vpop.permute.xlu0 %597
        %601 = vset.pattern.permute.xlu0 0
        %602 = vperm.xlu0 %601, %v313
        %v603 = vpop.permute.xlu0 %602
        %606 = vset.pattern.permute.xlu0 0
        %607 = vperm.xlu0 %606, %v314
        %v608 = vpop.permute.xlu0 %607
        %611 = vset.pattern.permute.xlu0 0
        %612 = vperm.xlu0 %611, %v315
        %v613 = vpop.permute.xlu0 %612
        %616 = vset.pattern.permute.xlu0 0
        %617 = vperm.xlu0 %616, %v316
        %v618 = vpop.permute.xlu0 %617
        %621 = vset.pattern.permute.xlu0 0
        %622 = vperm.xlu0 %621, %v317
        %v623 = vpop.permute.xlu0 %622
        %626 = vset.pattern.permute.xlu0 0
        %627 = vperm.xlu0 %626, %v318
        %v628 = vpop.permute.xlu0 %627
        %631 = vset.pattern.permute.xlu0 0
        %632 = vperm.xlu0 %631, %v319
        %v633 = vpop.permute.xlu0 %632
        %636 = vset.pattern.permute.xlu0 0
        %637 = vperm.xlu0 %636, %v320
        %v638 = vpop.permute.xlu0 %637
        %641 = vset.pattern.permute.xlu0 0
        %642 = vperm.xlu0 %641, %v321
        %v643 = vpop.permute.xlu0 %642
        %646 = vset.pattern.permute.xlu0 0
        %647 = vperm.xlu0 %646, %v322
        %v648 = vpop.permute.xlu0 %647
        %651 = vset.pattern.permute.xlu0 0
        %652 = vperm.xlu0 %651, %v323
        %v653 = vpop.permute.xlu0 %652
        %656 = vset.pattern.permute.xlu0 0
        %657 = vperm.xlu0 %656, %v324
        %v658 = vpop.permute.xlu0 %657
        %661 = vset.pattern.permute.xlu0 0
        %662 = vperm.xlu0 %661, %v325
        %v663 = vpop.permute.xlu0 %662
        %666 = vset.pattern.permute.xlu0 0
        %667 = vperm.xlu0 %666, %v326
        %v668 = vpop.permute.xlu0 %667
        %671 = vset.pattern.permute.xlu0 0
        %672 = vperm.xlu0 %671, %v327
        %v673 = vpop.permute.xlu0 %672
        %676 = vset.pattern.permute.xlu0 0
        %677 = vperm.xlu0 %676, %v328
        %v678 = vpop.permute.xlu0 %677
        %681 = vset.pattern.permute.xlu0 0
        %682 = vperm.xlu0 %681, %v329
        %v683 = vpop.permute.xlu0 %682
        %686 = vset.pattern.permute.xlu0 0
        %687 = vperm.xlu0 %686, %v330
        %v688 = vpop.permute.xlu0 %687
        %691 = vset.pattern.permute.xlu0 0
        %692 = vperm.xlu0 %691, %v331
        %v693 = vpop.permute.xlu0 %692
        %696 = vset.pattern.permute.xlu0 0
        %697 = vperm.xlu0 %696, %v332
        %v698 = vpop.permute.xlu0 %697
        %701 = vset.pattern.permute.xlu0 0
        %702 = vperm.xlu0 %701, %v333
        %v703 = vpop.permute.xlu0 %702
        %706 = vset.pattern.permute.xlu0 0
        %707 = vperm.xlu0 %706, %v334
        %v708 = vpop.permute.xlu0 %707
        %711 = vset.pattern.permute.xlu0 0
        %712 = vperm.xlu0 %711, %v335
        %v713 = vpop.permute.xlu0 %712
        %716 = vset.pattern.permute.xlu0 0
        %717 = vperm.xlu0 %716, %v336
        %v718 = vpop.permute.xlu0 %717
        %721 = vset.pattern.permute.xlu0 0
        %722 = vperm.xlu0 %721, %v337
        %v723 = vpop.permute.xlu0 %722
        %726 = vset.pattern.permute.xlu0 0
        %727 = vperm.xlu0 %726, %v338
        %v728 = vpop.permute.xlu0 %727
        %731 = vset.pattern.permute.xlu0 0
        %732 = vperm.xlu0 %731, %v339
        %v733 = vpop.permute.xlu0 %732
        %v735 = vlaneseq
        %v736 = vshrl.u32 %v735, 7
        %v737 = vsub.s32 0, %v736
        %v738 = vrot.slane %v449, %v737
        %v739 = vlaneseq
        %v740 = vshrl.u32 %v739, 7
        %v741 = vsub.s32 0, %v740
        %v742 = vrot.slane %v452, %v741
        %v743 = vlaneseq
        %v744 = vshrl.u32 %v743, 7
        %v745 = vsub.s32 0, %v744
        %v746 = vrot.slane %v457, %v745
        %v747 = vlaneseq
        %v748 = vshrl.u32 %v747, 7
        %v749 = vsub.s32 0, %v748
        %v750 = vrot.slane %v460, %v749
        %v751 = vlaneseq
        %v752 = vshrl.u32 %v751, 7
        %v753 = vsub.s32 0, %v752
        %v754 = vrot.slane %v465, %v753
        %v755 = vlaneseq
        %v756 = vshrl.u32 %v755, 7
        %v757 = vsub.s32 0, %v756
        %v758 = vrot.slane %v468, %v757
        %v759 = vlaneseq
        %v760 = vshrl.u32 %v759, 7
        %v761 = vsub.s32 0, %v760
        %v762 = vrot.slane %v473, %v761
        %v763 = vlaneseq
        %v764 = vshrl.u32 %v763, 7
        %v765 = vsub.s32 0, %v764
        %v766 = vrot.slane %v476, %v765
        %v767 = vlaneseq
        %v768 = vshrl.u32 %v767, 7
        %v769 = vsub.s32 0, %v768
        %v770 = vrot.slane %v481, %v769
        %v771 = vlaneseq
        %v772 = vshrl.u32 %v771, 7
        %v773 = vsub.s32 0, %v772
        %v774 = vrot.slane %v484, %v773
        %v775 = vlaneseq
        %v776 = vshrl.u32 %v775, 7
        %v777 = vsub.s32 0, %v776
        %v778 = vrot.slane %v489, %v777
        %v779 = vlaneseq
        %v780 = vshrl.u32 %v779, 7
        %v781 = vsub.s32 0, %v780
        %v782 = vrot.slane %v492, %v781
        %v783 = vlaneseq
        %v784 = vshrl.u32 %v783, 7
        %v785 = vsub.s32 0, %v784
        %v786 = vrot.slane %v497, %v785
        %v787 = vlaneseq
        %v788 = vshrl.u32 %v787, 7
        %v789 = vsub.s32 0, %v788
        %v790 = vrot.slane %v500, %v789
        %v791 = vlaneseq
        %v792 = vshrl.u32 %v791, 7
        %v793 = vsub.s32 0, %v792
        %v794 = vrot.slane %v505, %v793
        %v795 = vlaneseq
        %v796 = vshrl.u32 %v795, 7
        %v797 = vsub.s32 0, %v796
        %v798 = vrot.slane %v508, %v797
        %v799 = vlaneseq
        %v800 = vshrl.u32 %v799, 7
        %v801 = vsub.s32 0, %v800
        %v802 = vrot.slane %v513, %v801
        %v803 = vlaneseq
        %v804 = vshrl.u32 %v803, 7
        %v805 = vsub.s32 0, %v804
        %v806 = vrot.slane %v516, %v805
        %v807 = vlaneseq
        %v808 = vshrl.u32 %v807, 7
        %v809 = vsub.s32 0, %v808
        %v810 = vrot.slane %v521, %v809
        %v811 = vlaneseq
        %v812 = vshrl.u32 %v811, 7
        %v813 = vsub.s32 0, %v812
        %v814 = vrot.slane %v524, %v813
        %v815 = vlaneseq
        %v816 = vshrl.u32 %v815, 7
        %v817 = vsub.s32 0, %v816
        %v818 = vrot.slane %v529, %v817
        %v819 = vlaneseq
        %v820 = vshrl.u32 %v819, 7
        %v821 = vsub.s32 0, %v820
        %v822 = vrot.slane %v532, %v821
        %v823 = vlaneseq
        %v824 = vshrl.u32 %v823, 7
        %v825 = vsub.s32 0, %v824
        %v826 = vrot.slane %v537, %v825
        %v827 = vlaneseq
        %v828 = vshrl.u32 %v827, 7
        %v829 = vsub.s32 0, %v828
        %v830 = vrot.slane %v540, %v829
        %v831 = vlaneseq
        %v832 = vshrl.u32 %v831, 7
        %v833 = vsub.s32 0, %v832
        %v834 = vrot.slane %v545, %v833
        %v835 = vlaneseq
        %v836 = vshrl.u32 %v835, 7
        %v837 = vsub.s32 0, %v836
        %v838 = vrot.slane %v548, %v837
        %v839 = vlaneseq
        %v840 = vshrl.u32 %v839, 7
        %v841 = vsub.s32 0, %v840
        %v842 = vrot.slane %v553, %v841
        %v843 = vlaneseq
        %v844 = vshrl.u32 %v843, 7
        %v845 = vsub.s32 0, %v844
        %v846 = vrot.slane %v556, %v845
        %v847 = vlaneseq
        %v848 = vshrl.u32 %v847, 7
        %v849 = vsub.s32 0, %v848
        %v850 = vrot.slane %v561, %v849
        %v851 = vlaneseq
        %v852 = vshrl.u32 %v851, 7
        %v853 = vsub.s32 0, %v852
        %v854 = vrot.slane %v564, %v853
        %v855 = vlaneseq
        %v856 = vshrl.u32 %v855, 7
        %v857 = vsub.s32 0, %v856
        %v858 = vrot.slane %v569, %v857
        %v859 = vlaneseq
        %v860 = vshrl.u32 %v859, 7
        %v861 = vsub.s32 0, %v860
        %v862 = vrot.slane %v572, %v861
        %v863 = vmul.f32 %v578, %v738
        %v864 = vmul.f32 %v583, %v742
        %v865 = vmul.f32 %v588, %v746
        %v866 = vmul.f32 %v593, %v750
        %v867 = vmul.f32 %v598, %v754
        %v868 = vmul.f32 %v603, %v758
        %v869 = vmul.f32 %v608, %v762
        %v870 = vmul.f32 %v613, %v766
        %v871 = vmul.f32 %v618, %v770
        %v872 = vmul.f32 %v623, %v774
        %v873 = vmul.f32 %v628, %v778
        %v874 = vmul.f32 %v633, %v782
        %v875 = vmul.f32 %v638, %v786
        %v876 = vmul.f32 %v643, %v790
        %v877 = vmul.f32 %v648, %v794
        %v878 = vmul.f32 %v653, %v798
        %v879 = vmul.f32 %v658, %v802
        %v880 = vmul.f32 %v663, %v806
        %v881 = vmul.f32 %v668, %v810
        %v882 = vmul.f32 %v673, %v814
        %v883 = vmul.f32 %v678, %v818
        %v884 = vmul.f32 %v683, %v822
        %v885 = vmul.f32 %v688, %v826
        %v886 = vmul.f32 %v693, %v830
        %v887 = vmul.f32 %v698, %v834
        %v888 = vmul.f32 %v703, %v838
        %v889 = vmul.f32 %v708, %v842
        %v890 = vmul.f32 %v713, %v846
        %v891 = vmul.f32 %v718, %v850
        %v892 = vmul.f32 %v723, %v854
        %v893 = vmul.f32 %v728, %v858
        %v894 = vmul.f32 %v733, %v862
        %895 = vset.pattern.permute.xlu0 1
        %896 = vperm.xlu0 %895, %v308
        %v897 = vpop.permute.xlu0 %896
        %899 = vset.pattern.permute.xlu0 1
        %900 = vperm.xlu0 %899, %v309
        %v901 = vpop.permute.xlu0 %900
        %903 = vset.pattern.permute.xlu0 1
        %904 = vperm.xlu0 %903, %v310
        %v905 = vpop.permute.xlu0 %904
        %907 = vset.pattern.permute.xlu0 1
        %908 = vperm.xlu0 %907, %v311
        %v909 = vpop.permute.xlu0 %908
        %911 = vset.pattern.permute.xlu0 1
        %912 = vperm.xlu0 %911, %v312
        %v913 = vpop.permute.xlu0 %912
        %915 = vset.pattern.permute.xlu0 1
        %916 = vperm.xlu0 %915, %v313
        %v917 = vpop.permute.xlu0 %916
        %919 = vset.pattern.permute.xlu0 1
        %920 = vperm.xlu0 %919, %v314
        %v921 = vpop.permute.xlu0 %920
        %923 = vset.pattern.permute.xlu0 1
        %924 = vperm.xlu0 %923, %v315
        %v925 = vpop.permute.xlu0 %924
        %927 = vset.pattern.permute.xlu0 1
        %928 = vperm.xlu0 %927, %v316
        %v929 = vpop.permute.xlu0 %928
        %931 = vset.pattern.permute.xlu0 1
        %932 = vperm.xlu0 %931, %v317
        %v933 = vpop.permute.xlu0 %932
        %935 = vset.pattern.permute.xlu0 1
        %936 = vperm.xlu0 %935, %v318
        %v937 = vpop.permute.xlu0 %936
        %939 = vset.pattern.permute.xlu0 1
        %940 = vperm.xlu0 %939, %v319
        %v941 = vpop.permute.xlu0 %940
        %943 = vset.pattern.permute.xlu0 1
        %944 = vperm.xlu0 %943, %v320
        %v945 = vpop.permute.xlu0 %944
        %947 = vset.pattern.permute.xlu0 1
        %948 = vperm.xlu0 %947, %v321
        %v949 = vpop.permute.xlu0 %948
        %951 = vset.pattern.permute.xlu0 1
        %952 = vperm.xlu0 %951, %v322
        %v953 = vpop.permute.xlu0 %952
        %955 = vset.pattern.permute.xlu0 1
        %956 = vperm.xlu0 %955, %v323
        %v957 = vpop.permute.xlu0 %956
        %959 = vset.pattern.permute.xlu0 1
        %960 = vperm.xlu0 %959, %v324
        %v961 = vpop.permute.xlu0 %960
        %963 = vset.pattern.permute.xlu0 1
        %964 = vperm.xlu0 %963, %v325
        %v965 = vpop.permute.xlu0 %964
        %967 = vset.pattern.permute.xlu0 1
        %968 = vperm.xlu0 %967, %v326
        %v969 = vpop.permute.xlu0 %968
        %971 = vset.pattern.permute.xlu0 1
        %972 = vperm.xlu0 %971, %v327
        %v973 = vpop.permute.xlu0 %972
        %975 = vset.pattern.permute.xlu0 1
        %976 = vperm.xlu0 %975, %v328
        %v977 = vpop.permute.xlu0 %976
        %979 = vset.pattern.permute.xlu0 1
        %980 = vperm.xlu0 %979, %v329
        %v981 = vpop.permute.xlu0 %980
        %983 = vset.pattern.permute.xlu0 1
        %984 = vperm.xlu0 %983, %v330
        %v985 = vpop.permute.xlu0 %984
        %987 = vset.pattern.permute.xlu0 1
        %988 = vperm.xlu0 %987, %v331
        %v989 = vpop.permute.xlu0 %988
        %991 = vset.pattern.permute.xlu0 1
        %992 = vperm.xlu0 %991, %v332
        %v993 = vpop.permute.xlu0 %992
        %995 = vset.pattern.permute.xlu0 1
        %996 = vperm.xlu0 %995, %v333
        %v997 = vpop.permute.xlu0 %996
        %999 = vset.pattern.permute.xlu0 1
        %1000 = vperm.xlu0 %999, %v334
        %v1001 = vpop.permute.xlu0 %1000
        %1003 = vset.pattern.permute.xlu0 1
        %1004 = vperm.xlu0 %1003, %v335
        %v1005 = vpop.permute.xlu0 %1004
        %1007 = vset.pattern.permute.xlu0 1
        %1008 = vperm.xlu0 %1007, %v336
        %v1009 = vpop.permute.xlu0 %1008
        %1011 = vset.pattern.permute.xlu0 1
        %1012 = vperm.xlu0 %1011, %v337
        %v1013 = vpop.permute.xlu0 %1012
        %1015 = vset.pattern.permute.xlu0 1
        %1016 = vperm.xlu0 %1015, %v338
        %v1017 = vpop.permute.xlu0 %1016
        %1019 = vset.pattern.permute.xlu0 1
        %1020 = vperm.xlu0 %1019, %v339
        %v1021 = vpop.permute.xlu0 %1020
        %v1023 = vlaneseq
        %v1024 = vshrl.u32 %v1023, 7
        %v1025 = vsub.s32 1, %v1024
        %v1026 = vrot.slane %v449, %v1025
        %v1027 = vlaneseq
        %v1028 = vshrl.u32 %v1027, 7
        %v1029 = vsub.s32 1, %v1028
        %v1030 = vrot.slane %v452, %v1029
        %v1031 = vlaneseq
        %v1032 = vshrl.u32 %v1031, 7
        %v1033 = vsub.s32 1, %v1032
        %v1034 = vrot.slane %v457, %v1033
        %v1035 = vlaneseq
        %v1036 = vshrl.u32 %v1035, 7
        %v1037 = vsub.s32 1, %v1036
        %v1038 = vrot.slane %v460, %v1037
        %v1039 = vlaneseq
        %v1040 = vshrl.u32 %v1039, 7
        %v1041 = vsub.s32 1, %v1040
        %v1042 = vrot.slane %v465, %v1041
        %v1043 = vlaneseq
        %v1044 = vshrl.u32 %v1043, 7
        %v1045 = vsub.s32 1, %v1044
        %v1046 = vrot.slane %v468, %v1045
        %v1047 = vlaneseq
        %v1048 = vshrl.u32 %v1047, 7
        %v1049 = vsub.s32 1, %v1048
        %v1050 = vrot.slane %v473, %v1049
        %v1051 = vlaneseq
        %v1052 = vshrl.u32 %v1051, 7
        %v1053 = vsub.s32 1, %v1052
        %v1054 = vrot.slane %v476, %v1053
        %v1055 = vlaneseq
        %v1056 = vshrl.u32 %v1055, 7
        %v1057 = vsub.s32 1, %v1056
        %v1058 = vrot.slane %v481, %v1057
        %v1059 = vlaneseq
        %v1060 = vshrl.u32 %v1059, 7
        %v1061 = vsub.s32 1, %v1060
        %v1062 = vrot.slane %v484, %v1061
        %v1063 = vlaneseq
        %v1064 = vshrl.u32 %v1063, 7
        %v1065 = vsub.s32 1, %v1064
        %v1066 = vrot.slane %v489, %v1065
        %v1067 = vlaneseq
        %v1068 = vshrl.u32 %v1067, 7
        %v1069 = vsub.s32 1, %v1068
        %v1070 = vrot.slane %v492, %v1069
        %v1071 = vlaneseq
        %v1072 = vshrl.u32 %v1071, 7
        %v1073 = vsub.s32 1, %v1072
        %v1074 = vrot.slane %v497, %v1073
        %v1075 = vlaneseq
        %v1076 = vshrl.u32 %v1075, 7
        %v1077 = vsub.s32 1, %v1076
        %v1078 = vrot.slane %v500, %v1077
        %v1079 = vlaneseq
        %v1080 = vshrl.u32 %v1079, 7
        %v1081 = vsub.s32 1, %v1080
        %v1082 = vrot.slane %v505, %v1081
        %v1083 = vlaneseq
        %v1084 = vshrl.u32 %v1083, 7
        %v1085 = vsub.s32 1, %v1084
        %v1086 = vrot.slane %v508, %v1085
        %v1087 = vlaneseq
        %v1088 = vshrl.u32 %v1087, 7
        %v1089 = vsub.s32 1, %v1088
        %v1090 = vrot.slane %v513, %v1089
        %v1091 = vlaneseq
        %v1092 = vshrl.u32 %v1091, 7
        %v1093 = vsub.s32 1, %v1092
        %v1094 = vrot.slane %v516, %v1093
        %v1095 = vlaneseq
        %v1096 = vshrl.u32 %v1095, 7
        %v1097 = vsub.s32 1, %v1096
        %v1098 = vrot.slane %v521, %v1097
        %v1099 = vlaneseq
        %v1100 = vshrl.u32 %v1099, 7
        %v1101 = vsub.s32 1, %v1100
        %v1102 = vrot.slane %v524, %v1101
        %v1103 = vlaneseq
        %v1104 = vshrl.u32 %v1103, 7
        %v1105 = vsub.s32 1, %v1104
        %v1106 = vrot.slane %v529, %v1105
        %v1107 = vlaneseq
        %v1108 = vshrl.u32 %v1107, 7
        %v1109 = vsub.s32 1, %v1108
        %v1110 = vrot.slane %v532, %v1109
        %v1111 = vlaneseq
        %v1112 = vshrl.u32 %v1111, 7
        %v1113 = vsub.s32 1, %v1112
        %v1114 = vrot.slane %v537, %v1113
        %v1115 = vlaneseq
        %v1116 = vshrl.u32 %v1115, 7
        %v1117 = vsub.s32 1, %v1116
        %v1118 = vrot.slane %v540, %v1117
        %v1119 = vlaneseq
        %v1120 = vshrl.u32 %v1119, 7
        %v1121 = vsub.s32 1, %v1120
        %v1122 = vrot.slane %v545, %v1121
        %v1123 = vlaneseq
        %v1124 = vshrl.u32 %v1123, 7
        %v1125 = vsub.s32 1, %v1124
        %v1126 = vrot.slane %v548, %v1125
        %v1127 = vlaneseq
        %v1128 = vshrl.u32 %v1127, 7
        %v1129 = vsub.s32 1, %v1128
        %v1130 = vrot.slane %v553, %v1129
        %v1131 = vlaneseq
        %v1132 = vshrl.u32 %v1131, 7
        %v1133 = vsub.s32 1, %v1132
        %v1134 = vrot.slane %v556, %v1133
        %v1135 = vlaneseq
        %v1136 = vshrl.u32 %v1135, 7
        %v1137 = vsub.s32 1, %v1136
        %v1138 = vrot.slane %v561, %v1137
        %v1139 = vlaneseq
        %v1140 = vshrl.u32 %v1139, 7
        %v1141 = vsub.s32 1, %v1140
        %v1142 = vrot.slane %v564, %v1141
        %v1143 = vlaneseq
        %v1144 = vshrl.u32 %v1143, 7
        %v1145 = vsub.s32 1, %v1144
        %v1146 = vrot.slane %v569, %v1145
        %v1147 = vlaneseq
        %v1148 = vshrl.u32 %v1147, 7
        %v1149 = vsub.s32 1, %v1148
        %v1150 = vrot.slane %v572, %v1149
        %v1151 = vmul.f32 %v897, %v1026
        %v1152 = vmul.f32 %v901, %v1030
        %v1153 = vmul.f32 %v905, %v1034
        %v1154 = vmul.f32 %v909, %v1038
        %v1155 = vmul.f32 %v913, %v1042
        %v1156 = vmul.f32 %v917, %v1046
        %v1157 = vmul.f32 %v921, %v1050
        %v1158 = vmul.f32 %v925, %v1054
        %v1159 = vmul.f32 %v929, %v1058
        %v1160 = vmul.f32 %v933, %v1062
        %v1161 = vmul.f32 %v937, %v1066
        %v1162 = vmul.f32 %v941, %v1070
        %v1163 = vmul.f32 %v945, %v1074
        %v1164 = vmul.f32 %v949, %v1078
        %v1165 = vmul.f32 %v953, %v1082
        %v1166 = vmul.f32 %v957, %v1086
        %v1167 = vmul.f32 %v961, %v1090
        %v1168 = vmul.f32 %v965, %v1094
        %v1169 = vmul.f32 %v969, %v1098
        %v1170 = vmul.f32 %v973, %v1102
        %v1171 = vmul.f32 %v977, %v1106
        %v1172 = vmul.f32 %v981, %v1110
        %v1173 = vmul.f32 %v985, %v1114
        %v1174 = vmul.f32 %v989, %v1118
        %v1175 = vmul.f32 %v993, %v1122
        %v1176 = vmul.f32 %v997, %v1126
        %v1177 = vmul.f32 %v1001, %v1130
        %v1178 = vmul.f32 %v1005, %v1134
        %v1179 = vmul.f32 %v1009, %v1138
        %v1180 = vmul.f32 %v1013, %v1142
        %v1181 = vmul.f32 %v1017, %v1146
        %v1182 = vmul.f32 %v1021, %v1150
        %v1183 = vadd.f32 %v863, %v1151
        %v1184 = vadd.f32 %v864, %v1152
        %v1185 = vadd.f32 %v865, %v1153
        %v1186 = vadd.f32 %v866, %v1154
        %v1187 = vadd.f32 %v867, %v1155
        %v1188 = vadd.f32 %v868, %v1156
        %v1189 = vadd.f32 %v869, %v1157
        %v1190 = vadd.f32 %v870, %v1158
        %v1191 = vadd.f32 %v871, %v1159
        %v1192 = vadd.f32 %v872, %v1160
        %v1193 = vadd.f32 %v873, %v1161
        %v1194 = vadd.f32 %v874, %v1162
        %v1195 = vadd.f32 %v875, %v1163
        %v1196 = vadd.f32 %v876, %v1164
        %v1197 = vadd.f32 %v877, %v1165
        %v1198 = vadd.f32 %v878, %v1166
        %v1199 = vadd.f32 %v879, %v1167
        %v1200 = vadd.f32 %v880, %v1168
        %v1201 = vadd.f32 %v881, %v1169
        %v1202 = vadd.f32 %v882, %v1170
        %v1203 = vadd.f32 %v883, %v1171
        %v1204 = vadd.f32 %v884, %v1172
        %v1205 = vadd.f32 %v885, %v1173
        %v1206 = vadd.f32 %v886, %v1174
        %v1207 = vadd.f32 %v887, %v1175
        %v1208 = vadd.f32 %v888, %v1176
        %v1209 = vadd.f32 %v889, %v1177
        %v1210 = vadd.f32 %v890, %v1178
        %v1211 = vadd.f32 %v891, %v1179
        %v1212 = vadd.f32 %v892, %v1180
        %v1213 = vadd.f32 %v893, %v1181
        %v1214 = vadd.f32 %v894, %v1182
        %1215 = vset.pattern.permute.xlu0 2
        %1216 = vperm.xlu0 %1215, %v308
        %v1217 = vpop.permute.xlu0 %1216
        %1219 = vset.pattern.permute.xlu0 2
        %1220 = vperm.xlu0 %1219, %v309
        %v1221 = vpop.permute.xlu0 %1220
        %1223 = vset.pattern.permute.xlu0 2
        %1224 = vperm.xlu0 %1223, %v310
        %v1225 = vpop.permute.xlu0 %1224
        %1227 = vset.pattern.permute.xlu0 2
        %1228 = vperm.xlu0 %1227, %v311
        %v1229 = vpop.permute.xlu0 %1228
        %1231 = vset.pattern.permute.xlu0 2
        %1232 = vperm.xlu0 %1231, %v312
        %v1233 = vpop.permute.xlu0 %1232
        %1235 = vset.pattern.permute.xlu0 2
        %1236 = vperm.xlu0 %1235, %v313
        %v1237 = vpop.permute.xlu0 %1236
        %1239 = vset.pattern.permute.xlu0 2
        %1240 = vperm.xlu0 %1239, %v314
        %v1241 = vpop.permute.xlu0 %1240
        %1243 = vset.pattern.permute.xlu0 2
        %1244 = vperm.xlu0 %1243, %v315
        %v1245 = vpop.permute.xlu0 %1244
        %1247 = vset.pattern.permute.xlu0 2
        %1248 = vperm.xlu0 %1247, %v316
        %v1249 = vpop.permute.xlu0 %1248
        %1251 = vset.pattern.permute.xlu0 2
        %1252 = vperm.xlu0 %1251, %v317
        %v1253 = vpop.permute.xlu0 %1252
        %1255 = vset.pattern.permute.xlu0 2
        %1256 = vperm.xlu0 %1255, %v318
        %v1257 = vpop.permute.xlu0 %1256
        %1259 = vset.pattern.permute.xlu0 2
        %1260 = vperm.xlu0 %1259, %v319
        %v1261 = vpop.permute.xlu0 %1260
        %1263 = vset.pattern.permute.xlu0 2
        %1264 = vperm.xlu0 %1263, %v320
        %v1265 = vpop.permute.xlu0 %1264
        %1267 = vset.pattern.permute.xlu0 2
        %1268 = vperm.xlu0 %1267, %v321
        %v1269 = vpop.permute.xlu0 %1268
        %1271 = vset.pattern.permute.xlu0 2
        %1272 = vperm.xlu0 %1271, %v322
        %v1273 = vpop.permute.xlu0 %1272
        %1275 = vset.pattern.permute.xlu0 2
        %1276 = vperm.xlu0 %1275, %v323
        %v1277 = vpop.permute.xlu0 %1276
        %1279 = vset.pattern.permute.xlu0 2
        %1280 = vperm.xlu0 %1279, %v324
        %v1281 = vpop.permute.xlu0 %1280
        %1283 = vset.pattern.permute.xlu0 2
        %1284 = vperm.xlu0 %1283, %v325
        %v1285 = vpop.permute.xlu0 %1284
        %1287 = vset.pattern.permute.xlu0 2
        %1288 = vperm.xlu0 %1287, %v326
        %v1289 = vpop.permute.xlu0 %1288
        %1291 = vset.pattern.permute.xlu0 2
        %1292 = vperm.xlu0 %1291, %v327
        %v1293 = vpop.permute.xlu0 %1292
        %1295 = vset.pattern.permute.xlu0 2
        %1296 = vperm.xlu0 %1295, %v328
        %v1297 = vpop.permute.xlu0 %1296
        %1299 = vset.pattern.permute.xlu0 2
        %1300 = vperm.xlu0 %1299, %v329
        %v1301 = vpop.permute.xlu0 %1300
        %1303 = vset.pattern.permute.xlu0 2
        %1304 = vperm.xlu0 %1303, %v330
        %v1305 = vpop.permute.xlu0 %1304
        %1307 = vset.pattern.permute.xlu0 2
        %1308 = vperm.xlu0 %1307, %v331
        %v1309 = vpop.permute.xlu0 %1308
        %1311 = vset.pattern.permute.xlu0 2
        %1312 = vperm.xlu0 %1311, %v332
        %v1313 = vpop.permute.xlu0 %1312
        %1315 = vset.pattern.permute.xlu0 2
        %1316 = vperm.xlu0 %1315, %v333
        %v1317 = vpop.permute.xlu0 %1316
        %1319 = vset.pattern.permute.xlu0 2
        %1320 = vperm.xlu0 %1319, %v334
        %v1321 = vpop.permute.xlu0 %1320
        %1323 = vset.pattern.permute.xlu0 2
        %1324 = vperm.xlu0 %1323, %v335
        %v1325 = vpop.permute.xlu0 %1324
        %1327 = vset.pattern.permute.xlu0 2
        %1328 = vperm.xlu0 %1327, %v336
        %v1329 = vpop.permute.xlu0 %1328
        %1331 = vset.pattern.permute.xlu0 2
        %1332 = vperm.xlu0 %1331, %v337
        %v1333 = vpop.permute.xlu0 %1332
        %1335 = vset.pattern.permute.xlu0 2
        %1336 = vperm.xlu0 %1335, %v338
        %v1337 = vpop.permute.xlu0 %1336
        %1339 = vset.pattern.permute.xlu0 2
        %1340 = vperm.xlu0 %1339, %v339
        %v1341 = vpop.permute.xlu0 %1340
        %v1343 = vlaneseq
        %v1344 = vshrl.u32 %v1343, 7
        %v1345 = vsub.s32 2, %v1344
        %v1346 = vrot.slane %v449, %v1345
        %v1347 = vlaneseq
        %v1348 = vshrl.u32 %v1347, 7
        %v1349 = vsub.s32 2, %v1348
        %v1350 = vrot.slane %v452, %v1349
        %v1351 = vlaneseq
        %v1352 = vshrl.u32 %v1351, 7
        %v1353 = vsub.s32 2, %v1352
        %v1354 = vrot.slane %v457, %v1353
        %v1355 = vlaneseq
        %v1356 = vshrl.u32 %v1355, 7
        %v1357 = vsub.s32 2, %v1356
        %v1358 = vrot.slane %v460, %v1357
        %v1359 = vlaneseq
        %v1360 = vshrl.u32 %v1359, 7
        %v1361 = vsub.s32 2, %v1360
        %v1362 = vrot.slane %v465, %v1361
        %v1363 = vlaneseq
        %v1364 = vshrl.u32 %v1363, 7
        %v1365 = vsub.s32 2, %v1364
        %v1366 = vrot.slane %v468, %v1365
        %v1367 = vlaneseq
        %v1368 = vshrl.u32 %v1367, 7
        %v1369 = vsub.s32 2, %v1368
        %v1370 = vrot.slane %v473, %v1369
        %v1371 = vlaneseq
        %v1372 = vshrl.u32 %v1371, 7
        %v1373 = vsub.s32 2, %v1372
        %v1374 = vrot.slane %v476, %v1373
        %v1375 = vlaneseq
        %v1376 = vshrl.u32 %v1375, 7
        %v1377 = vsub.s32 2, %v1376
        %v1378 = vrot.slane %v481, %v1377
        %v1379 = vlaneseq
        %v1380 = vshrl.u32 %v1379, 7
        %v1381 = vsub.s32 2, %v1380
        %v1382 = vrot.slane %v484, %v1381
        %v1383 = vlaneseq
        %v1384 = vshrl.u32 %v1383, 7
        %v1385 = vsub.s32 2, %v1384
        %v1386 = vrot.slane %v489, %v1385
        %v1387 = vlaneseq
        %v1388 = vshrl.u32 %v1387, 7
        %v1389 = vsub.s32 2, %v1388
        %v1390 = vrot.slane %v492, %v1389
        %v1391 = vlaneseq
        %v1392 = vshrl.u32 %v1391, 7
        %v1393 = vsub.s32 2, %v1392
        %v1394 = vrot.slane %v497, %v1393
        %v1395 = vlaneseq
        %v1396 = vshrl.u32 %v1395, 7
        %v1397 = vsub.s32 2, %v1396
        %v1398 = vrot.slane %v500, %v1397
        %v1399 = vlaneseq
        %v1400 = vshrl.u32 %v1399, 7
        %v1401 = vsub.s32 2, %v1400
        %v1402 = vrot.slane %v505, %v1401
        %v1403 = vlaneseq
        %v1404 = vshrl.u32 %v1403, 7
        %v1405 = vsub.s32 2, %v1404
        %v1406 = vrot.slane %v508, %v1405
        %v1407 = vlaneseq
        %v1408 = vshrl.u32 %v1407, 7
        %v1409 = vsub.s32 2, %v1408
        %v1410 = vrot.slane %v513, %v1409
        %v1411 = vlaneseq
        %v1412 = vshrl.u32 %v1411, 7
        %v1413 = vsub.s32 2, %v1412
        %v1414 = vrot.slane %v516, %v1413
        %v1415 = vlaneseq
        %v1416 = vshrl.u32 %v1415, 7
        %v1417 = vsub.s32 2, %v1416
        %v1418 = vrot.slane %v521, %v1417
        %v1419 = vlaneseq
        %v1420 = vshrl.u32 %v1419, 7
        %v1421 = vsub.s32 2, %v1420
        %v1422 = vrot.slane %v524, %v1421
        %v1423 = vlaneseq
        %v1424 = vshrl.u32 %v1423, 7
        %v1425 = vsub.s32 2, %v1424
        %v1426 = vrot.slane %v529, %v1425
        %v1427 = vlaneseq
        %v1428 = vshrl.u32 %v1427, 7
        %v1429 = vsub.s32 2, %v1428
        %v1430 = vrot.slane %v532, %v1429
        %v1431 = vlaneseq
        %v1432 = vshrl.u32 %v1431, 7
        %v1433 = vsub.s32 2, %v1432
        %v1434 = vrot.slane %v537, %v1433
        %v1435 = vlaneseq
        %v1436 = vshrl.u32 %v1435, 7
        %v1437 = vsub.s32 2, %v1436
        %v1438 = vrot.slane %v540, %v1437
        %v1439 = vlaneseq
        %v1440 = vshrl.u32 %v1439, 7
        %v1441 = vsub.s32 2, %v1440
        %v1442 = vrot.slane %v545, %v1441
        %v1443 = vlaneseq
        %v1444 = vshrl.u32 %v1443, 7
        %v1445 = vsub.s32 2, %v1444
        %v1446 = vrot.slane %v548, %v1445
        %v1447 = vlaneseq
        %v1448 = vshrl.u32 %v1447, 7
        %v1449 = vsub.s32 2, %v1448
        %v1450 = vrot.slane %v553, %v1449
        %v1451 = vlaneseq
        %v1452 = vshrl.u32 %v1451, 7
        %v1453 = vsub.s32 2, %v1452
        %v1454 = vrot.slane %v556, %v1453
        %v1455 = vlaneseq
        %v1456 = vshrl.u32 %v1455, 7
        %v1457 = vsub.s32 2, %v1456
        %v1458 = vrot.slane %v561, %v1457
        %v1459 = vlaneseq
        %v1460 = vshrl.u32 %v1459, 7
        %v1461 = vsub.s32 2, %v1460
        %v1462 = vrot.slane %v564, %v1461
        %v1463 = vlaneseq
        %v1464 = vshrl.u32 %v1463, 7
        %v1465 = vsub.s32 2, %v1464
        %v1466 = vrot.slane %v569, %v1465
        %v1467 = vlaneseq
        %v1468 = vshrl.u32 %v1467, 7
        %v1469 = vsub.s32 2, %v1468
        %v1470 = vrot.slane %v572, %v1469
        %v1471 = vmul.f32 %v1217, %v1346
        %v1472 = vmul.f32 %v1221, %v1350
        %v1473 = vmul.f32 %v1225, %v1354
        %v1474 = vmul.f32 %v1229, %v1358
        %v1475 = vmul.f32 %v1233, %v1362
        %v1476 = vmul.f32 %v1237, %v1366
        %v1477 = vmul.f32 %v1241, %v1370
        %v1478 = vmul.f32 %v1245, %v1374
        %v1479 = vmul.f32 %v1249, %v1378
        %v1480 = vmul.f32 %v1253, %v1382
        %v1481 = vmul.f32 %v1257, %v1386
        %v1482 = vmul.f32 %v1261, %v1390
        %v1483 = vmul.f32 %v1265, %v1394
        %v1484 = vmul.f32 %v1269, %v1398
        %v1485 = vmul.f32 %v1273, %v1402
        %v1486 = vmul.f32 %v1277, %v1406
        %v1487 = vmul.f32 %v1281, %v1410
        %v1488 = vmul.f32 %v1285, %v1414
        %v1489 = vmul.f32 %v1289, %v1418
        %v1490 = vmul.f32 %v1293, %v1422
        %v1491 = vmul.f32 %v1297, %v1426
        %v1492 = vmul.f32 %v1301, %v1430
        %v1493 = vmul.f32 %v1305, %v1434
        %v1494 = vmul.f32 %v1309, %v1438
        %v1495 = vmul.f32 %v1313, %v1442
        %v1496 = vmul.f32 %v1317, %v1446
        %v1497 = vmul.f32 %v1321, %v1450
        %v1498 = vmul.f32 %v1325, %v1454
        %v1499 = vmul.f32 %v1329, %v1458
        %v1500 = vmul.f32 %v1333, %v1462
        %v1501 = vmul.f32 %v1337, %v1466
        %v1502 = vmul.f32 %v1341, %v1470
        %v1503 = vadd.f32 %v1183, %v1471
        %v1504 = vadd.f32 %v1184, %v1472
        %v1505 = vadd.f32 %v1185, %v1473
        %v1506 = vadd.f32 %v1186, %v1474
        %v1507 = vadd.f32 %v1187, %v1475
        %v1508 = vadd.f32 %v1188, %v1476
        %v1509 = vadd.f32 %v1189, %v1477
        %v1510 = vadd.f32 %v1190, %v1478
        %v1511 = vadd.f32 %v1191, %v1479
        %v1512 = vadd.f32 %v1192, %v1480
        %v1513 = vadd.f32 %v1193, %v1481
        %v1514 = vadd.f32 %v1194, %v1482
        %v1515 = vadd.f32 %v1195, %v1483
        %v1516 = vadd.f32 %v1196, %v1484
        %v1517 = vadd.f32 %v1197, %v1485
        %v1518 = vadd.f32 %v1198, %v1486
        %v1519 = vadd.f32 %v1199, %v1487
        %v1520 = vadd.f32 %v1200, %v1488
        %v1521 = vadd.f32 %v1201, %v1489
        %v1522 = vadd.f32 %v1202, %v1490
        %v1523 = vadd.f32 %v1203, %v1491
        %v1524 = vadd.f32 %v1204, %v1492
        %v1525 = vadd.f32 %v1205, %v1493
        %v1526 = vadd.f32 %v1206, %v1494
        %v1527 = vadd.f32 %v1207, %v1495
        %v1528 = vadd.f32 %v1208, %v1496
        %v1529 = vadd.f32 %v1209, %v1497
        %v1530 = vadd.f32 %v1210, %v1498
        %v1531 = vadd.f32 %v1211, %v1499
        %v1532 = vadd.f32 %v1212, %v1500
        %v1533 = vadd.f32 %v1213, %v1501
        %v1534 = vadd.f32 %v1214, %v1502
        %1535 = vset.pattern.permute.xlu0 3
        %1536 = vperm.xlu0 %1535, %v308
        %v1537 = vpop.permute.xlu0 %1536
        %1539 = vset.pattern.permute.xlu0 3
        %1540 = vperm.xlu0 %1539, %v309
        %v1541 = vpop.permute.xlu0 %1540
        %1543 = vset.pattern.permute.xlu0 3
        %1544 = vperm.xlu0 %1543, %v310
        %v1545 = vpop.permute.xlu0 %1544
        %1547 = vset.pattern.permute.xlu0 3
        %1548 = vperm.xlu0 %1547, %v311
        %v1549 = vpop.permute.xlu0 %1548
        %1551 = vset.pattern.permute.xlu0 3
        %1552 = vperm.xlu0 %1551, %v312
        %v1553 = vpop.permute.xlu0 %1552
        %1555 = vset.pattern.permute.xlu0 3
        %1556 = vperm.xlu0 %1555, %v313
        %v1557 = vpop.permute.xlu0 %1556
        %1559 = vset.pattern.permute.xlu0 3
        %1560 = vperm.xlu0 %1559, %v314
        %v1561 = vpop.permute.xlu0 %1560
        %1563 = vset.pattern.permute.xlu0 3
        %1564 = vperm.xlu0 %1563, %v315
        %v1565 = vpop.permute.xlu0 %1564
        %1567 = vset.pattern.permute.xlu0 3
        %1568 = vperm.xlu0 %1567, %v316
        %v1569 = vpop.permute.xlu0 %1568
        %1571 = vset.pattern.permute.xlu0 3
        %1572 = vperm.xlu0 %1571, %v317
        %v1573 = vpop.permute.xlu0 %1572
        %1575 = vset.pattern.permute.xlu0 3
        %1576 = vperm.xlu0 %1575, %v318
        %v1577 = vpop.permute.xlu0 %1576
        %1579 = vset.pattern.permute.xlu0 3
        %1580 = vperm.xlu0 %1579, %v319
        %v1581 = vpop.permute.xlu0 %1580
        %1583 = vset.pattern.permute.xlu0 3
        %1584 = vperm.xlu0 %1583, %v320
        %v1585 = vpop.permute.xlu0 %1584
        %1587 = vset.pattern.permute.xlu0 3
        %1588 = vperm.xlu0 %1587, %v321
        %v1589 = vpop.permute.xlu0 %1588
        %1591 = vset.pattern.permute.xlu0 3
        %1592 = vperm.xlu0 %1591, %v322
        %v1593 = vpop.permute.xlu0 %1592
        %1595 = vset.pattern.permute.xlu0 3
        %1596 = vperm.xlu0 %1595, %v323
        %v1597 = vpop.permute.xlu0 %1596
        %1599 = vset.pattern.permute.xlu0 3
        %1600 = vperm.xlu0 %1599, %v324
        %v1601 = vpop.permute.xlu0 %1600
        %1603 = vset.pattern.permute.xlu0 3
        %1604 = vperm.xlu0 %1603, %v325
        %v1605 = vpop.permute.xlu0 %1604
        %1607 = vset.pattern.permute.xlu0 3
        %1608 = vperm.xlu0 %1607, %v326
        %v1609 = vpop.permute.xlu0 %1608
        %1611 = vset.pattern.permute.xlu0 3
        %1612 = vperm.xlu0 %1611, %v327
        %v1613 = vpop.permute.xlu0 %1612
        %1615 = vset.pattern.permute.xlu0 3
        %1616 = vperm.xlu0 %1615, %v328
        %v1617 = vpop.permute.xlu0 %1616
        %1619 = vset.pattern.permute.xlu0 3
        %1620 = vperm.xlu0 %1619, %v329
        %v1621 = vpop.permute.xlu0 %1620
        %1623 = vset.pattern.permute.xlu0 3
        %1624 = vperm.xlu0 %1623, %v330
        %v1625 = vpop.permute.xlu0 %1624
        %1627 = vset.pattern.permute.xlu0 3
        %1628 = vperm.xlu0 %1627, %v331
        %v1629 = vpop.permute.xlu0 %1628
        %1631 = vset.pattern.permute.xlu0 3
        %1632 = vperm.xlu0 %1631, %v332
        %v1633 = vpop.permute.xlu0 %1632
        %1635 = vset.pattern.permute.xlu0 3
        %1636 = vperm.xlu0 %1635, %v333
        %v1637 = vpop.permute.xlu0 %1636
        %1639 = vset.pattern.permute.xlu0 3
        %1640 = vperm.xlu0 %1639, %v334
        %v1641 = vpop.permute.xlu0 %1640
        %1643 = vset.pattern.permute.xlu0 3
        %1644 = vperm.xlu0 %1643, %v335
        %v1645 = vpop.permute.xlu0 %1644
        %1647 = vset.pattern.permute.xlu0 3
        %1648 = vperm.xlu0 %1647, %v336
        %v1649 = vpop.permute.xlu0 %1648
        %1651 = vset.pattern.permute.xlu0 3
        %1652 = vperm.xlu0 %1651, %v337
        %v1653 = vpop.permute.xlu0 %1652
        %1655 = vset.pattern.permute.xlu0 3
        %1656 = vperm.xlu0 %1655, %v338
        %v1657 = vpop.permute.xlu0 %1656
        %1659 = vset.pattern.permute.xlu0 3
        %1660 = vperm.xlu0 %1659, %v339
        %v1661 = vpop.permute.xlu0 %1660
        %v1663 = vlaneseq
        %v1664 = vshrl.u32 %v1663, 7
        %v1665 = vsub.s32 3, %v1664
        %v1666 = vrot.slane %v449, %v1665
        %v1667 = vlaneseq
        %v1668 = vshrl.u32 %v1667, 7
        %v1669 = vsub.s32 3, %v1668
        %v1670 = vrot.slane %v452, %v1669
        %v1671 = vlaneseq
        %v1672 = vshrl.u32 %v1671, 7
        %v1673 = vsub.s32 3, %v1672
        %v1674 = vrot.slane %v457, %v1673
        %v1675 = vlaneseq
        %v1676 = vshrl.u32 %v1675, 7
        %v1677 = vsub.s32 3, %v1676
        %v1678 = vrot.slane %v460, %v1677
        %v1679 = vlaneseq
        %v1680 = vshrl.u32 %v1679, 7
        %v1681 = vsub.s32 3, %v1680
        %v1682 = vrot.slane %v465, %v1681
        %v1683 = vlaneseq
        %v1684 = vshrl.u32 %v1683, 7
        %v1685 = vsub.s32 3, %v1684
        %v1686 = vrot.slane %v468, %v1685
        %v1687 = vlaneseq
        %v1688 = vshrl.u32 %v1687, 7
        %v1689 = vsub.s32 3, %v1688
        %v1690 = vrot.slane %v473, %v1689
        %v1691 = vlaneseq
        %v1692 = vshrl.u32 %v1691, 7
        %v1693 = vsub.s32 3, %v1692
        %v1694 = vrot.slane %v476, %v1693
        %v1695 = vlaneseq
        %v1696 = vshrl.u32 %v1695, 7
        %v1697 = vsub.s32 3, %v1696
        %v1698 = vrot.slane %v481, %v1697
        %v1699 = vlaneseq
        %v1700 = vshrl.u32 %v1699, 7
        %v1701 = vsub.s32 3, %v1700
        %v1702 = vrot.slane %v484, %v1701
        %v1703 = vlaneseq
        %v1704 = vshrl.u32 %v1703, 7
        %v1705 = vsub.s32 3, %v1704
        %v1706 = vrot.slane %v489, %v1705
        %v1707 = vlaneseq
        %v1708 = vshrl.u32 %v1707, 7
        %v1709 = vsub.s32 3, %v1708
        %v1710 = vrot.slane %v492, %v1709
        %v1711 = vlaneseq
        %v1712 = vshrl.u32 %v1711, 7
        %v1713 = vsub.s32 3, %v1712
        %v1714 = vrot.slane %v497, %v1713
        %v1715 = vlaneseq
        %v1716 = vshrl.u32 %v1715, 7
        %v1717 = vsub.s32 3, %v1716
        %v1718 = vrot.slane %v500, %v1717
        %v1719 = vlaneseq
        %v1720 = vshrl.u32 %v1719, 7
        %v1721 = vsub.s32 3, %v1720
        %v1722 = vrot.slane %v505, %v1721
        %v1723 = vlaneseq
        %v1724 = vshrl.u32 %v1723, 7
        %v1725 = vsub.s32 3, %v1724
        %v1726 = vrot.slane %v508, %v1725
        %v1727 = vlaneseq
        %v1728 = vshrl.u32 %v1727, 7
        %v1729 = vsub.s32 3, %v1728
        %v1730 = vrot.slane %v513, %v1729
        %v1731 = vlaneseq
        %v1732 = vshrl.u32 %v1731, 7
        %v1733 = vsub.s32 3, %v1732
        %v1734 = vrot.slane %v516, %v1733
        %v1735 = vlaneseq
        %v1736 = vshrl.u32 %v1735, 7
        %v1737 = vsub.s32 3, %v1736
        %v1738 = vrot.slane %v521, %v1737
        %v1739 = vlaneseq
        %v1740 = vshrl.u32 %v1739, 7
        %v1741 = vsub.s32 3, %v1740
        %v1742 = vrot.slane %v524, %v1741
        %v1743 = vlaneseq
        %v1744 = vshrl.u32 %v1743, 7
        %v1745 = vsub.s32 3, %v1744
        %v1746 = vrot.slane %v529, %v1745
        %v1747 = vlaneseq
        %v1748 = vshrl.u32 %v1747, 7
        %v1749 = vsub.s32 3, %v1748
        %v1750 = vrot.slane %v532, %v1749
        %v1751 = vlaneseq
        %v1752 = vshrl.u32 %v1751, 7
        %v1753 = vsub.s32 3, %v1752
        %v1754 = vrot.slane %v537, %v1753
        %v1755 = vlaneseq
        %v1756 = vshrl.u32 %v1755, 7
        %v1757 = vsub.s32 3, %v1756
        %v1758 = vrot.slane %v540, %v1757
        %v1759 = vlaneseq
        %v1760 = vshrl.u32 %v1759, 7
        %v1761 = vsub.s32 3, %v1760
        %v1762 = vrot.slane %v545, %v1761
        %v1763 = vlaneseq
        %v1764 = vshrl.u32 %v1763, 7
        %v1765 = vsub.s32 3, %v1764
        %v1766 = vrot.slane %v548, %v1765
        %v1767 = vlaneseq
        %v1768 = vshrl.u32 %v1767, 7
        %v1769 = vsub.s32 3, %v1768
        %v1770 = vrot.slane %v553, %v1769
        %v1771 = vlaneseq
        %v1772 = vshrl.u32 %v1771, 7
        %v1773 = vsub.s32 3, %v1772
        %v1774 = vrot.slane %v556, %v1773
        %v1775 = vlaneseq
        %v1776 = vshrl.u32 %v1775, 7
        %v1777 = vsub.s32 3, %v1776
        %v1778 = vrot.slane %v561, %v1777
        %v1779 = vlaneseq
        %v1780 = vshrl.u32 %v1779, 7
        %v1781 = vsub.s32 3, %v1780
        %v1782 = vrot.slane %v564, %v1781
        %v1783 = vlaneseq
        %v1784 = vshrl.u32 %v1783, 7
        %v1785 = vsub.s32 3, %v1784
        %v1786 = vrot.slane %v569, %v1785
        %v1787 = vlaneseq
        %v1788 = vshrl.u32 %v1787, 7
        %v1789 = vsub.s32 3, %v1788
        %v1790 = vrot.slane %v572, %v1789
        %v1791 = vmul.f32 %v1537, %v1666
        %v1792 = vmul.f32 %v1541, %v1670
        %v1793 = vmul.f32 %v1545, %v1674
        %v1794 = vmul.f32 %v1549, %v1678
        %v1795 = vmul.f32 %v1553, %v1682
        %v1796 = vmul.f32 %v1557, %v1686
        %v1797 = vmul.f32 %v1561, %v1690
        %v1798 = vmul.f32 %v1565, %v1694
        %v1799 = vmul.f32 %v1569, %v1698
        %v1800 = vmul.f32 %v1573, %v1702
        %v1801 = vmul.f32 %v1577, %v1706
        %v1802 = vmul.f32 %v1581, %v1710
        %v1803 = vmul.f32 %v1585, %v1714
        %v1804 = vmul.f32 %v1589, %v1718
        %v1805 = vmul.f32 %v1593, %v1722
        %v1806 = vmul.f32 %v1597, %v1726
        %v1807 = vmul.f32 %v1601, %v1730
        %v1808 = vmul.f32 %v1605, %v1734
        %v1809 = vmul.f32 %v1609, %v1738
        %v1810 = vmul.f32 %v1613, %v1742
        %v1811 = vmul.f32 %v1617, %v1746
        %v1812 = vmul.f32 %v1621, %v1750
        %v1813 = vmul.f32 %v1625, %v1754
        %v1814 = vmul.f32 %v1629, %v1758
        %v1815 = vmul.f32 %v1633, %v1762
        %v1816 = vmul.f32 %v1637, %v1766
        %v1817 = vmul.f32 %v1641, %v1770
        %v1818 = vmul.f32 %v1645, %v1774
        %v1819 = vmul.f32 %v1649, %v1778
        %v1820 = vmul.f32 %v1653, %v1782
        %v1821 = vmul.f32 %v1657, %v1786
        %v1822 = vmul.f32 %v1661, %v1790
        %v1823 = vadd.f32 %v1503, %v1791
        %v1824 = vadd.f32 %v1504, %v1792
        %v1825 = vadd.f32 %v1505, %v1793
        %v1826 = vadd.f32 %v1506, %v1794
        %v1827 = vadd.f32 %v1507, %v1795
        %v1828 = vadd.f32 %v1508, %v1796
        %v1829 = vadd.f32 %v1509, %v1797
        %v1830 = vadd.f32 %v1510, %v1798
        %v1831 = vadd.f32 %v1511, %v1799
        %v1832 = vadd.f32 %v1512, %v1800
        %v1833 = vadd.f32 %v1513, %v1801
        %v1834 = vadd.f32 %v1514, %v1802
        %v1835 = vadd.f32 %v1515, %v1803
        %v1836 = vadd.f32 %v1516, %v1804
        %v1837 = vadd.f32 %v1517, %v1805
        %v1838 = vadd.f32 %v1518, %v1806
        %v1839 = vadd.f32 %v1519, %v1807
        %v1840 = vadd.f32 %v1520, %v1808
        %v1841 = vadd.f32 %v1521, %v1809
        %v1842 = vadd.f32 %v1522, %v1810
        %v1843 = vadd.f32 %v1523, %v1811
        %v1844 = vadd.f32 %v1524, %v1812
        %v1845 = vadd.f32 %v1525, %v1813
        %v1846 = vadd.f32 %v1526, %v1814
        %v1847 = vadd.f32 %v1527, %v1815
        %v1848 = vadd.f32 %v1528, %v1816
        %v1849 = vadd.f32 %v1529, %v1817
        %v1850 = vadd.f32 %v1530, %v1818
        %v1851 = vadd.f32 %v1531, %v1819
        %v1852 = vadd.f32 %v1532, %v1820
        %v1853 = vadd.f32 %v1533, %v1821
        %v1854 = vadd.f32 %v1534, %v1822
        %1855 = vset.pattern.permute.xlu0 4
        %1856 = vperm.xlu0 %1855, %v308
        %v1857 = vpop.permute.xlu0 %1856
        %1859 = vset.pattern.permute.xlu0 4
        %1860 = vperm.xlu0 %1859, %v309
        %v1861 = vpop.permute.xlu0 %1860
        %1863 = vset.pattern.permute.xlu0 4
        %1864 = vperm.xlu0 %1863, %v310
        %v1865 = vpop.permute.xlu0 %1864
        %1867 = vset.pattern.permute.xlu0 4
        %1868 = vperm.xlu0 %1867, %v311
        %v1869 = vpop.permute.xlu0 %1868
        %1871 = vset.pattern.permute.xlu0 4
        %1872 = vperm.xlu0 %1871, %v312
        %v1873 = vpop.permute.xlu0 %1872
        %1875 = vset.pattern.permute.xlu0 4
        %1876 = vperm.xlu0 %1875, %v313
        %v1877 = vpop.permute.xlu0 %1876
        %1879 = vset.pattern.permute.xlu0 4
        %1880 = vperm.xlu0 %1879, %v314
        %v1881 = vpop.permute.xlu0 %1880
        %1883 = vset.pattern.permute.xlu0 4
        %1884 = vperm.xlu0 %1883, %v315
        %v1885 = vpop.permute.xlu0 %1884
        %1887 = vset.pattern.permute.xlu0 4
        %1888 = vperm.xlu0 %1887, %v316
        %v1889 = vpop.permute.xlu0 %1888
        %1891 = vset.pattern.permute.xlu0 4
        %1892 = vperm.xlu0 %1891, %v317
        %v1893 = vpop.permute.xlu0 %1892
        %1895 = vset.pattern.permute.xlu0 4
        %1896 = vperm.xlu0 %1895, %v318
        %v1897 = vpop.permute.xlu0 %1896
        %1899 = vset.pattern.permute.xlu0 4
        %1900 = vperm.xlu0 %1899, %v319
        %v1901 = vpop.permute.xlu0 %1900
        %1903 = vset.pattern.permute.xlu0 4
        %1904 = vperm.xlu0 %1903, %v320
        %v1905 = vpop.permute.xlu0 %1904
        %1907 = vset.pattern.permute.xlu0 4
        %1908 = vperm.xlu0 %1907, %v321
        %v1909 = vpop.permute.xlu0 %1908
        %1911 = vset.pattern.permute.xlu0 4
        %1912 = vperm.xlu0 %1911, %v322
        %v1913 = vpop.permute.xlu0 %1912
        %1915 = vset.pattern.permute.xlu0 4
        %1916 = vperm.xlu0 %1915, %v323
        %v1917 = vpop.permute.xlu0 %1916
        %1919 = vset.pattern.permute.xlu0 4
        %1920 = vperm.xlu0 %1919, %v324
        %v1921 = vpop.permute.xlu0 %1920
        %1923 = vset.pattern.permute.xlu0 4
        %1924 = vperm.xlu0 %1923, %v325
        %v1925 = vpop.permute.xlu0 %1924
        %1927 = vset.pattern.permute.xlu0 4
        %1928 = vperm.xlu0 %1927, %v326
        %v1929 = vpop.permute.xlu0 %1928
        %1931 = vset.pattern.permute.xlu0 4
        %1932 = vperm.xlu0 %1931, %v327
        %v1933 = vpop.permute.xlu0 %1932
        %1935 = vset.pattern.permute.xlu0 4
        %1936 = vperm.xlu0 %1935, %v328
        %v1937 = vpop.permute.xlu0 %1936
        %1939 = vset.pattern.permute.xlu0 4
        %1940 = vperm.xlu0 %1939, %v329
        %v1941 = vpop.permute.xlu0 %1940
        %1943 = vset.pattern.permute.xlu0 4
        %1944 = vperm.xlu0 %1943, %v330
        %v1945 = vpop.permute.xlu0 %1944
        %1947 = vset.pattern.permute.xlu0 4
        %1948 = vperm.xlu0 %1947, %v331
        %v1949 = vpop.permute.xlu0 %1948
        %1951 = vset.pattern.permute.xlu0 4
        %1952 = vperm.xlu0 %1951, %v332
        %v1953 = vpop.permute.xlu0 %1952
        %1955 = vset.pattern.permute.xlu0 4
        %1956 = vperm.xlu0 %1955, %v333
        %v1957 = vpop.permute.xlu0 %1956
        %1959 = vset.pattern.permute.xlu0 4
        %1960 = vperm.xlu0 %1959, %v334
        %v1961 = vpop.permute.xlu0 %1960
        %1963 = vset.pattern.permute.xlu0 4
        %1964 = vperm.xlu0 %1963, %v335
        %v1965 = vpop.permute.xlu0 %1964
        %1967 = vset.pattern.permute.xlu0 4
        %1968 = vperm.xlu0 %1967, %v336
        %v1969 = vpop.permute.xlu0 %1968
        %1971 = vset.pattern.permute.xlu0 4
        %1972 = vperm.xlu0 %1971, %v337
        %v1973 = vpop.permute.xlu0 %1972
        %1975 = vset.pattern.permute.xlu0 4
        %1976 = vperm.xlu0 %1975, %v338
        %v1977 = vpop.permute.xlu0 %1976
        %1979 = vset.pattern.permute.xlu0 4
        %1980 = vperm.xlu0 %1979, %v339
        %v1981 = vpop.permute.xlu0 %1980
        %v1983 = vlaneseq
        %v1984 = vshrl.u32 %v1983, 7
        %v1985 = vsub.s32 4, %v1984
        %v1986 = vrot.slane %v449, %v1985
        %v1987 = vlaneseq
        %v1988 = vshrl.u32 %v1987, 7
        %v1989 = vsub.s32 4, %v1988
        %v1990 = vrot.slane %v452, %v1989
        %v1991 = vlaneseq
        %v1992 = vshrl.u32 %v1991, 7
        %v1993 = vsub.s32 4, %v1992
        %v1994 = vrot.slane %v457, %v1993
        %v1995 = vlaneseq
        %v1996 = vshrl.u32 %v1995, 7
        %v1997 = vsub.s32 4, %v1996
        %v1998 = vrot.slane %v460, %v1997
        %v1999 = vlaneseq
        %v2000 = vshrl.u32 %v1999, 7
        %v2001 = vsub.s32 4, %v2000
        %v2002 = vrot.slane %v465, %v2001
        %v2003 = vlaneseq
        %v2004 = vshrl.u32 %v2003, 7
        %v2005 = vsub.s32 4, %v2004
        %v2006 = vrot.slane %v468, %v2005
        %v2007 = vlaneseq
        %v2008 = vshrl.u32 %v2007, 7
        %v2009 = vsub.s32 4, %v2008
        %v2010 = vrot.slane %v473, %v2009
        %v2011 = vlaneseq
        %v2012 = vshrl.u32 %v2011, 7
        %v2013 = vsub.s32 4, %v2012
        %v2014 = vrot.slane %v476, %v2013
        %v2015 = vlaneseq
        %v2016 = vshrl.u32 %v2015, 7
        %v2017 = vsub.s32 4, %v2016
        %v2018 = vrot.slane %v481, %v2017
        %v2019 = vlaneseq
        %v2020 = vshrl.u32 %v2019, 7
        %v2021 = vsub.s32 4, %v2020
        %v2022 = vrot.slane %v484, %v2021
        %v2023 = vlaneseq
        %v2024 = vshrl.u32 %v2023, 7
        %v2025 = vsub.s32 4, %v2024
        %v2026 = vrot.slane %v489, %v2025
        %v2027 = vlaneseq
        %v2028 = vshrl.u32 %v2027, 7
        %v2029 = vsub.s32 4, %v2028
        %v2030 = vrot.slane %v492, %v2029
        %v2031 = vlaneseq
        %v2032 = vshrl.u32 %v2031, 7
        %v2033 = vsub.s32 4, %v2032
        %v2034 = vrot.slane %v497, %v2033
        %v2035 = vlaneseq
        %v2036 = vshrl.u32 %v2035, 7
        %v2037 = vsub.s32 4, %v2036
        %v2038 = vrot.slane %v500, %v2037
        %v2039 = vlaneseq
        %v2040 = vshrl.u32 %v2039, 7
        %v2041 = vsub.s32 4, %v2040
        %v2042 = vrot.slane %v505, %v2041
        %v2043 = vlaneseq
        %v2044 = vshrl.u32 %v2043, 7
        %v2045 = vsub.s32 4, %v2044
        %v2046 = vrot.slane %v508, %v2045
        %v2047 = vlaneseq
        %v2048 = vshrl.u32 %v2047, 7
        %v2049 = vsub.s32 4, %v2048
        %v2050 = vrot.slane %v513, %v2049
        %v2051 = vlaneseq
        %v2052 = vshrl.u32 %v2051, 7
        %v2053 = vsub.s32 4, %v2052
        %v2054 = vrot.slane %v516, %v2053
        %v2055 = vlaneseq
        %v2056 = vshrl.u32 %v2055, 7
        %v2057 = vsub.s32 4, %v2056
        %v2058 = vrot.slane %v521, %v2057
        %v2059 = vlaneseq
        %v2060 = vshrl.u32 %v2059, 7
        %v2061 = vsub.s32 4, %v2060
        %v2062 = vrot.slane %v524, %v2061
        %v2063 = vlaneseq
        %v2064 = vshrl.u32 %v2063, 7
        %v2065 = vsub.s32 4, %v2064
        %v2066 = vrot.slane %v529, %v2065
        %v2067 = vlaneseq
        %v2068 = vshrl.u32 %v2067, 7
        %v2069 = vsub.s32 4, %v2068
        %v2070 = vrot.slane %v532, %v2069
        %v2071 = vlaneseq
        %v2072 = vshrl.u32 %v2071, 7
        %v2073 = vsub.s32 4, %v2072
        %v2074 = vrot.slane %v537, %v2073
        %v2075 = vlaneseq
        %v2076 = vshrl.u32 %v2075, 7
        %v2077 = vsub.s32 4, %v2076
        %v2078 = vrot.slane %v540, %v2077
        %v2079 = vlaneseq
        %v2080 = vshrl.u32 %v2079, 7
        %v2081 = vsub.s32 4, %v2080
        %v2082 = vrot.slane %v545, %v2081
        %v2083 = vlaneseq
        %v2084 = vshrl.u32 %v2083, 7
        %v2085 = vsub.s32 4, %v2084
        %v2086 = vrot.slane %v548, %v2085
        %v2087 = vlaneseq
        %v2088 = vshrl.u32 %v2087, 7
        %v2089 = vsub.s32 4, %v2088
        %v2090 = vrot.slane %v553, %v2089
        %v2091 = vlaneseq
        %v2092 = vshrl.u32 %v2091, 7
        %v2093 = vsub.s32 4, %v2092
        %v2094 = vrot.slane %v556, %v2093
        %v2095 = vlaneseq
        %v2096 = vshrl.u32 %v2095, 7
        %v2097 = vsub.s32 4, %v2096
        %v2098 = vrot.slane %v561, %v2097
        %v2099 = vlaneseq
        %v2100 = vshrl.u32 %v2099, 7
        %v2101 = vsub.s32 4, %v2100
        %v2102 = vrot.slane %v564, %v2101
        %v2103 = vlaneseq
        %v2104 = vshrl.u32 %v2103, 7
        %v2105 = vsub.s32 4, %v2104
        %v2106 = vrot.slane %v569, %v2105
        %v2107 = vlaneseq
        %v2108 = vshrl.u32 %v2107, 7
        %v2109 = vsub.s32 4, %v2108
        %v2110 = vrot.slane %v572, %v2109
        %v2111 = vmul.f32 %v1857, %v1986
        %v2112 = vmul.f32 %v1861, %v1990
        %v2113 = vmul.f32 %v1865, %v1994
        %v2114 = vmul.f32 %v1869, %v1998
        %v2115 = vmul.f32 %v1873, %v2002
        %v2116 = vmul.f32 %v1877, %v2006
        %v2117 = vmul.f32 %v1881, %v2010
        %v2118 = vmul.f32 %v1885, %v2014
        %v2119 = vmul.f32 %v1889, %v2018
        %v2120 = vmul.f32 %v1893, %v2022
        %v2121 = vmul.f32 %v1897, %v2026
        %v2122 = vmul.f32 %v1901, %v2030
        %v2123 = vmul.f32 %v1905, %v2034
        %v2124 = vmul.f32 %v1909, %v2038
        %v2125 = vmul.f32 %v1913, %v2042
        %v2126 = vmul.f32 %v1917, %v2046
        %v2127 = vmul.f32 %v1921, %v2050
        %v2128 = vmul.f32 %v1925, %v2054
        %v2129 = vmul.f32 %v1929, %v2058
        %v2130 = vmul.f32 %v1933, %v2062
        %v2131 = vmul.f32 %v1937, %v2066
        %v2132 = vmul.f32 %v1941, %v2070
        %v2133 = vmul.f32 %v1945, %v2074
        %v2134 = vmul.f32 %v1949, %v2078
        %v2135 = vmul.f32 %v1953, %v2082
        %v2136 = vmul.f32 %v1957, %v2086
        %v2137 = vmul.f32 %v1961, %v2090
        %v2138 = vmul.f32 %v1965, %v2094
        %v2139 = vmul.f32 %v1969, %v2098
        %v2140 = vmul.f32 %v1973, %v2102
        %v2141 = vmul.f32 %v1977, %v2106
        %v2142 = vmul.f32 %v1981, %v2110
        %v2143 = vadd.f32 %v1823, %v2111
        %v2144 = vadd.f32 %v1824, %v2112
        %v2145 = vadd.f32 %v1825, %v2113
        %v2146 = vadd.f32 %v1826, %v2114
        %v2147 = vadd.f32 %v1827, %v2115
        %v2148 = vadd.f32 %v1828, %v2116
        %v2149 = vadd.f32 %v1829, %v2117
        %v2150 = vadd.f32 %v1830, %v2118
        %v2151 = vadd.f32 %v1831, %v2119
        %v2152 = vadd.f32 %v1832, %v2120
        %v2153 = vadd.f32 %v1833, %v2121
        %v2154 = vadd.f32 %v1834, %v2122
        %v2155 = vadd.f32 %v1835, %v2123
        %v2156 = vadd.f32 %v1836, %v2124
        %v2157 = vadd.f32 %v1837, %v2125
        %v2158 = vadd.f32 %v1838, %v2126
        %v2159 = vadd.f32 %v1839, %v2127
        %v2160 = vadd.f32 %v1840, %v2128
        %v2161 = vadd.f32 %v1841, %v2129
        %v2162 = vadd.f32 %v1842, %v2130
        %v2163 = vadd.f32 %v1843, %v2131
        %v2164 = vadd.f32 %v1844, %v2132
        %v2165 = vadd.f32 %v1845, %v2133
        %v2166 = vadd.f32 %v1846, %v2134
        %v2167 = vadd.f32 %v1847, %v2135
        %v2168 = vadd.f32 %v1848, %v2136
        %v2169 = vadd.f32 %v1849, %v2137
        %v2170 = vadd.f32 %v1850, %v2138
        %v2171 = vadd.f32 %v1851, %v2139
        %v2172 = vadd.f32 %v1852, %v2140
        %v2173 = vadd.f32 %v1853, %v2141
        %v2174 = vadd.f32 %v1854, %v2142
        %2175 = vset.pattern.permute.xlu0 5
        %2176 = vperm.xlu0 %2175, %v308
        %v2177 = vpop.permute.xlu0 %2176
        %2179 = vset.pattern.permute.xlu0 5
        %2180 = vperm.xlu0 %2179, %v309
        %v2181 = vpop.permute.xlu0 %2180
        %2183 = vset.pattern.permute.xlu0 5
        %2184 = vperm.xlu0 %2183, %v310
        %v2185 = vpop.permute.xlu0 %2184
        %2187 = vset.pattern.permute.xlu0 5
        %2188 = vperm.xlu0 %2187, %v311
        %v2189 = vpop.permute.xlu0 %2188
        %2191 = vset.pattern.permute.xlu0 5
        %2192 = vperm.xlu0 %2191, %v312
        %v2193 = vpop.permute.xlu0 %2192
        %2195 = vset.pattern.permute.xlu0 5
        %2196 = vperm.xlu0 %2195, %v313
        %v2197 = vpop.permute.xlu0 %2196
        %2199 = vset.pattern.permute.xlu0 5
        %2200 = vperm.xlu0 %2199, %v314
        %v2201 = vpop.permute.xlu0 %2200
        %2203 = vset.pattern.permute.xlu0 5
        %2204 = vperm.xlu0 %2203, %v315
        %v2205 = vpop.permute.xlu0 %2204
        %2207 = vset.pattern.permute.xlu0 5
        %2208 = vperm.xlu0 %2207, %v316
        %v2209 = vpop.permute.xlu0 %2208
        %2211 = vset.pattern.permute.xlu0 5
        %2212 = vperm.xlu0 %2211, %v317
        %v2213 = vpop.permute.xlu0 %2212
        %2215 = vset.pattern.permute.xlu0 5
        %2216 = vperm.xlu0 %2215, %v318
        %v2217 = vpop.permute.xlu0 %2216
        %2219 = vset.pattern.permute.xlu0 5
        %2220 = vperm.xlu0 %2219, %v319
        %v2221 = vpop.permute.xlu0 %2220
        %2223 = vset.pattern.permute.xlu0 5
        %2224 = vperm.xlu0 %2223, %v320
        %v2225 = vpop.permute.xlu0 %2224
        %2227 = vset.pattern.permute.xlu0 5
        %2228 = vperm.xlu0 %2227, %v321
        %v2229 = vpop.permute.xlu0 %2228
        %2231 = vset.pattern.permute.xlu0 5
        %2232 = vperm.xlu0 %2231, %v322
        %v2233 = vpop.permute.xlu0 %2232
        %2235 = vset.pattern.permute.xlu0 5
        %2236 = vperm.xlu0 %2235, %v323
        %v2237 = vpop.permute.xlu0 %2236
        %2239 = vset.pattern.permute.xlu0 5
        %2240 = vperm.xlu0 %2239, %v324
        %v2241 = vpop.permute.xlu0 %2240
        %2243 = vset.pattern.permute.xlu0 5
        %2244 = vperm.xlu0 %2243, %v325
        %v2245 = vpop.permute.xlu0 %2244
        %2247 = vset.pattern.permute.xlu0 5
        %2248 = vperm.xlu0 %2247, %v326
        %v2249 = vpop.permute.xlu0 %2248
        %2251 = vset.pattern.permute.xlu0 5
        %2252 = vperm.xlu0 %2251, %v327
        %v2253 = vpop.permute.xlu0 %2252
        %2255 = vset.pattern.permute.xlu0 5
        %2256 = vperm.xlu0 %2255, %v328
        %v2257 = vpop.permute.xlu0 %2256
        %2259 = vset.pattern.permute.xlu0 5
        %2260 = vperm.xlu0 %2259, %v329
        %v2261 = vpop.permute.xlu0 %2260
        %2263 = vset.pattern.permute.xlu0 5
        %2264 = vperm.xlu0 %2263, %v330
        %v2265 = vpop.permute.xlu0 %2264
        %2267 = vset.pattern.permute.xlu0 5
        %2268 = vperm.xlu0 %2267, %v331
        %v2269 = vpop.permute.xlu0 %2268
        %2271 = vset.pattern.permute.xlu0 5
        %2272 = vperm.xlu0 %2271, %v332
        %v2273 = vpop.permute.xlu0 %2272
        %2275 = vset.pattern.permute.xlu0 5
        %2276 = vperm.xlu0 %2275, %v333
        %v2277 = vpop.permute.xlu0 %2276
        %2279 = vset.pattern.permute.xlu0 5
        %2280 = vperm.xlu0 %2279, %v334
        %v2281 = vpop.permute.xlu0 %2280
        %2283 = vset.pattern.permute.xlu0 5
        %2284 = vperm.xlu0 %2283, %v335
        %v2285 = vpop.permute.xlu0 %2284
        %2287 = vset.pattern.permute.xlu0 5
        %2288 = vperm.xlu0 %2287, %v336
        %v2289 = vpop.permute.xlu0 %2288
        %2291 = vset.pattern.permute.xlu0 5
        %2292 = vperm.xlu0 %2291, %v337
        %v2293 = vpop.permute.xlu0 %2292
        %2295 = vset.pattern.permute.xlu0 5
        %2296 = vperm.xlu0 %2295, %v338
        %v2297 = vpop.permute.xlu0 %2296
        %2299 = vset.pattern.permute.xlu0 5
        %2300 = vperm.xlu0 %2299, %v339
        %v2301 = vpop.permute.xlu0 %2300
        %v2303 = vlaneseq
        %v2304 = vshrl.u32 %v2303, 7
        %v2305 = vsub.s32 5, %v2304
        %v2306 = vrot.slane %v449, %v2305
        %v2307 = vlaneseq
        %v2308 = vshrl.u32 %v2307, 7
        %v2309 = vsub.s32 5, %v2308
        %v2310 = vrot.slane %v452, %v2309
        %v2311 = vlaneseq
        %v2312 = vshrl.u32 %v2311, 7
        %v2313 = vsub.s32 5, %v2312
        %v2314 = vrot.slane %v457, %v2313
        %v2315 = vlaneseq
        %v2316 = vshrl.u32 %v2315, 7
        %v2317 = vsub.s32 5, %v2316
        %v2318 = vrot.slane %v460, %v2317
        %v2319 = vlaneseq
        %v2320 = vshrl.u32 %v2319, 7
        %v2321 = vsub.s32 5, %v2320
        %v2322 = vrot.slane %v465, %v2321
        %v2323 = vlaneseq
        %v2324 = vshrl.u32 %v2323, 7
        %v2325 = vsub.s32 5, %v2324
        %v2326 = vrot.slane %v468, %v2325
        %v2327 = vlaneseq
        %v2328 = vshrl.u32 %v2327, 7
        %v2329 = vsub.s32 5, %v2328
        %v2330 = vrot.slane %v473, %v2329
        %v2331 = vlaneseq
        %v2332 = vshrl.u32 %v2331, 7
        %v2333 = vsub.s32 5, %v2332
        %v2334 = vrot.slane %v476, %v2333
        %v2335 = vlaneseq
        %v2336 = vshrl.u32 %v2335, 7
        %v2337 = vsub.s32 5, %v2336
        %v2338 = vrot.slane %v481, %v2337
        %v2339 = vlaneseq
        %v2340 = vshrl.u32 %v2339, 7
        %v2341 = vsub.s32 5, %v2340
        %v2342 = vrot.slane %v484, %v2341
        %v2343 = vlaneseq
        %v2344 = vshrl.u32 %v2343, 7
        %v2345 = vsub.s32 5, %v2344
        %v2346 = vrot.slane %v489, %v2345
        %v2347 = vlaneseq
        %v2348 = vshrl.u32 %v2347, 7
        %v2349 = vsub.s32 5, %v2348
        %v2350 = vrot.slane %v492, %v2349
        %v2351 = vlaneseq
        %v2352 = vshrl.u32 %v2351, 7
        %v2353 = vsub.s32 5, %v2352
        %v2354 = vrot.slane %v497, %v2353
        %v2355 = vlaneseq
        %v2356 = vshrl.u32 %v2355, 7
        %v2357 = vsub.s32 5, %v2356
        %v2358 = vrot.slane %v500, %v2357
        %v2359 = vlaneseq
        %v2360 = vshrl.u32 %v2359, 7
        %v2361 = vsub.s32 5, %v2360
        %v2362 = vrot.slane %v505, %v2361
        %v2363 = vlaneseq
        %v2364 = vshrl.u32 %v2363, 7
        %v2365 = vsub.s32 5, %v2364
        %v2366 = vrot.slane %v508, %v2365
        %v2367 = vlaneseq
        %v2368 = vshrl.u32 %v2367, 7
        %v2369 = vsub.s32 5, %v2368
        %v2370 = vrot.slane %v513, %v2369
        %v2371 = vlaneseq
        %v2372 = vshrl.u32 %v2371, 7
        %v2373 = vsub.s32 5, %v2372
        %v2374 = vrot.slane %v516, %v2373
        %v2375 = vlaneseq
        %v2376 = vshrl.u32 %v2375, 7
        %v2377 = vsub.s32 5, %v2376
        %v2378 = vrot.slane %v521, %v2377
        %v2379 = vlaneseq
        %v2380 = vshrl.u32 %v2379, 7
        %v2381 = vsub.s32 5, %v2380
        %v2382 = vrot.slane %v524, %v2381
        %v2383 = vlaneseq
        %v2384 = vshrl.u32 %v2383, 7
        %v2385 = vsub.s32 5, %v2384
        %v2386 = vrot.slane %v529, %v2385
        %v2387 = vlaneseq
        %v2388 = vshrl.u32 %v2387, 7
        %v2389 = vsub.s32 5, %v2388
        %v2390 = vrot.slane %v532, %v2389
        %v2391 = vlaneseq
        %v2392 = vshrl.u32 %v2391, 7
        %v2393 = vsub.s32 5, %v2392
        %v2394 = vrot.slane %v537, %v2393
        %v2395 = vlaneseq
        %v2396 = vshrl.u32 %v2395, 7
        %v2397 = vsub.s32 5, %v2396
        %v2398 = vrot.slane %v540, %v2397
        %v2399 = vlaneseq
        %v2400 = vshrl.u32 %v2399, 7
        %v2401 = vsub.s32 5, %v2400
        %v2402 = vrot.slane %v545, %v2401
        %v2403 = vlaneseq
        %v2404 = vshrl.u32 %v2403, 7
        %v2405 = vsub.s32 5, %v2404
        %v2406 = vrot.slane %v548, %v2405
        %v2407 = vlaneseq
        %v2408 = vshrl.u32 %v2407, 7
        %v2409 = vsub.s32 5, %v2408
        %v2410 = vrot.slane %v553, %v2409
        %v2411 = vlaneseq
        %v2412 = vshrl.u32 %v2411, 7
        %v2413 = vsub.s32 5, %v2412
        %v2414 = vrot.slane %v556, %v2413
        %v2415 = vlaneseq
        %v2416 = vshrl.u32 %v2415, 7
        %v2417 = vsub.s32 5, %v2416
        %v2418 = vrot.slane %v561, %v2417
        %v2419 = vlaneseq
        %v2420 = vshrl.u32 %v2419, 7
        %v2421 = vsub.s32 5, %v2420
        %v2422 = vrot.slane %v564, %v2421
        %v2423 = vlaneseq
        %v2424 = vshrl.u32 %v2423, 7
        %v2425 = vsub.s32 5, %v2424
        %v2426 = vrot.slane %v569, %v2425
        %v2427 = vlaneseq
        %v2428 = vshrl.u32 %v2427, 7
        %v2429 = vsub.s32 5, %v2428
        %v2430 = vrot.slane %v572, %v2429
        %v2431 = vmul.f32 %v2177, %v2306
        %v2432 = vmul.f32 %v2181, %v2310
        %v2433 = vmul.f32 %v2185, %v2314
        %v2434 = vmul.f32 %v2189, %v2318
        %v2435 = vmul.f32 %v2193, %v2322
        %v2436 = vmul.f32 %v2197, %v2326
        %v2437 = vmul.f32 %v2201, %v2330
        %v2438 = vmul.f32 %v2205, %v2334
        %v2439 = vmul.f32 %v2209, %v2338
        %v2440 = vmul.f32 %v2213, %v2342
        %v2441 = vmul.f32 %v2217, %v2346
        %v2442 = vmul.f32 %v2221, %v2350
        %v2443 = vmul.f32 %v2225, %v2354
        %v2444 = vmul.f32 %v2229, %v2358
        %v2445 = vmul.f32 %v2233, %v2362
        %v2446 = vmul.f32 %v2237, %v2366
        %v2447 = vmul.f32 %v2241, %v2370
        %v2448 = vmul.f32 %v2245, %v2374
        %v2449 = vmul.f32 %v2249, %v2378
        %v2450 = vmul.f32 %v2253, %v2382
        %v2451 = vmul.f32 %v2257, %v2386
        %v2452 = vmul.f32 %v2261, %v2390
        %v2453 = vmul.f32 %v2265, %v2394
        %v2454 = vmul.f32 %v2269, %v2398
        %v2455 = vmul.f32 %v2273, %v2402
        %v2456 = vmul.f32 %v2277, %v2406
        %v2457 = vmul.f32 %v2281, %v2410
        %v2458 = vmul.f32 %v2285, %v2414
        %v2459 = vmul.f32 %v2289, %v2418
        %v2460 = vmul.f32 %v2293, %v2422
        %v2461 = vmul.f32 %v2297, %v2426
        %v2462 = vmul.f32 %v2301, %v2430
        %v2463 = vadd.f32 %v2143, %v2431
        %v2464 = vadd.f32 %v2144, %v2432
        %v2465 = vadd.f32 %v2145, %v2433
        %v2466 = vadd.f32 %v2146, %v2434
        %v2467 = vadd.f32 %v2147, %v2435
        %v2468 = vadd.f32 %v2148, %v2436
        %v2469 = vadd.f32 %v2149, %v2437
        %v2470 = vadd.f32 %v2150, %v2438
        %v2471 = vadd.f32 %v2151, %v2439
        %v2472 = vadd.f32 %v2152, %v2440
        %v2473 = vadd.f32 %v2153, %v2441
        %v2474 = vadd.f32 %v2154, %v2442
        %v2475 = vadd.f32 %v2155, %v2443
        %v2476 = vadd.f32 %v2156, %v2444
        %v2477 = vadd.f32 %v2157, %v2445
        %v2478 = vadd.f32 %v2158, %v2446
        %v2479 = vadd.f32 %v2159, %v2447
        %v2480 = vadd.f32 %v2160, %v2448
        %v2481 = vadd.f32 %v2161, %v2449
        %v2482 = vadd.f32 %v2162, %v2450
        %v2483 = vadd.f32 %v2163, %v2451
        %v2484 = vadd.f32 %v2164, %v2452
        %v2485 = vadd.f32 %v2165, %v2453
        %v2486 = vadd.f32 %v2166, %v2454
        %v2487 = vadd.f32 %v2167, %v2455
        %v2488 = vadd.f32 %v2168, %v2456
        %v2489 = vadd.f32 %v2169, %v2457
        %v2490 = vadd.f32 %v2170, %v2458
        %v2491 = vadd.f32 %v2171, %v2459
        %v2492 = vadd.f32 %v2172, %v2460
        %v2493 = vadd.f32 %v2173, %v2461
        %v2494 = vadd.f32 %v2174, %v2462
        %2495 = vset.pattern.permute.xlu0 6
        %2496 = vperm.xlu0 %2495, %v308
        %v2497 = vpop.permute.xlu0 %2496
        %2499 = vset.pattern.permute.xlu0 6
        %2500 = vperm.xlu0 %2499, %v309
        %v2501 = vpop.permute.xlu0 %2500
        %2503 = vset.pattern.permute.xlu0 6
        %2504 = vperm.xlu0 %2503, %v310
        %v2505 = vpop.permute.xlu0 %2504
        %2507 = vset.pattern.permute.xlu0 6
        %2508 = vperm.xlu0 %2507, %v311
        %v2509 = vpop.permute.xlu0 %2508
        %2511 = vset.pattern.permute.xlu0 6
        %2512 = vperm.xlu0 %2511, %v312
        %v2513 = vpop.permute.xlu0 %2512
        %2515 = vset.pattern.permute.xlu0 6
        %2516 = vperm.xlu0 %2515, %v313
        %v2517 = vpop.permute.xlu0 %2516
        %2519 = vset.pattern.permute.xlu0 6
        %2520 = vperm.xlu0 %2519, %v314
        %v2521 = vpop.permute.xlu0 %2520
        %2523 = vset.pattern.permute.xlu0 6
        %2524 = vperm.xlu0 %2523, %v315
        %v2525 = vpop.permute.xlu0 %2524
        %2527 = vset.pattern.permute.xlu0 6
        %2528 = vperm.xlu0 %2527, %v316
        %v2529 = vpop.permute.xlu0 %2528
        %2531 = vset.pattern.permute.xlu0 6
        %2532 = vperm.xlu0 %2531, %v317
        %v2533 = vpop.permute.xlu0 %2532
        %2535 = vset.pattern.permute.xlu0 6
        %2536 = vperm.xlu0 %2535, %v318
        %v2537 = vpop.permute.xlu0 %2536
        %2539 = vset.pattern.permute.xlu0 6
        %2540 = vperm.xlu0 %2539, %v319
        %v2541 = vpop.permute.xlu0 %2540
        %2543 = vset.pattern.permute.xlu0 6
        %2544 = vperm.xlu0 %2543, %v320
        %v2545 = vpop.permute.xlu0 %2544
        %2547 = vset.pattern.permute.xlu0 6
        %2548 = vperm.xlu0 %2547, %v321
        %v2549 = vpop.permute.xlu0 %2548
        %2551 = vset.pattern.permute.xlu0 6
        %2552 = vperm.xlu0 %2551, %v322
        %v2553 = vpop.permute.xlu0 %2552
        %2555 = vset.pattern.permute.xlu0 6
        %2556 = vperm.xlu0 %2555, %v323
        %v2557 = vpop.permute.xlu0 %2556
        %2559 = vset.pattern.permute.xlu0 6
        %2560 = vperm.xlu0 %2559, %v324
        %v2561 = vpop.permute.xlu0 %2560
        %2563 = vset.pattern.permute.xlu0 6
        %2564 = vperm.xlu0 %2563, %v325
        %v2565 = vpop.permute.xlu0 %2564
        %2567 = vset.pattern.permute.xlu0 6
        %2568 = vperm.xlu0 %2567, %v326
        %v2569 = vpop.permute.xlu0 %2568
        %2571 = vset.pattern.permute.xlu0 6
        %2572 = vperm.xlu0 %2571, %v327
        %v2573 = vpop.permute.xlu0 %2572
        %2575 = vset.pattern.permute.xlu0 6
        %2576 = vperm.xlu0 %2575, %v328
        %v2577 = vpop.permute.xlu0 %2576
        %2579 = vset.pattern.permute.xlu0 6
        %2580 = vperm.xlu0 %2579, %v329
        %v2581 = vpop.permute.xlu0 %2580
        %2583 = vset.pattern.permute.xlu0 6
        %2584 = vperm.xlu0 %2583, %v330
        %v2585 = vpop.permute.xlu0 %2584
        %2587 = vset.pattern.permute.xlu0 6
        %2588 = vperm.xlu0 %2587, %v331
        %v2589 = vpop.permute.xlu0 %2588
        %2591 = vset.pattern.permute.xlu0 6
        %2592 = vperm.xlu0 %2591, %v332
        %v2593 = vpop.permute.xlu0 %2592
        %2595 = vset.pattern.permute.xlu0 6
        %2596 = vperm.xlu0 %2595, %v333
        %v2597 = vpop.permute.xlu0 %2596
        %2599 = vset.pattern.permute.xlu0 6
        %2600 = vperm.xlu0 %2599, %v334
        %v2601 = vpop.permute.xlu0 %2600
        %2603 = vset.pattern.permute.xlu0 6
        %2604 = vperm.xlu0 %2603, %v335
        %v2605 = vpop.permute.xlu0 %2604
        %2607 = vset.pattern.permute.xlu0 6
        %2608 = vperm.xlu0 %2607, %v336
        %v2609 = vpop.permute.xlu0 %2608
        %2611 = vset.pattern.permute.xlu0 6
        %2612 = vperm.xlu0 %2611, %v337
        %v2613 = vpop.permute.xlu0 %2612
        %2615 = vset.pattern.permute.xlu0 6
        %2616 = vperm.xlu0 %2615, %v338
        %v2617 = vpop.permute.xlu0 %2616
        %2619 = vset.pattern.permute.xlu0 6
        %2620 = vperm.xlu0 %2619, %v339
        %v2621 = vpop.permute.xlu0 %2620
        %v2623 = vlaneseq
        %v2624 = vshrl.u32 %v2623, 7
        %v2625 = vsub.s32 6, %v2624
        %v2626 = vrot.slane %v449, %v2625
        %v2627 = vlaneseq
        %v2628 = vshrl.u32 %v2627, 7
        %v2629 = vsub.s32 6, %v2628
        %v2630 = vrot.slane %v452, %v2629
        %v2631 = vlaneseq
        %v2632 = vshrl.u32 %v2631, 7
        %v2633 = vsub.s32 6, %v2632
        %v2634 = vrot.slane %v457, %v2633
        %v2635 = vlaneseq
        %v2636 = vshrl.u32 %v2635, 7
        %v2637 = vsub.s32 6, %v2636
        %v2638 = vrot.slane %v460, %v2637
        %v2639 = vlaneseq
        %v2640 = vshrl.u32 %v2639, 7
        %v2641 = vsub.s32 6, %v2640
        %v2642 = vrot.slane %v465, %v2641
        %v2643 = vlaneseq
        %v2644 = vshrl.u32 %v2643, 7
        %v2645 = vsub.s32 6, %v2644
        %v2646 = vrot.slane %v468, %v2645
        %v2647 = vlaneseq
        %v2648 = vshrl.u32 %v2647, 7
        %v2649 = vsub.s32 6, %v2648
        %v2650 = vrot.slane %v473, %v2649
        %v2651 = vlaneseq
        %v2652 = vshrl.u32 %v2651, 7
        %v2653 = vsub.s32 6, %v2652
        %v2654 = vrot.slane %v476, %v2653
        %v2655 = vlaneseq
        %v2656 = vshrl.u32 %v2655, 7
        %v2657 = vsub.s32 6, %v2656
        %v2658 = vrot.slane %v481, %v2657
        %v2659 = vlaneseq
        %v2660 = vshrl.u32 %v2659, 7
        %v2661 = vsub.s32 6, %v2660
        %v2662 = vrot.slane %v484, %v2661
        %v2663 = vlaneseq
        %v2664 = vshrl.u32 %v2663, 7
        %v2665 = vsub.s32 6, %v2664
        %v2666 = vrot.slane %v489, %v2665
        %v2667 = vlaneseq
        %v2668 = vshrl.u32 %v2667, 7
        %v2669 = vsub.s32 6, %v2668
        %v2670 = vrot.slane %v492, %v2669
        %v2671 = vlaneseq
        %v2672 = vshrl.u32 %v2671, 7
        %v2673 = vsub.s32 6, %v2672
        %v2674 = vrot.slane %v497, %v2673
        %v2675 = vlaneseq
        %v2676 = vshrl.u32 %v2675, 7
        %v2677 = vsub.s32 6, %v2676
        %v2678 = vrot.slane %v500, %v2677
        %v2679 = vlaneseq
        %v2680 = vshrl.u32 %v2679, 7
        %v2681 = vsub.s32 6, %v2680
        %v2682 = vrot.slane %v505, %v2681
        %v2683 = vlaneseq
        %v2684 = vshrl.u32 %v2683, 7
        %v2685 = vsub.s32 6, %v2684
        %v2686 = vrot.slane %v508, %v2685
        %v2687 = vlaneseq
        %v2688 = vshrl.u32 %v2687, 7
        %v2689 = vsub.s32 6, %v2688
        %v2690 = vrot.slane %v513, %v2689
        %v2691 = vlaneseq
        %v2692 = vshrl.u32 %v2691, 7
        %v2693 = vsub.s32 6, %v2692
        %v2694 = vrot.slane %v516, %v2693
        %v2695 = vlaneseq
        %v2696 = vshrl.u32 %v2695, 7
        %v2697 = vsub.s32 6, %v2696
        %v2698 = vrot.slane %v521, %v2697
        %v2699 = vlaneseq
        %v2700 = vshrl.u32 %v2699, 7
        %v2701 = vsub.s32 6, %v2700
        %v2702 = vrot.slane %v524, %v2701
        %v2703 = vlaneseq
        %v2704 = vshrl.u32 %v2703, 7
        %v2705 = vsub.s32 6, %v2704
        %v2706 = vrot.slane %v529, %v2705
        %v2707 = vlaneseq
        %v2708 = vshrl.u32 %v2707, 7
        %v2709 = vsub.s32 6, %v2708
        %v2710 = vrot.slane %v532, %v2709
        %v2711 = vlaneseq
        %v2712 = vshrl.u32 %v2711, 7
        %v2713 = vsub.s32 6, %v2712
        %v2714 = vrot.slane %v537, %v2713
        %v2715 = vlaneseq
        %v2716 = vshrl.u32 %v2715, 7
        %v2717 = vsub.s32 6, %v2716
        %v2718 = vrot.slane %v540, %v2717
        %v2719 = vlaneseq
        %v2720 = vshrl.u32 %v2719, 7
        %v2721 = vsub.s32 6, %v2720
        %v2722 = vrot.slane %v545, %v2721
        %v2723 = vlaneseq
        %v2724 = vshrl.u32 %v2723, 7
        %v2725 = vsub.s32 6, %v2724
        %v2726 = vrot.slane %v548, %v2725
        %v2727 = vlaneseq
        %v2728 = vshrl.u32 %v2727, 7
        %v2729 = vsub.s32 6, %v2728
        %v2730 = vrot.slane %v553, %v2729
        %v2731 = vlaneseq
        %v2732 = vshrl.u32 %v2731, 7
        %v2733 = vsub.s32 6, %v2732
        %v2734 = vrot.slane %v556, %v2733
        %v2735 = vlaneseq
        %v2736 = vshrl.u32 %v2735, 7
        %v2737 = vsub.s32 6, %v2736
        %v2738 = vrot.slane %v561, %v2737
        %v2739 = vlaneseq
        %v2740 = vshrl.u32 %v2739, 7
        %v2741 = vsub.s32 6, %v2740
        %v2742 = vrot.slane %v564, %v2741
        %v2743 = vlaneseq
        %v2744 = vshrl.u32 %v2743, 7
        %v2745 = vsub.s32 6, %v2744
        %v2746 = vrot.slane %v569, %v2745
        %v2747 = vlaneseq
        %v2748 = vshrl.u32 %v2747, 7
        %v2749 = vsub.s32 6, %v2748
        %v2750 = vrot.slane %v572, %v2749
        %v2751 = vmul.f32 %v2497, %v2626
        %v2752 = vmul.f32 %v2501, %v2630
        %v2753 = vmul.f32 %v2505, %v2634
        %v2754 = vmul.f32 %v2509, %v2638
        %v2755 = vmul.f32 %v2513, %v2642
        %v2756 = vmul.f32 %v2517, %v2646
        %v2757 = vmul.f32 %v2521, %v2650
        %v2758 = vmul.f32 %v2525, %v2654
        %v2759 = vmul.f32 %v2529, %v2658
        %v2760 = vmul.f32 %v2533, %v2662
        %v2761 = vmul.f32 %v2537, %v2666
        %v2762 = vmul.f32 %v2541, %v2670
        %v2763 = vmul.f32 %v2545, %v2674
        %v2764 = vmul.f32 %v2549, %v2678
        %v2765 = vmul.f32 %v2553, %v2682
        %v2766 = vmul.f32 %v2557, %v2686
        %v2767 = vmul.f32 %v2561, %v2690
        %v2768 = vmul.f32 %v2565, %v2694
        %v2769 = vmul.f32 %v2569, %v2698
        %v2770 = vmul.f32 %v2573, %v2702
        %v2771 = vmul.f32 %v2577, %v2706
        %v2772 = vmul.f32 %v2581, %v2710
        %v2773 = vmul.f32 %v2585, %v2714
        %v2774 = vmul.f32 %v2589, %v2718
        %v2775 = vmul.f32 %v2593, %v2722
        %v2776 = vmul.f32 %v2597, %v2726
        %v2777 = vmul.f32 %v2601, %v2730
        %v2778 = vmul.f32 %v2605, %v2734
        %v2779 = vmul.f32 %v2609, %v2738
        %v2780 = vmul.f32 %v2613, %v2742
        %v2781 = vmul.f32 %v2617, %v2746
        %v2782 = vmul.f32 %v2621, %v2750
        %v2783 = vadd.f32 %v2463, %v2751
        %v2784 = vadd.f32 %v2464, %v2752
        %v2785 = vadd.f32 %v2465, %v2753
        %v2786 = vadd.f32 %v2466, %v2754
        %v2787 = vadd.f32 %v2467, %v2755
        %v2788 = vadd.f32 %v2468, %v2756
        %v2789 = vadd.f32 %v2469, %v2757
        %v2790 = vadd.f32 %v2470, %v2758
        %v2791 = vadd.f32 %v2471, %v2759
        %v2792 = vadd.f32 %v2472, %v2760
        %v2793 = vadd.f32 %v2473, %v2761
        %v2794 = vadd.f32 %v2474, %v2762
        %v2795 = vadd.f32 %v2475, %v2763
        %v2796 = vadd.f32 %v2476, %v2764
        %v2797 = vadd.f32 %v2477, %v2765
        %v2798 = vadd.f32 %v2478, %v2766
        %v2799 = vadd.f32 %v2479, %v2767
        %v2800 = vadd.f32 %v2480, %v2768
        %v2801 = vadd.f32 %v2481, %v2769
        %v2802 = vadd.f32 %v2482, %v2770
        %v2803 = vadd.f32 %v2483, %v2771
        %v2804 = vadd.f32 %v2484, %v2772
        %v2805 = vadd.f32 %v2485, %v2773
        %v2806 = vadd.f32 %v2486, %v2774
        %v2807 = vadd.f32 %v2487, %v2775
        %v2808 = vadd.f32 %v2488, %v2776
        %v2809 = vadd.f32 %v2489, %v2777
        %v2810 = vadd.f32 %v2490, %v2778
        %v2811 = vadd.f32 %v2491, %v2779
        %v2812 = vadd.f32 %v2492, %v2780
        %v2813 = vadd.f32 %v2493, %v2781
        %v2814 = vadd.f32 %v2494, %v2782
        %2815 = vset.pattern.permute.xlu0 7
        %2816 = vperm.xlu0 %2815, %v308
        %v2817 = vpop.permute.xlu0 %2816
        %2819 = vset.pattern.permute.xlu0 7
        %2820 = vperm.xlu0 %2819, %v309
        %v2821 = vpop.permute.xlu0 %2820
        %2823 = vset.pattern.permute.xlu0 7
        %2824 = vperm.xlu0 %2823, %v310
        %v2825 = vpop.permute.xlu0 %2824
        %2827 = vset.pattern.permute.xlu0 7
        %2828 = vperm.xlu0 %2827, %v311
        %v2829 = vpop.permute.xlu0 %2828
        %2831 = vset.pattern.permute.xlu0 7
        %2832 = vperm.xlu0 %2831, %v312
        %v2833 = vpop.permute.xlu0 %2832
        %2835 = vset.pattern.permute.xlu0 7
        %2836 = vperm.xlu0 %2835, %v313
        %v2837 = vpop.permute.xlu0 %2836
        %2839 = vset.pattern.permute.xlu0 7
        %2840 = vperm.xlu0 %2839, %v314
        %v2841 = vpop.permute.xlu0 %2840
        %2843 = vset.pattern.permute.xlu0 7
        %2844 = vperm.xlu0 %2843, %v315
        %v2845 = vpop.permute.xlu0 %2844
        %2847 = vset.pattern.permute.xlu0 7
        %2848 = vperm.xlu0 %2847, %v316
        %v2849 = vpop.permute.xlu0 %2848
        %2851 = vset.pattern.permute.xlu0 7
        %2852 = vperm.xlu0 %2851, %v317
        %v2853 = vpop.permute.xlu0 %2852
        %2855 = vset.pattern.permute.xlu0 7
        %2856 = vperm.xlu0 %2855, %v318
        %v2857 = vpop.permute.xlu0 %2856
        %2859 = vset.pattern.permute.xlu0 7
        %2860 = vperm.xlu0 %2859, %v319
        %v2861 = vpop.permute.xlu0 %2860
        %2863 = vset.pattern.permute.xlu0 7
        %2864 = vperm.xlu0 %2863, %v320
        %v2865 = vpop.permute.xlu0 %2864
        %2867 = vset.pattern.permute.xlu0 7
        %2868 = vperm.xlu0 %2867, %v321
        %v2869 = vpop.permute.xlu0 %2868
        %2871 = vset.pattern.permute.xlu0 7
        %2872 = vperm.xlu0 %2871, %v322
        %v2873 = vpop.permute.xlu0 %2872
        %2875 = vset.pattern.permute.xlu0 7
        %2876 = vperm.xlu0 %2875, %v323
        %v2877 = vpop.permute.xlu0 %2876
        %2879 = vset.pattern.permute.xlu0 7
        %2880 = vperm.xlu0 %2879, %v324
        %v2881 = vpop.permute.xlu0 %2880
        %2883 = vset.pattern.permute.xlu0 7
        %2884 = vperm.xlu0 %2883, %v325
        %v2885 = vpop.permute.xlu0 %2884
        %2887 = vset.pattern.permute.xlu0 7
        %2888 = vperm.xlu0 %2887, %v326
        %v2889 = vpop.permute.xlu0 %2888
        %2891 = vset.pattern.permute.xlu0 7
        %2892 = vperm.xlu0 %2891, %v327
        %v2893 = vpop.permute.xlu0 %2892
        %2895 = vset.pattern.permute.xlu0 7
        %2896 = vperm.xlu0 %2895, %v328
        %v2897 = vpop.permute.xlu0 %2896
        %2899 = vset.pattern.permute.xlu0 7
        %2900 = vperm.xlu0 %2899, %v329
        %v2901 = vpop.permute.xlu0 %2900
        %2903 = vset.pattern.permute.xlu0 7
        %2904 = vperm.xlu0 %2903, %v330
        %v2905 = vpop.permute.xlu0 %2904
        %2907 = vset.pattern.permute.xlu0 7
        %2908 = vperm.xlu0 %2907, %v331
        %v2909 = vpop.permute.xlu0 %2908
        %2911 = vset.pattern.permute.xlu0 7
        %2912 = vperm.xlu0 %2911, %v332
        %v2913 = vpop.permute.xlu0 %2912
        %2915 = vset.pattern.permute.xlu0 7
        %2916 = vperm.xlu0 %2915, %v333
        %v2917 = vpop.permute.xlu0 %2916
        %2919 = vset.pattern.permute.xlu0 7
        %2920 = vperm.xlu0 %2919, %v334
        %v2921 = vpop.permute.xlu0 %2920
        %2923 = vset.pattern.permute.xlu0 7
        %2924 = vperm.xlu0 %2923, %v335
        %v2925 = vpop.permute.xlu0 %2924
        %2927 = vset.pattern.permute.xlu0 7
        %2928 = vperm.xlu0 %2927, %v336
        %v2929 = vpop.permute.xlu0 %2928
        %2931 = vset.pattern.permute.xlu0 7
        %2932 = vperm.xlu0 %2931, %v337
        %v2933 = vpop.permute.xlu0 %2932
        %2935 = vset.pattern.permute.xlu0 7
        %2936 = vperm.xlu0 %2935, %v338
        %v2937 = vpop.permute.xlu0 %2936
        %2939 = vset.pattern.permute.xlu0 7
        %2940 = vperm.xlu0 %2939, %v339
        %v2941 = vpop.permute.xlu0 %2940
        %v2943 = vlaneseq
        %v2944 = vshrl.u32 %v2943, 7
        %v2945 = vsub.s32 7, %v2944
        %v2946 = vrot.slane %v449, %v2945
        %v2947 = vlaneseq
        %v2948 = vshrl.u32 %v2947, 7
        %v2949 = vsub.s32 7, %v2948
        %v2950 = vrot.slane %v452, %v2949
        %v2951 = vlaneseq
        %v2952 = vshrl.u32 %v2951, 7
        %v2953 = vsub.s32 7, %v2952
        %v2954 = vrot.slane %v457, %v2953
        %v2955 = vlaneseq
        %v2956 = vshrl.u32 %v2955, 7
        %v2957 = vsub.s32 7, %v2956
        %v2958 = vrot.slane %v460, %v2957
        %v2959 = vlaneseq
        %v2960 = vshrl.u32 %v2959, 7
        %v2961 = vsub.s32 7, %v2960
        %v2962 = vrot.slane %v465, %v2961
        %v2963 = vlaneseq
        %v2964 = vshrl.u32 %v2963, 7
        %v2965 = vsub.s32 7, %v2964
        %v2966 = vrot.slane %v468, %v2965
        %v2967 = vlaneseq
        %v2968 = vshrl.u32 %v2967, 7
        %v2969 = vsub.s32 7, %v2968
        %v2970 = vrot.slane %v473, %v2969
        %v2971 = vlaneseq
        %v2972 = vshrl.u32 %v2971, 7
        %v2973 = vsub.s32 7, %v2972
        %v2974 = vrot.slane %v476, %v2973
        %v2975 = vlaneseq
        %v2976 = vshrl.u32 %v2975, 7
        %v2977 = vsub.s32 7, %v2976
        %v2978 = vrot.slane %v481, %v2977
        %v2979 = vlaneseq
        %v2980 = vshrl.u32 %v2979, 7
        %v2981 = vsub.s32 7, %v2980
        %v2982 = vrot.slane %v484, %v2981
        %v2983 = vlaneseq
        %v2984 = vshrl.u32 %v2983, 7
        %v2985 = vsub.s32 7, %v2984
        %v2986 = vrot.slane %v489, %v2985
        %v2987 = vlaneseq
        %v2988 = vshrl.u32 %v2987, 7
        %v2989 = vsub.s32 7, %v2988
        %v2990 = vrot.slane %v492, %v2989
        %v2991 = vlaneseq
        %v2992 = vshrl.u32 %v2991, 7
        %v2993 = vsub.s32 7, %v2992
        %v2994 = vrot.slane %v497, %v2993
        %v2995 = vlaneseq
        %v2996 = vshrl.u32 %v2995, 7
        %v2997 = vsub.s32 7, %v2996
        %v2998 = vrot.slane %v500, %v2997
        %v2999 = vlaneseq
        %v3000 = vshrl.u32 %v2999, 7
        %v3001 = vsub.s32 7, %v3000
        %v3002 = vrot.slane %v505, %v3001
        %v3003 = vlaneseq
        %v3004 = vshrl.u32 %v3003, 7
        %v3005 = vsub.s32 7, %v3004
        %v3006 = vrot.slane %v508, %v3005
        %v3007 = vlaneseq
        %v3008 = vshrl.u32 %v3007, 7
        %v3009 = vsub.s32 7, %v3008
        %v3010 = vrot.slane %v513, %v3009
        %v3011 = vlaneseq
        %v3012 = vshrl.u32 %v3011, 7
        %v3013 = vsub.s32 7, %v3012
        %v3014 = vrot.slane %v516, %v3013
        %v3015 = vlaneseq
        %v3016 = vshrl.u32 %v3015, 7
        %v3017 = vsub.s32 7, %v3016
        %v3018 = vrot.slane %v521, %v3017
        %v3019 = vlaneseq
        %v3020 = vshrl.u32 %v3019, 7
        %v3021 = vsub.s32 7, %v3020
        %v3022 = vrot.slane %v524, %v3021
        %v3023 = vlaneseq
        %v3024 = vshrl.u32 %v3023, 7
        %v3025 = vsub.s32 7, %v3024
        %v3026 = vrot.slane %v529, %v3025
        %v3027 = vlaneseq
        %v3028 = vshrl.u32 %v3027, 7
        %v3029 = vsub.s32 7, %v3028
        %v3030 = vrot.slane %v532, %v3029
        %v3031 = vlaneseq
        %v3032 = vshrl.u32 %v3031, 7
        %v3033 = vsub.s32 7, %v3032
        %v3034 = vrot.slane %v537, %v3033
        %v3035 = vlaneseq
        %v3036 = vshrl.u32 %v3035, 7
        %v3037 = vsub.s32 7, %v3036
        %v3038 = vrot.slane %v540, %v3037
        %v3039 = vlaneseq
        %v3040 = vshrl.u32 %v3039, 7
        %v3041 = vsub.s32 7, %v3040
        %v3042 = vrot.slane %v545, %v3041
        %v3043 = vlaneseq
        %v3044 = vshrl.u32 %v3043, 7
        %v3045 = vsub.s32 7, %v3044
        %v3046 = vrot.slane %v548, %v3045
        %v3047 = vlaneseq
        %v3048 = vshrl.u32 %v3047, 7
        %v3049 = vsub.s32 7, %v3048
        %v3050 = vrot.slane %v553, %v3049
        %v3051 = vlaneseq
        %v3052 = vshrl.u32 %v3051, 7
        %v3053 = vsub.s32 7, %v3052
        %v3054 = vrot.slane %v556, %v3053
        %v3055 = vlaneseq
        %v3056 = vshrl.u32 %v3055, 7
        %v3057 = vsub.s32 7, %v3056
        %v3058 = vrot.slane %v561, %v3057
        %v3059 = vlaneseq
        %v3060 = vshrl.u32 %v3059, 7
        %v3061 = vsub.s32 7, %v3060
        %v3062 = vrot.slane %v564, %v3061
        %v3063 = vlaneseq
        %v3064 = vshrl.u32 %v3063, 7
        %v3065 = vsub.s32 7, %v3064
        %v3066 = vrot.slane %v569, %v3065
        %v3067 = vlaneseq
        %v3068 = vshrl.u32 %v3067, 7
        %v3069 = vsub.s32 7, %v3068
        %v3070 = vrot.slane %v572, %v3069
        %v3071 = vmul.f32 %v2817, %v2946
        %v3072 = vmul.f32 %v2821, %v2950
        %v3073 = vmul.f32 %v2825, %v2954
        %v3074 = vmul.f32 %v2829, %v2958
        %v3075 = vmul.f32 %v2833, %v2962
        %v3076 = vmul.f32 %v2837, %v2966
        %v3077 = vmul.f32 %v2841, %v2970
        %v3078 = vmul.f32 %v2845, %v2974
        %v3079 = vmul.f32 %v2849, %v2978
        %v3080 = vmul.f32 %v2853, %v2982
        %v3081 = vmul.f32 %v2857, %v2986
        %v3082 = vmul.f32 %v2861, %v2990
        %v3083 = vmul.f32 %v2865, %v2994
        %v3084 = vmul.f32 %v2869, %v2998
        %v3085 = vmul.f32 %v2873, %v3002
        %v3086 = vmul.f32 %v2877, %v3006
        %v3087 = vmul.f32 %v2881, %v3010
        %v3088 = vmul.f32 %v2885, %v3014
        %v3089 = vmul.f32 %v2889, %v3018
        %v3090 = vmul.f32 %v2893, %v3022
        %v3091 = vmul.f32 %v2897, %v3026
        %v3092 = vmul.f32 %v2901, %v3030
        %v3093 = vmul.f32 %v2905, %v3034
        %v3094 = vmul.f32 %v2909, %v3038
        %v3095 = vmul.f32 %v2913, %v3042
        %v3096 = vmul.f32 %v2917, %v3046
        %v3097 = vmul.f32 %v2921, %v3050
        %v3098 = vmul.f32 %v2925, %v3054
        %v3099 = vmul.f32 %v2929, %v3058
        %v3100 = vmul.f32 %v2933, %v3062
        %v3101 = vmul.f32 %v2937, %v3066
        %v3102 = vmul.f32 %v2941, %v3070
        %v3103 = vadd.f32 %v2783, %v3071
        %v3104 = vadd.f32 %v2784, %v3072
        %v3105 = vadd.f32 %v2785, %v3073
        %v3106 = vadd.f32 %v2786, %v3074
        %v3107 = vadd.f32 %v2787, %v3075
        %v3108 = vadd.f32 %v2788, %v3076
        %v3109 = vadd.f32 %v2789, %v3077
        %v3110 = vadd.f32 %v2790, %v3078
        %v3111 = vadd.f32 %v2791, %v3079
        %v3112 = vadd.f32 %v2792, %v3080
        %v3113 = vadd.f32 %v2793, %v3081
        %v3114 = vadd.f32 %v2794, %v3082
        %v3115 = vadd.f32 %v2795, %v3083
        %v3116 = vadd.f32 %v2796, %v3084
        %v3117 = vadd.f32 %v2797, %v3085
        %v3118 = vadd.f32 %v2798, %v3086
        %v3119 = vadd.f32 %v2799, %v3087
        %v3120 = vadd.f32 %v2800, %v3088
        %v3121 = vadd.f32 %v2801, %v3089
        %v3122 = vadd.f32 %v2802, %v3090
        %v3123 = vadd.f32 %v2803, %v3091
        %v3124 = vadd.f32 %v2804, %v3092
        %v3125 = vadd.f32 %v2805, %v3093
        %v3126 = vadd.f32 %v2806, %v3094
        %v3127 = vadd.f32 %v2807, %v3095
        %v3128 = vadd.f32 %v2808, %v3096
        %v3129 = vadd.f32 %v2809, %v3097
        %v3130 = vadd.f32 %v2810, %v3098
        %v3131 = vadd.f32 %v2811, %v3099
        %v3132 = vadd.f32 %v2812, %v3100
        %v3133 = vadd.f32 %v2813, %v3101
        %v3134 = vadd.f32 %v2814, %v3102
        %v3135 = vmax.f32 %v3103, 0.0
        %v3136 = vmax.f32 %v3104, 0.0
        %v3137 = vmax.f32 %v3105, 0.0
        %v3138 = vmax.f32 %v3106, 0.0
        %v3139 = vmax.f32 %v3107, 0.0
        %v3140 = vmax.f32 %v3108, 0.0
        %v3141 = vmax.f32 %v3109, 0.0
        %v3142 = vmax.f32 %v3110, 0.0
        %v3143 = vmax.f32 %v3111, 0.0
        %v3144 = vmax.f32 %v3112, 0.0
        %v3145 = vmax.f32 %v3113, 0.0
        %v3146 = vmax.f32 %v3114, 0.0
        %v3147 = vmax.f32 %v3115, 0.0
        %v3148 = vmax.f32 %v3116, 0.0
        %v3149 = vmax.f32 %v3117, 0.0
        %v3150 = vmax.f32 %v3118, 0.0
        %v3151 = vmax.f32 %v3119, 0.0
        %v3152 = vmax.f32 %v3120, 0.0
        %v3153 = vmax.f32 %v3121, 0.0
        %v3154 = vmax.f32 %v3122, 0.0
        %v3155 = vmax.f32 %v3123, 0.0
        %v3156 = vmax.f32 %v3124, 0.0
        %v3157 = vmax.f32 %v3125, 0.0
        %v3158 = vmax.f32 %v3126, 0.0
        %v3159 = vmax.f32 %v3127, 0.0
        %v3160 = vmax.f32 %v3128, 0.0
        %v3161 = vmax.f32 %v3129, 0.0
        %v3162 = vmax.f32 %v3130, 0.0
        %v3163 = vmax.f32 %v3131, 0.0
        %v3164 = vmax.f32 %v3132, 0.0
        %v3165 = vmax.f32 %v3133, 0.0
        %v3166 = vmax.f32 %v3134, 0.0
        %v3167 = vpack.c.bf16 %v3136, %v3135
        %v3168 = vpack.c.bf16 %v3138, %v3137
        %v3169 = vpack.c.bf16 %v3140, %v3139
        %v3170 = vpack.c.bf16 %v3142, %v3141
        %v3171 = vpack.c.bf16 %v3144, %v3143
        %v3172 = vpack.c.bf16 %v3146, %v3145
        %v3173 = vpack.c.bf16 %v3148, %v3147
        %v3174 = vpack.c.bf16 %v3150, %v3149
        %v3175 = vpack.c.bf16 %v3152, %v3151
        %v3176 = vpack.c.bf16 %v3154, %v3153
        %v3177 = vpack.c.bf16 %v3156, %v3155
        %v3178 = vpack.c.bf16 %v3158, %v3157
        %v3179 = vpack.c.bf16 %v3160, %v3159
        %v3180 = vpack.c.bf16 %v3162, %v3161
        %v3181 = vpack.c.bf16 %v3164, %v3163
        %v3182 = vpack.c.bf16 %v3166, %v3165
        %vm3183 = vcmask 261120
        %v3185 = vsel %vm3183, %v3167, 0
        %v3188 = vsel %vm3183, %v3168, 0
        %v3191 = vsel %vm3183, %v3169, 0
        %v3194 = vsel %vm3183, %v3170, 0
        %v3197 = vsel %vm3183, %v3171, 0
        %v3200 = vsel %vm3183, %v3172, 0
        %v3203 = vsel %vm3183, %v3173, 0
        %v3206 = vsel %vm3183, %v3174, 0
        %v3209 = vsel %vm3183, %v3175, 0
        %v3212 = vsel %vm3183, %v3176, 0
        %v3215 = vsel %vm3183, %v3177, 0
        %v3218 = vsel %vm3183, %v3178, 0
        %v3221 = vsel %vm3183, %v3179, 0
        %v3224 = vsel %vm3183, %v3180, 0
        %v3227 = vsel %vm3183, %v3181, 0
        %v3230 = vsel %vm3183, %v3182, 0
        %3232 = vmatprep.subr.bf16.mxu0 0
        %3233 = vmatpush1.bf16.msra.mxu0 %v347
        %3234 = vmatprep.subr.bf16.mxu0 0
        %3235 = vmatpush1.bf16.msra.mxu0 %v348
        %3236 = vmatprep.subr.bf16.mxu0 0
        %3237 = vmatpush1.bf16.msra.mxu0 0
        %3238 = vmatprep.subr.bf16.mxu0 0
        %3239 = vmatpush1.bf16.msra.mxu0 0
        %3240 = vmatprep.subr.bf16.mxu0 0
        %3241 = vmatpush1.bf16.msra.mxu0 0
        %3242 = vmatprep.subr.bf16.mxu0 0
        %3243 = vmatpush1.bf16.msra.mxu0 0
        %3244 = vmatprep.subr.bf16.mxu0 0
        %3245 = vmatpush1.bf16.msra.mxu0 0
        %3246 = vmatprep.subr.bf16.mxu0 0
        %3247 = vmatpush1.bf16.msra.mxu0 0
        %3248 = vmatprep.subr.bf16.mxu0 0
        %3249 = vmatpush1.bf16.msra.mxu0 0
        %3250 = vmatprep.subr.bf16.mxu0 0
        %3251 = vmatpush1.bf16.msra.mxu0 0
        %3252 = vmatprep.subr.bf16.mxu0 0
        %3253 = vmatpush1.bf16.msra.mxu0 0
        %3254 = vmatprep.subr.bf16.mxu0 0
        %3255 = vmatpush1.bf16.msra.mxu0 0
        %3256 = vmatprep.subr.bf16.mxu0 0
        %3257 = vmatpush1.bf16.msra.mxu0 0
        %3258 = vmatprep.subr.bf16.mxu0 0
        %3259 = vmatpush1.bf16.msra.mxu0 0
        %3260 = vmatprep.subr.bf16.mxu0 0
        %3261 = vmatpush1.bf16.msra.mxu0 0
        %3262 = vmatprep.subr.bf16.mxu0 0
        %3263 = vmatpush1.bf16.msra.mxu0 0
        %3264 = vmatprep.mubr.bf16.mxu0 0
        %3265 = vmatmul.mubr.bf16.gmra.mrb[0].mxu0 %v3185
        %v3266 = vpop.f32.mrb[0].mxu0
        %v3267 = vadd.f32 0.0, %v3266
        %v3268 = vpop.f32.mrb[0].mxu0
        %v3269 = vpop.f32.mrb[0].mxu0
        %v3270 = vadd.f32 0.0, %v3269
        %v3271 = vpop.f32.mrb[0].mxu0
        %3272 = vmatprep.mubr.bf16.mxu0 0
        %3273 = vmatmul.mubr.bf16.gmra.mrb[0].mxu0 %v3188
        %v3274 = vpop.f32.mrb[0].mxu0
        %v3275 = vadd.f32 0.0, %v3274
        %v3276 = vpop.f32.mrb[0].mxu0
        %v3277 = vpop.f32.mrb[0].mxu0
        %v3278 = vadd.f32 0.0, %v3277
        %v3279 = vpop.f32.mrb[0].mxu0
        %3280 = vmatprep.mubr.bf16.mxu0 0
        %3281 = vmatmul.mubr.bf16.gmra.mrb[0].mxu0 %v3191
        %v3282 = vpop.f32.mrb[0].mxu0
        %v3283 = vadd.f32 0.0, %v3282
        %v3284 = vpop.f32.mrb[0].mxu0
        %v3285 = vpop.f32.mrb[0].mxu0
        %v3286 = vadd.f32 0.0, %v3285
        %v3287 = vpop.f32.mrb[0].mxu0
        %3288 = vmatprep.mubr.bf16.mxu0 0
        %3289 = vmatmul.mubr.bf16.gmra.mrb[0].mxu0 %v3194
        %v3290 = vpop.f32.mrb[0].mxu0
        %v3291 = vadd.f32 0.0, %v3290
        %v3292 = vpop.f32.mrb[0].mxu0
        %v3293 = vpop.f32.mrb[0].mxu0
        %v3294 = vadd.f32 0.0, %v3293
        %v3295 = vpop.f32.mrb[0].mxu0
        %3296 = vmatprep.mubr.bf16.mxu0 0
        %3297 = vmatmul.mubr.bf16.gmra.mrb[0].mxu0 %v3197
        %v3298 = vpop.f32.mrb[0].mxu0
        %v3299 = vadd.f32 0.0, %v3298
        %v3300 = vpop.f32.mrb[0].mxu0
        %v3301 = vpop.f32.mrb[0].mxu0
        %v3302 = vadd.f32 0.0, %v3301
        %v3303 = vpop.f32.mrb[0].mxu0
        %3304 = vmatprep.mubr.bf16.mxu0 0
        %3305 = vmatmul.mubr.bf16.gmra.mrb[0].mxu0 %v3200
        %v3306 = vpop.f32.mrb[0].mxu0
        %v3307 = vadd.f32 0.0, %v3306
        %v3308 = vpop.f32.mrb[0].mxu0
        %v3309 = vpop.f32.mrb[0].mxu0
        %v3310 = vadd.f32 0.0, %v3309
        %v3311 = vpop.f32.mrb[0].mxu0
        %3312 = vmatprep.mubr.bf16.mxu0 0
        %3313 = vmatmul.mubr.bf16.gmra.mrb[0].mxu0 %v3203
        %v3314 = vpop.f32.mrb[0].mxu0
        %v3315 = vadd.f32 0.0, %v3314
        %v3316 = vpop.f32.mrb[0].mxu0
        %v3317 = vpop.f32.mrb[0].mxu0
        %v3318 = vadd.f32 0.0, %v3317
        %v3319 = vpop.f32.mrb[0].mxu0
        %3320 = vmatprep.mubr.bf16.mxu0 0
        %3321 = vmatmul.mubr.bf16.gmra.mrb[0].mxu0 %v3206
        %v3322 = vpop.f32.mrb[0].mxu0
        %v3323 = vadd.f32 0.0, %v3322
        %v3324 = vpop.f32.mrb[0].mxu0
        %v3325 = vpop.f32.mrb[0].mxu0
        %v3326 = vadd.f32 0.0, %v3325
        %v3327 = vpop.f32.mrb[0].mxu0
        %3328 = vmatprep.mubr.bf16.mxu0 0
        %3329 = vmatmul.mubr.bf16.gmra.mrb[0].mxu0 %v3209
        %v3330 = vpop.f32.mrb[0].mxu0
        %v3331 = vadd.f32 0.0, %v3330
        %v3332 = vpop.f32.mrb[0].mxu0
        %v3333 = vpop.f32.mrb[0].mxu0
        %v3334 = vadd.f32 0.0, %v3333
        %v3335 = vpop.f32.mrb[0].mxu0
        %3336 = vmatprep.mubr.bf16.mxu0 0
        %3337 = vmatmul.mubr.bf16.gmra.mrb[0].mxu0 %v3212
        %v3338 = vpop.f32.mrb[0].mxu0
        %v3339 = vadd.f32 0.0, %v3338
        %v3340 = vpop.f32.mrb[0].mxu0
        %v3341 = vpop.f32.mrb[0].mxu0
        %v3342 = vadd.f32 0.0, %v3341
        %v3343 = vpop.f32.mrb[0].mxu0
        %3344 = vmatprep.mubr.bf16.mxu0 0
        %3345 = vmatmul.mubr.bf16.gmra.mrb[0].mxu0 %v3215
        %v3346 = vpop.f32.mrb[0].mxu0
        %v3347 = vadd.f32 0.0, %v3346
        %v3348 = vpop.f32.mrb[0].mxu0
        %v3349 = vpop.f32.mrb[0].mxu0
        %v3350 = vadd.f32 0.0, %v3349
        %v3351 = vpop.f32.mrb[0].mxu0
        %3352 = vmatprep.mubr.bf16.mxu0 0
        %3353 = vmatmul.mubr.bf16.gmra.mrb[0].mxu0 %v3218
        %v3354 = vpop.f32.mrb[0].mxu0
        %v3355 = vadd.f32 0.0, %v3354
        %v3356 = vpop.f32.mrb[0].mxu0
        %v3357 = vpop.f32.mrb[0].mxu0
        %v3358 = vadd.f32 0.0, %v3357
        %v3359 = vpop.f32.mrb[0].mxu0
        %3360 = vmatprep.mubr.bf16.mxu0 0
        %3361 = vmatmul.mubr.bf16.gmra.mrb[0].mxu0 %v3221
        %v3362 = vpop.f32.mrb[0].mxu0
        %v3363 = vadd.f32 0.0, %v3362
        %v3364 = vpop.f32.mrb[0].mxu0
        %v3365 = vpop.f32.mrb[0].mxu0
        %v3366 = vadd.f32 0.0, %v3365
        %v3367 = vpop.f32.mrb[0].mxu0
        %3368 = vmatprep.mubr.bf16.mxu0 0
        %3369 = vmatmul.mubr.bf16.gmra.mrb[0].mxu0 %v3224
        %v3370 = vpop.f32.mrb[0].mxu0
        %v3371 = vadd.f32 0.0, %v3370
        %v3372 = vpop.f32.mrb[0].mxu0
        %v3373 = vpop.f32.mrb[0].mxu0
        %v3374 = vadd.f32 0.0, %v3373
        %v3375 = vpop.f32.mrb[0].mxu0
        %3376 = vmatprep.mubr.bf16.mxu0 0
        %3377 = vmatmul.mubr.bf16.gmra.mrb[0].mxu0 %v3227
        %v3378 = vpop.f32.mrb[0].mxu0
        %v3379 = vadd.f32 0.0, %v3378
        %v3380 = vpop.f32.mrb[0].mxu0
        %v3381 = vpop.f32.mrb[0].mxu0
        %v3382 = vadd.f32 0.0, %v3381
        %v3383 = vpop.f32.mrb[0].mxu0
        %3384 = vmatprep.mubr.bf16.mxu0 0
        %3385 = vmatmul.mubr.bf16.gmra.mrb[0].mxu0 %v3230
        %v3386 = vpop.f32.mrb[0].mxu0
        %v3387 = vadd.f32 0.0, %v3386
        %v3388 = vpop.f32.mrb[0].mxu0
        %v3389 = vpop.f32.mrb[0].mxu0
        %v3390 = vadd.f32 0.0, %v3389
        %v3391 = vpop.f32.mrb[0].mxu0
        %3392 = vdwg.mxu0
        %v3393 = vlaneseq
        %v3394 = vshrl.u32 %v3393, 7
        %v3395 = vsub.s32 0, %v3394
        %v3396 = vrot.slane %v3267, %v3395
        %v3397 = vlaneseq
        %v3398 = vshrl.u32 %v3397, 7
        %v3399 = vsub.s32 0, %v3398
        %v3400 = vrot.slane %v3270, %v3399
        %v3401 = vlaneseq
        %v3402 = vshrl.u32 %v3401, 7
        %v3403 = vsub.s32 0, %v3402
        %v3404 = vrot.slane %v3275, %v3403
        %v3405 = vlaneseq
        %v3406 = vshrl.u32 %v3405, 7
        %v3407 = vsub.s32 0, %v3406
        %v3408 = vrot.slane %v3278, %v3407
        %v3409 = vlaneseq
        %v3410 = vshrl.u32 %v3409, 7
        %v3411 = vsub.s32 0, %v3410
        %v3412 = vrot.slane %v3283, %v3411
        %v3413 = vlaneseq
        %v3414 = vshrl.u32 %v3413, 7
        %v3415 = vsub.s32 0, %v3414
        %v3416 = vrot.slane %v3286, %v3415
        %v3417 = vlaneseq
        %v3418 = vshrl.u32 %v3417, 7
        %v3419 = vsub.s32 0, %v3418
        %v3420 = vrot.slane %v3291, %v3419
        %v3421 = vlaneseq
        %v3422 = vshrl.u32 %v3421, 7
        %v3423 = vsub.s32 0, %v3422
        %v3424 = vrot.slane %v3294, %v3423
        %v3425 = vlaneseq
        %v3426 = vshrl.u32 %v3425, 7
        %v3427 = vsub.s32 0, %v3426
        %v3428 = vrot.slane %v3299, %v3427
        %v3429 = vlaneseq
        %v3430 = vshrl.u32 %v3429, 7
        %v3431 = vsub.s32 0, %v3430
        %v3432 = vrot.slane %v3302, %v3431
        %v3433 = vlaneseq
        %v3434 = vshrl.u32 %v3433, 7
        %v3435 = vsub.s32 0, %v3434
        %v3436 = vrot.slane %v3307, %v3435
        %v3437 = vlaneseq
        %v3438 = vshrl.u32 %v3437, 7
        %v3439 = vsub.s32 0, %v3438
        %v3440 = vrot.slane %v3310, %v3439
        %v3441 = vlaneseq
        %v3442 = vshrl.u32 %v3441, 7
        %v3443 = vsub.s32 0, %v3442
        %v3444 = vrot.slane %v3315, %v3443
        %v3445 = vlaneseq
        %v3446 = vshrl.u32 %v3445, 7
        %v3447 = vsub.s32 0, %v3446
        %v3448 = vrot.slane %v3318, %v3447
        %v3449 = vlaneseq
        %v3450 = vshrl.u32 %v3449, 7
        %v3451 = vsub.s32 0, %v3450
        %v3452 = vrot.slane %v3323, %v3451
        %v3453 = vlaneseq
        %v3454 = vshrl.u32 %v3453, 7
        %v3455 = vsub.s32 0, %v3454
        %v3456 = vrot.slane %v3326, %v3455
        %v3457 = vlaneseq
        %v3458 = vshrl.u32 %v3457, 7
        %v3459 = vsub.s32 0, %v3458
        %v3460 = vrot.slane %v3331, %v3459
        %v3461 = vlaneseq
        %v3462 = vshrl.u32 %v3461, 7
        %v3463 = vsub.s32 0, %v3462
        %v3464 = vrot.slane %v3334, %v3463
        %v3465 = vlaneseq
        %v3466 = vshrl.u32 %v3465, 7
        %v3467 = vsub.s32 0, %v3466
        %v3468 = vrot.slane %v3339, %v3467
        %v3469 = vlaneseq
        %v3470 = vshrl.u32 %v3469, 7
        %v3471 = vsub.s32 0, %v3470
        %v3472 = vrot.slane %v3342, %v3471
        %v3473 = vlaneseq
        %v3474 = vshrl.u32 %v3473, 7
        %v3475 = vsub.s32 0, %v3474
        %v3476 = vrot.slane %v3347, %v3475
        %v3477 = vlaneseq
        %v3478 = vshrl.u32 %v3477, 7
        %v3479 = vsub.s32 0, %v3478
        %v3480 = vrot.slane %v3350, %v3479
        %v3481 = vlaneseq
        %v3482 = vshrl.u32 %v3481, 7
        %v3483 = vsub.s32 0, %v3482
        %v3484 = vrot.slane %v3355, %v3483
        %v3485 = vlaneseq
        %v3486 = vshrl.u32 %v3485, 7
        %v3487 = vsub.s32 0, %v3486
        %v3488 = vrot.slane %v3358, %v3487
        %v3489 = vlaneseq
        %v3490 = vshrl.u32 %v3489, 7
        %v3491 = vsub.s32 0, %v3490
        %v3492 = vrot.slane %v3363, %v3491
        %v3493 = vlaneseq
        %v3494 = vshrl.u32 %v3493, 7
        %v3495 = vsub.s32 0, %v3494
        %v3496 = vrot.slane %v3366, %v3495
        %v3497 = vlaneseq
        %v3498 = vshrl.u32 %v3497, 7
        %v3499 = vsub.s32 0, %v3498
        %v3500 = vrot.slane %v3371, %v3499
        %v3501 = vlaneseq
        %v3502 = vshrl.u32 %v3501, 7
        %v3503 = vsub.s32 0, %v3502
        %v3504 = vrot.slane %v3374, %v3503
        %v3505 = vlaneseq
        %v3506 = vshrl.u32 %v3505, 7
        %v3507 = vsub.s32 0, %v3506
        %v3508 = vrot.slane %v3379, %v3507
        %v3509 = vlaneseq
        %v3510 = vshrl.u32 %v3509, 7
        %v3511 = vsub.s32 0, %v3510
        %v3512 = vrot.slane %v3382, %v3511
        %v3513 = vlaneseq
        %v3514 = vshrl.u32 %v3513, 7
        %v3515 = vsub.s32 0, %v3514
        %v3516 = vrot.slane %v3387, %v3515
        %v3517 = vlaneseq
        %v3518 = vshrl.u32 %v3517, 7
        %v3519 = vsub.s32 0, %v3518
        %v3520 = vrot.slane %v3390, %v3519
        %v3521 = vmul.f32 %v578, %v3396
        %v3522 = vmul.f32 %v583, %v3400
        %v3523 = vmul.f32 %v588, %v3404
        %v3524 = vmul.f32 %v593, %v3408
        %v3525 = vmul.f32 %v598, %v3412
        %v3526 = vmul.f32 %v603, %v3416
        %v3527 = vmul.f32 %v608, %v3420
        %v3528 = vmul.f32 %v613, %v3424
        %v3529 = vmul.f32 %v618, %v3428
        %v3530 = vmul.f32 %v623, %v3432
        %v3531 = vmul.f32 %v628, %v3436
        %v3532 = vmul.f32 %v633, %v3440
        %v3533 = vmul.f32 %v638, %v3444
        %v3534 = vmul.f32 %v643, %v3448
        %v3535 = vmul.f32 %v648, %v3452
        %v3536 = vmul.f32 %v653, %v3456
        %v3537 = vmul.f32 %v658, %v3460
        %v3538 = vmul.f32 %v663, %v3464
        %v3539 = vmul.f32 %v668, %v3468
        %v3540 = vmul.f32 %v673, %v3472
        %v3541 = vmul.f32 %v678, %v3476
        %v3542 = vmul.f32 %v683, %v3480
        %v3543 = vmul.f32 %v688, %v3484
        %v3544 = vmul.f32 %v693, %v3488
        %v3545 = vmul.f32 %v698, %v3492
        %v3546 = vmul.f32 %v703, %v3496
        %v3547 = vmul.f32 %v708, %v3500
        %v3548 = vmul.f32 %v713, %v3504
        %v3549 = vmul.f32 %v718, %v3508
        %v3550 = vmul.f32 %v723, %v3512
        %v3551 = vmul.f32 %v728, %v3516
        %v3552 = vmul.f32 %v733, %v3520
        %v3553 = vlaneseq
        %v3554 = vshrl.u32 %v3553, 7
        %v3555 = vsub.s32 1, %v3554
        %v3556 = vrot.slane %v3267, %v3555
        %v3557 = vlaneseq
        %v3558 = vshrl.u32 %v3557, 7
        %v3559 = vsub.s32 1, %v3558
        %v3560 = vrot.slane %v3270, %v3559
        %v3561 = vlaneseq
        %v3562 = vshrl.u32 %v3561, 7
        %v3563 = vsub.s32 1, %v3562
        %v3564 = vrot.slane %v3275, %v3563
        %v3565 = vlaneseq
        %v3566 = vshrl.u32 %v3565, 7
        %v3567 = vsub.s32 1, %v3566
        %v3568 = vrot.slane %v3278, %v3567
        %v3569 = vlaneseq
        %v3570 = vshrl.u32 %v3569, 7
        %v3571 = vsub.s32 1, %v3570
        %v3572 = vrot.slane %v3283, %v3571
        %v3573 = vlaneseq
        %v3574 = vshrl.u32 %v3573, 7
        %v3575 = vsub.s32 1, %v3574
        %v3576 = vrot.slane %v3286, %v3575
        %v3577 = vlaneseq
        %v3578 = vshrl.u32 %v3577, 7
        %v3579 = vsub.s32 1, %v3578
        %v3580 = vrot.slane %v3291, %v3579
        %v3581 = vlaneseq
        %v3582 = vshrl.u32 %v3581, 7
        %v3583 = vsub.s32 1, %v3582
        %v3584 = vrot.slane %v3294, %v3583
        %v3585 = vlaneseq
        %v3586 = vshrl.u32 %v3585, 7
        %v3587 = vsub.s32 1, %v3586
        %v3588 = vrot.slane %v3299, %v3587
        %v3589 = vlaneseq
        %v3590 = vshrl.u32 %v3589, 7
        %v3591 = vsub.s32 1, %v3590
        %v3592 = vrot.slane %v3302, %v3591
        %v3593 = vlaneseq
        %v3594 = vshrl.u32 %v3593, 7
        %v3595 = vsub.s32 1, %v3594
        %v3596 = vrot.slane %v3307, %v3595
        %v3597 = vlaneseq
        %v3598 = vshrl.u32 %v3597, 7
        %v3599 = vsub.s32 1, %v3598
        %v3600 = vrot.slane %v3310, %v3599
        %v3601 = vlaneseq
        %v3602 = vshrl.u32 %v3601, 7
        %v3603 = vsub.s32 1, %v3602
        %v3604 = vrot.slane %v3315, %v3603
        %v3605 = vlaneseq
        %v3606 = vshrl.u32 %v3605, 7
        %v3607 = vsub.s32 1, %v3606
        %v3608 = vrot.slane %v3318, %v3607
        %v3609 = vlaneseq
        %v3610 = vshrl.u32 %v3609, 7
        %v3611 = vsub.s32 1, %v3610
        %v3612 = vrot.slane %v3323, %v3611
        %v3613 = vlaneseq
        %v3614 = vshrl.u32 %v3613, 7
        %v3615 = vsub.s32 1, %v3614
        %v3616 = vrot.slane %v3326, %v3615
        %v3617 = vlaneseq
        %v3618 = vshrl.u32 %v3617, 7
        %v3619 = vsub.s32 1, %v3618
        %v3620 = vrot.slane %v3331, %v3619
        %v3621 = vlaneseq
        %v3622 = vshrl.u32 %v3621, 7
        %v3623 = vsub.s32 1, %v3622
        %v3624 = vrot.slane %v3334, %v3623
        %v3625 = vlaneseq
        %v3626 = vshrl.u32 %v3625, 7
        %v3627 = vsub.s32 1, %v3626
        %v3628 = vrot.slane %v3339, %v3627
        %v3629 = vlaneseq
        %v3630 = vshrl.u32 %v3629, 7
        %v3631 = vsub.s32 1, %v3630
        %v3632 = vrot.slane %v3342, %v3631
        %v3633 = vlaneseq
        %v3634 = vshrl.u32 %v3633, 7
        %v3635 = vsub.s32 1, %v3634
        %v3636 = vrot.slane %v3347, %v3635
        %v3637 = vlaneseq
        %v3638 = vshrl.u32 %v3637, 7
        %v3639 = vsub.s32 1, %v3638
        %v3640 = vrot.slane %v3350, %v3639
        %v3641 = vlaneseq
        %v3642 = vshrl.u32 %v3641, 7
        %v3643 = vsub.s32 1, %v3642
        %v3644 = vrot.slane %v3355, %v3643
        %v3645 = vlaneseq
        %v3646 = vshrl.u32 %v3645, 7
        %v3647 = vsub.s32 1, %v3646
        %v3648 = vrot.slane %v3358, %v3647
        %v3649 = vlaneseq
        %v3650 = vshrl.u32 %v3649, 7
        %v3651 = vsub.s32 1, %v3650
        %v3652 = vrot.slane %v3363, %v3651
        %v3653 = vlaneseq
        %v3654 = vshrl.u32 %v3653, 7
        %v3655 = vsub.s32 1, %v3654
        %v3656 = vrot.slane %v3366, %v3655
        %v3657 = vlaneseq
        %v3658 = vshrl.u32 %v3657, 7
        %v3659 = vsub.s32 1, %v3658
        %v3660 = vrot.slane %v3371, %v3659
        %v3661 = vlaneseq
        %v3662 = vshrl.u32 %v3661, 7
        %v3663 = vsub.s32 1, %v3662
        %v3664 = vrot.slane %v3374, %v3663
        %v3665 = vlaneseq
        %v3666 = vshrl.u32 %v3665, 7
        %v3667 = vsub.s32 1, %v3666
        %v3668 = vrot.slane %v3379, %v3667
        %v3669 = vlaneseq
        %v3670 = vshrl.u32 %v3669, 7
        %v3671 = vsub.s32 1, %v3670
        %v3672 = vrot.slane %v3382, %v3671
        %v3673 = vlaneseq
        %v3674 = vshrl.u32 %v3673, 7
        %v3675 = vsub.s32 1, %v3674
        %v3676 = vrot.slane %v3387, %v3675
        %v3677 = vlaneseq
        %v3678 = vshrl.u32 %v3677, 7
        %v3679 = vsub.s32 1, %v3678
        %v3680 = vrot.slane %v3390, %v3679
        %v3681 = vmul.f32 %v897, %v3556
        %v3682 = vmul.f32 %v901, %v3560
        %v3683 = vmul.f32 %v905, %v3564
        %v3684 = vmul.f32 %v909, %v3568
        %v3685 = vmul.f32 %v913, %v3572
        %v3686 = vmul.f32 %v917, %v3576
        %v3687 = vmul.f32 %v921, %v3580
        %v3688 = vmul.f32 %v925, %v3584
        %v3689 = vmul.f32 %v929, %v3588
        %v3690 = vmul.f32 %v933, %v3592
        %v3691 = vmul.f32 %v937, %v3596
        %v3692 = vmul.f32 %v941, %v3600
        %v3693 = vmul.f32 %v945, %v3604
        %v3694 = vmul.f32 %v949, %v3608
        %v3695 = vmul.f32 %v953, %v3612
        %v3696 = vmul.f32 %v957, %v3616
        %v3697 = vmul.f32 %v961, %v3620
        %v3698 = vmul.f32 %v965, %v3624
        %v3699 = vmul.f32 %v969, %v3628
        %v3700 = vmul.f32 %v973, %v3632
        %v3701 = vmul.f32 %v977, %v3636
        %v3702 = vmul.f32 %v981, %v3640
        %v3703 = vmul.f32 %v985, %v3644
        %v3704 = vmul.f32 %v989, %v3648
        %v3705 = vmul.f32 %v993, %v3652
        %v3706 = vmul.f32 %v997, %v3656
        %v3707 = vmul.f32 %v1001, %v3660
        %v3708 = vmul.f32 %v1005, %v3664
        %v3709 = vmul.f32 %v1009, %v3668
        %v3710 = vmul.f32 %v1013, %v3672
        %v3711 = vmul.f32 %v1017, %v3676
        %v3712 = vmul.f32 %v1021, %v3680
        %v3713 = vadd.f32 %v3521, %v3681
        %v3714 = vadd.f32 %v3522, %v3682
        %v3715 = vadd.f32 %v3523, %v3683
        %v3716 = vadd.f32 %v3524, %v3684
        %v3717 = vadd.f32 %v3525, %v3685
        %v3718 = vadd.f32 %v3526, %v3686
        %v3719 = vadd.f32 %v3527, %v3687
        %v3720 = vadd.f32 %v3528, %v3688
        %v3721 = vadd.f32 %v3529, %v3689
        %v3722 = vadd.f32 %v3530, %v3690
        %v3723 = vadd.f32 %v3531, %v3691
        %v3724 = vadd.f32 %v3532, %v3692
        %v3725 = vadd.f32 %v3533, %v3693
        %v3726 = vadd.f32 %v3534, %v3694
        %v3727 = vadd.f32 %v3535, %v3695
        %v3728 = vadd.f32 %v3536, %v3696
        %v3729 = vadd.f32 %v3537, %v3697
        %v3730 = vadd.f32 %v3538, %v3698
        %v3731 = vadd.f32 %v3539, %v3699
        %v3732 = vadd.f32 %v3540, %v3700
        %v3733 = vadd.f32 %v3541, %v3701
        %v3734 = vadd.f32 %v3542, %v3702
        %v3735 = vadd.f32 %v3543, %v3703
        %v3736 = vadd.f32 %v3544, %v3704
        %v3737 = vadd.f32 %v3545, %v3705
        %v3738 = vadd.f32 %v3546, %v3706
        %v3739 = vadd.f32 %v3547, %v3707
        %v3740 = vadd.f32 %v3548, %v3708
        %v3741 = vadd.f32 %v3549, %v3709
        %v3742 = vadd.f32 %v3550, %v3710
        %v3743 = vadd.f32 %v3551, %v3711
        %v3744 = vadd.f32 %v3552, %v3712
        %v3745 = vlaneseq
        %v3746 = vshrl.u32 %v3745, 7
        %v3747 = vsub.s32 2, %v3746
        %v3748 = vrot.slane %v3267, %v3747
        %v3749 = vlaneseq
        %v3750 = vshrl.u32 %v3749, 7
        %v3751 = vsub.s32 2, %v3750
        %v3752 = vrot.slane %v3270, %v3751
        %v3753 = vlaneseq
        %v3754 = vshrl.u32 %v3753, 7
        %v3755 = vsub.s32 2, %v3754
        %v3756 = vrot.slane %v3275, %v3755
        %v3757 = vlaneseq
        %v3758 = vshrl.u32 %v3757, 7
        %v3759 = vsub.s32 2, %v3758
        %v3760 = vrot.slane %v3278, %v3759
        %v3761 = vlaneseq
        %v3762 = vshrl.u32 %v3761, 7
        %v3763 = vsub.s32 2, %v3762
        %v3764 = vrot.slane %v3283, %v3763
        %v3765 = vlaneseq
        %v3766 = vshrl.u32 %v3765, 7
        %v3767 = vsub.s32 2, %v3766
        %v3768 = vrot.slane %v3286, %v3767
        %v3769 = vlaneseq
        %v3770 = vshrl.u32 %v3769, 7
        %v3771 = vsub.s32 2, %v3770
        %v3772 = vrot.slane %v3291, %v3771
        %v3773 = vlaneseq
        %v3774 = vshrl.u32 %v3773, 7
        %v3775 = vsub.s32 2, %v3774
        %v3776 = vrot.slane %v3294, %v3775
        %v3777 = vlaneseq
        %v3778 = vshrl.u32 %v3777, 7
        %v3779 = vsub.s32 2, %v3778
        %v3780 = vrot.slane %v3299, %v3779
        %v3781 = vlaneseq
        %v3782 = vshrl.u32 %v3781, 7
        %v3783 = vsub.s32 2, %v3782
        %v3784 = vrot.slane %v3302, %v3783
        %v3785 = vlaneseq
        %v3786 = vshrl.u32 %v3785, 7
        %v3787 = vsub.s32 2, %v3786
        %v3788 = vrot.slane %v3307, %v3787
        %v3789 = vlaneseq
        %v3790 = vshrl.u32 %v3789, 7
        %v3791 = vsub.s32 2, %v3790
        %v3792 = vrot.slane %v3310, %v3791
        %v3793 = vlaneseq
        %v3794 = vshrl.u32 %v3793, 7
        %v3795 = vsub.s32 2, %v3794
        %v3796 = vrot.slane %v3315, %v3795
        %v3797 = vlaneseq
        %v3798 = vshrl.u32 %v3797, 7
        %v3799 = vsub.s32 2, %v3798
        %v3800 = vrot.slane %v3318, %v3799
        %v3801 = vlaneseq
        %v3802 = vshrl.u32 %v3801, 7
        %v3803 = vsub.s32 2, %v3802
        %v3804 = vrot.slane %v3323, %v3803
        %v3805 = vlaneseq
        %v3806 = vshrl.u32 %v3805, 7
        %v3807 = vsub.s32 2, %v3806
        %v3808 = vrot.slane %v3326, %v3807
        %v3809 = vlaneseq
        %v3810 = vshrl.u32 %v3809, 7
        %v3811 = vsub.s32 2, %v3810
        %v3812 = vrot.slane %v3331, %v3811
        %v3813 = vlaneseq
        %v3814 = vshrl.u32 %v3813, 7
        %v3815 = vsub.s32 2, %v3814
        %v3816 = vrot.slane %v3334, %v3815
        %v3817 = vlaneseq
        %v3818 = vshrl.u32 %v3817, 7
        %v3819 = vsub.s32 2, %v3818
        %v3820 = vrot.slane %v3339, %v3819
        %v3821 = vlaneseq
        %v3822 = vshrl.u32 %v3821, 7
        %v3823 = vsub.s32 2, %v3822
        %v3824 = vrot.slane %v3342, %v3823
        %v3825 = vlaneseq
        %v3826 = vshrl.u32 %v3825, 7
        %v3827 = vsub.s32 2, %v3826
        %v3828 = vrot.slane %v3347, %v3827
        %v3829 = vlaneseq
        %v3830 = vshrl.u32 %v3829, 7
        %v3831 = vsub.s32 2, %v3830
        %v3832 = vrot.slane %v3350, %v3831
        %v3833 = vlaneseq
        %v3834 = vshrl.u32 %v3833, 7
        %v3835 = vsub.s32 2, %v3834
        %v3836 = vrot.slane %v3355, %v3835
        %v3837 = vlaneseq
        %v3838 = vshrl.u32 %v3837, 7
        %v3839 = vsub.s32 2, %v3838
        %v3840 = vrot.slane %v3358, %v3839
        %v3841 = vlaneseq
        %v3842 = vshrl.u32 %v3841, 7
        %v3843 = vsub.s32 2, %v3842
        %v3844 = vrot.slane %v3363, %v3843
        %v3845 = vlaneseq
        %v3846 = vshrl.u32 %v3845, 7
        %v3847 = vsub.s32 2, %v3846
        %v3848 = vrot.slane %v3366, %v3847
        %v3849 = vlaneseq
        %v3850 = vshrl.u32 %v3849, 7
        %v3851 = vsub.s32 2, %v3850
        %v3852 = vrot.slane %v3371, %v3851
        %v3853 = vlaneseq
        %v3854 = vshrl.u32 %v3853, 7
        %v3855 = vsub.s32 2, %v3854
        %v3856 = vrot.slane %v3374, %v3855
        %v3857 = vlaneseq
        %v3858 = vshrl.u32 %v3857, 7
        %v3859 = vsub.s32 2, %v3858
        %v3860 = vrot.slane %v3379, %v3859
        %v3861 = vlaneseq
        %v3862 = vshrl.u32 %v3861, 7
        %v3863 = vsub.s32 2, %v3862
        %v3864 = vrot.slane %v3382, %v3863
        %v3865 = vlaneseq
        %v3866 = vshrl.u32 %v3865, 7
        %v3867 = vsub.s32 2, %v3866
        %v3868 = vrot.slane %v3387, %v3867
        %v3869 = vlaneseq
        %v3870 = vshrl.u32 %v3869, 7
        %v3871 = vsub.s32 2, %v3870
        %v3872 = vrot.slane %v3390, %v3871
        %v3873 = vmul.f32 %v1217, %v3748
        %v3874 = vmul.f32 %v1221, %v3752
        %v3875 = vmul.f32 %v1225, %v3756
        %v3876 = vmul.f32 %v1229, %v3760
        %v3877 = vmul.f32 %v1233, %v3764
        %v3878 = vmul.f32 %v1237, %v3768
        %v3879 = vmul.f32 %v1241, %v3772
        %v3880 = vmul.f32 %v1245, %v3776
        %v3881 = vmul.f32 %v1249, %v3780
        %v3882 = vmul.f32 %v1253, %v3784
        %v3883 = vmul.f32 %v1257, %v3788
        %v3884 = vmul.f32 %v1261, %v3792
        %v3885 = vmul.f32 %v1265, %v3796
        %v3886 = vmul.f32 %v1269, %v3800
        %v3887 = vmul.f32 %v1273, %v3804
        %v3888 = vmul.f32 %v1277, %v3808
        %v3889 = vmul.f32 %v1281, %v3812
        %v3890 = vmul.f32 %v1285, %v3816
        %v3891 = vmul.f32 %v1289, %v3820
        %v3892 = vmul.f32 %v1293, %v3824
        %v3893 = vmul.f32 %v1297, %v3828
        %v3894 = vmul.f32 %v1301, %v3832
        %v3895 = vmul.f32 %v1305, %v3836
        %v3896 = vmul.f32 %v1309, %v3840
        %v3897 = vmul.f32 %v1313, %v3844
        %v3898 = vmul.f32 %v1317, %v3848
        %v3899 = vmul.f32 %v1321, %v3852
        %v3900 = vmul.f32 %v1325, %v3856
        %v3901 = vmul.f32 %v1329, %v3860
        %v3902 = vmul.f32 %v1333, %v3864
        %v3903 = vmul.f32 %v1337, %v3868
        %v3904 = vmul.f32 %v1341, %v3872
        %v3905 = vadd.f32 %v3713, %v3873
        %v3906 = vadd.f32 %v3714, %v3874
        %v3907 = vadd.f32 %v3715, %v3875
        %v3908 = vadd.f32 %v3716, %v3876
        %v3909 = vadd.f32 %v3717, %v3877
        %v3910 = vadd.f32 %v3718, %v3878
        %v3911 = vadd.f32 %v3719, %v3879
        %v3912 = vadd.f32 %v3720, %v3880
        %v3913 = vadd.f32 %v3721, %v3881
        %v3914 = vadd.f32 %v3722, %v3882
        %v3915 = vadd.f32 %v3723, %v3883
        %v3916 = vadd.f32 %v3724, %v3884
        %v3917 = vadd.f32 %v3725, %v3885
        %v3918 = vadd.f32 %v3726, %v3886
        %v3919 = vadd.f32 %v3727, %v3887
        %v3920 = vadd.f32 %v3728, %v3888
        %v3921 = vadd.f32 %v3729, %v3889
        %v3922 = vadd.f32 %v3730, %v3890
        %v3923 = vadd.f32 %v3731, %v3891
        %v3924 = vadd.f32 %v3732, %v3892
        %v3925 = vadd.f32 %v3733, %v3893
        %v3926 = vadd.f32 %v3734, %v3894
        %v3927 = vadd.f32 %v3735, %v3895
        %v3928 = vadd.f32 %v3736, %v3896
        %v3929 = vadd.f32 %v3737, %v3897
        %v3930 = vadd.f32 %v3738, %v3898
        %v3931 = vadd.f32 %v3739, %v3899
        %v3932 = vadd.f32 %v3740, %v3900
        %v3933 = vadd.f32 %v3741, %v3901
        %v3934 = vadd.f32 %v3742, %v3902
        %v3935 = vadd.f32 %v3743, %v3903
        %v3936 = vadd.f32 %v3744, %v3904
        %v3937 = vlaneseq
        %v3938 = vshrl.u32 %v3937, 7
        %v3939 = vsub.s32 3, %v3938
        %v3940 = vrot.slane %v3267, %v3939
        %v3941 = vlaneseq
        %v3942 = vshrl.u32 %v3941, 7
        %v3943 = vsub.s32 3, %v3942
        %v3944 = vrot.slane %v3270, %v3943
        %v3945 = vlaneseq
        %v3946 = vshrl.u32 %v3945, 7
        %v3947 = vsub.s32 3, %v3946
        %v3948 = vrot.slane %v3275, %v3947
        %v3949 = vlaneseq
        %v3950 = vshrl.u32 %v3949, 7
        %v3951 = vsub.s32 3, %v3950
        %v3952 = vrot.slane %v3278, %v3951
        %v3953 = vlaneseq
        %v3954 = vshrl.u32 %v3953, 7
        %v3955 = vsub.s32 3, %v3954
        %v3956 = vrot.slane %v3283, %v3955
        %v3957 = vlaneseq
        %v3958 = vshrl.u32 %v3957, 7
        %v3959 = vsub.s32 3, %v3958
        %v3960 = vrot.slane %v3286, %v3959
        %v3961 = vlaneseq
        %v3962 = vshrl.u32 %v3961, 7
        %v3963 = vsub.s32 3, %v3962
        %v3964 = vrot.slane %v3291, %v3963
        %v3965 = vlaneseq
        %v3966 = vshrl.u32 %v3965, 7
        %v3967 = vsub.s32 3, %v3966
        %v3968 = vrot.slane %v3294, %v3967
        %v3969 = vlaneseq
        %v3970 = vshrl.u32 %v3969, 7
        %v3971 = vsub.s32 3, %v3970
        %v3972 = vrot.slane %v3299, %v3971
        %v3973 = vlaneseq
        %v3974 = vshrl.u32 %v3973, 7
        %v3975 = vsub.s32 3, %v3974
        %v3976 = vrot.slane %v3302, %v3975
        %v3977 = vlaneseq
        %v3978 = vshrl.u32 %v3977, 7
        %v3979 = vsub.s32 3, %v3978
        %v3980 = vrot.slane %v3307, %v3979
        %v3981 = vlaneseq
        %v3982 = vshrl.u32 %v3981, 7
        %v3983 = vsub.s32 3, %v3982
        %v3984 = vrot.slane %v3310, %v3983
        %v3985 = vlaneseq
        %v3986 = vshrl.u32 %v3985, 7
        %v3987 = vsub.s32 3, %v3986
        %v3988 = vrot.slane %v3315, %v3987
        %v3989 = vlaneseq
        %v3990 = vshrl.u32 %v3989, 7
        %v3991 = vsub.s32 3, %v3990
        %v3992 = vrot.slane %v3318, %v3991
        %v3993 = vlaneseq
        %v3994 = vshrl.u32 %v3993, 7
        %v3995 = vsub.s32 3, %v3994
        %v3996 = vrot.slane %v3323, %v3995
        %v3997 = vlaneseq
        %v3998 = vshrl.u32 %v3997, 7
        %v3999 = vsub.s32 3, %v3998
        %v4000 = vrot.slane %v3326, %v3999
        %v4001 = vlaneseq
        %v4002 = vshrl.u32 %v4001, 7
        %v4003 = vsub.s32 3, %v4002
        %v4004 = vrot.slane %v3331, %v4003
        %v4005 = vlaneseq
        %v4006 = vshrl.u32 %v4005, 7
        %v4007 = vsub.s32 3, %v4006
        %v4008 = vrot.slane %v3334, %v4007
        %v4009 = vlaneseq
        %v4010 = vshrl.u32 %v4009, 7
        %v4011 = vsub.s32 3, %v4010
        %v4012 = vrot.slane %v3339, %v4011
        %v4013 = vlaneseq
        %v4014 = vshrl.u32 %v4013, 7
        %v4015 = vsub.s32 3, %v4014
        %v4016 = vrot.slane %v3342, %v4015
        %v4017 = vlaneseq
        %v4018 = vshrl.u32 %v4017, 7
        %v4019 = vsub.s32 3, %v4018
        %v4020 = vrot.slane %v3347, %v4019
        %v4021 = vlaneseq
        %v4022 = vshrl.u32 %v4021, 7
        %v4023 = vsub.s32 3, %v4022
        %v4024 = vrot.slane %v3350, %v4023
        %v4025 = vlaneseq
        %v4026 = vshrl.u32 %v4025, 7
        %v4027 = vsub.s32 3, %v4026
        %v4028 = vrot.slane %v3355, %v4027
        %v4029 = vlaneseq
        %v4030 = vshrl.u32 %v4029, 7
        %v4031 = vsub.s32 3, %v4030
        %v4032 = vrot.slane %v3358, %v4031
        %v4033 = vlaneseq
        %v4034 = vshrl.u32 %v4033, 7
        %v4035 = vsub.s32 3, %v4034
        %v4036 = vrot.slane %v3363, %v4035
        %v4037 = vlaneseq
        %v4038 = vshrl.u32 %v4037, 7
        %v4039 = vsub.s32 3, %v4038
        %v4040 = vrot.slane %v3366, %v4039
        %v4041 = vlaneseq
        %v4042 = vshrl.u32 %v4041, 7
        %v4043 = vsub.s32 3, %v4042
        %v4044 = vrot.slane %v3371, %v4043
        %v4045 = vlaneseq
        %v4046 = vshrl.u32 %v4045, 7
        %v4047 = vsub.s32 3, %v4046
        %v4048 = vrot.slane %v3374, %v4047
        %v4049 = vlaneseq
        %v4050 = vshrl.u32 %v4049, 7
        %v4051 = vsub.s32 3, %v4050
        %v4052 = vrot.slane %v3379, %v4051
        %v4053 = vlaneseq
        %v4054 = vshrl.u32 %v4053, 7
        %v4055 = vsub.s32 3, %v4054
        %v4056 = vrot.slane %v3382, %v4055
        %v4057 = vlaneseq
        %v4058 = vshrl.u32 %v4057, 7
        %v4059 = vsub.s32 3, %v4058
        %v4060 = vrot.slane %v3387, %v4059
        %v4061 = vlaneseq
        %v4062 = vshrl.u32 %v4061, 7
        %v4063 = vsub.s32 3, %v4062
        %v4064 = vrot.slane %v3390, %v4063
        %v4065 = vmul.f32 %v1537, %v3940
        %v4066 = vmul.f32 %v1541, %v3944
        %v4067 = vmul.f32 %v1545, %v3948
        %v4068 = vmul.f32 %v1549, %v3952
        %v4069 = vmul.f32 %v1553, %v3956
        %v4070 = vmul.f32 %v1557, %v3960
        %v4071 = vmul.f32 %v1561, %v3964
        %v4072 = vmul.f32 %v1565, %v3968
        %v4073 = vmul.f32 %v1569, %v3972
        %v4074 = vmul.f32 %v1573, %v3976
        %v4075 = vmul.f32 %v1577, %v3980
        %v4076 = vmul.f32 %v1581, %v3984
        %v4077 = vmul.f32 %v1585, %v3988
        %v4078 = vmul.f32 %v1589, %v3992
        %v4079 = vmul.f32 %v1593, %v3996
        %v4080 = vmul.f32 %v1597, %v4000
        %v4081 = vmul.f32 %v1601, %v4004
        %v4082 = vmul.f32 %v1605, %v4008
        %v4083 = vmul.f32 %v1609, %v4012
        %v4084 = vmul.f32 %v1613, %v4016
        %v4085 = vmul.f32 %v1617, %v4020
        %v4086 = vmul.f32 %v1621, %v4024
        %v4087 = vmul.f32 %v1625, %v4028
        %v4088 = vmul.f32 %v1629, %v4032
        %v4089 = vmul.f32 %v1633, %v4036
        %v4090 = vmul.f32 %v1637, %v4040
        %v4091 = vmul.f32 %v1641, %v4044
        %v4092 = vmul.f32 %v1645, %v4048
        %v4093 = vmul.f32 %v1649, %v4052
        %v4094 = vmul.f32 %v1653, %v4056
        %v4095 = vmul.f32 %v1657, %v4060
        %v4096 = vmul.f32 %v1661, %v4064
        %v4097 = vadd.f32 %v3905, %v4065
        %v4098 = vadd.f32 %v3906, %v4066
        %v4099 = vadd.f32 %v3907, %v4067
        %v4100 = vadd.f32 %v3908, %v4068
        %v4101 = vadd.f32 %v3909, %v4069
        %v4102 = vadd.f32 %v3910, %v4070
        %v4103 = vadd.f32 %v3911, %v4071
        %v4104 = vadd.f32 %v3912, %v4072
        %v4105 = vadd.f32 %v3913, %v4073
        %v4106 = vadd.f32 %v3914, %v4074
        %v4107 = vadd.f32 %v3915, %v4075
        %v4108 = vadd.f32 %v3916, %v4076
        %v4109 = vadd.f32 %v3917, %v4077
        %v4110 = vadd.f32 %v3918, %v4078
        %v4111 = vadd.f32 %v3919, %v4079
        %v4112 = vadd.f32 %v3920, %v4080
        %v4113 = vadd.f32 %v3921, %v4081
        %v4114 = vadd.f32 %v3922, %v4082
        %v4115 = vadd.f32 %v3923, %v4083
        %v4116 = vadd.f32 %v3924, %v4084
        %v4117 = vadd.f32 %v3925, %v4085
        %v4118 = vadd.f32 %v3926, %v4086
        %v4119 = vadd.f32 %v3927, %v4087
        %v4120 = vadd.f32 %v3928, %v4088
        %v4121 = vadd.f32 %v3929, %v4089
        %v4122 = vadd.f32 %v3930, %v4090
        %v4123 = vadd.f32 %v3931, %v4091
        %v4124 = vadd.f32 %v3932, %v4092
        %v4125 = vadd.f32 %v3933, %v4093
        %v4126 = vadd.f32 %v3934, %v4094
        %v4127 = vadd.f32 %v3935, %v4095
        %v4128 = vadd.f32 %v3936, %v4096
        %v4129 = vlaneseq
        %v4130 = vshrl.u32 %v4129, 7
        %v4131 = vsub.s32 4, %v4130
        %v4132 = vrot.slane %v3267, %v4131
        %v4133 = vlaneseq
        %v4134 = vshrl.u32 %v4133, 7
        %v4135 = vsub.s32 4, %v4134
        %v4136 = vrot.slane %v3270, %v4135
        %v4137 = vlaneseq
        %v4138 = vshrl.u32 %v4137, 7
        %v4139 = vsub.s32 4, %v4138
        %v4140 = vrot.slane %v3275, %v4139
        %v4141 = vlaneseq
        %v4142 = vshrl.u32 %v4141, 7
        %v4143 = vsub.s32 4, %v4142
        %v4144 = vrot.slane %v3278, %v4143
        %v4145 = vlaneseq
        %v4146 = vshrl.u32 %v4145, 7
        %v4147 = vsub.s32 4, %v4146
        %v4148 = vrot.slane %v3283, %v4147
        %v4149 = vlaneseq
        %v4150 = vshrl.u32 %v4149, 7
        %v4151 = vsub.s32 4, %v4150
        %v4152 = vrot.slane %v3286, %v4151
        %v4153 = vlaneseq
        %v4154 = vshrl.u32 %v4153, 7
        %v4155 = vsub.s32 4, %v4154
        %v4156 = vrot.slane %v3291, %v4155
        %v4157 = vlaneseq
        %v4158 = vshrl.u32 %v4157, 7
        %v4159 = vsub.s32 4, %v4158
        %v4160 = vrot.slane %v3294, %v4159
        %v4161 = vlaneseq
        %v4162 = vshrl.u32 %v4161, 7
        %v4163 = vsub.s32 4, %v4162
        %v4164 = vrot.slane %v3299, %v4163
        %v4165 = vlaneseq
        %v4166 = vshrl.u32 %v4165, 7
        %v4167 = vsub.s32 4, %v4166
        %v4168 = vrot.slane %v3302, %v4167
        %v4169 = vlaneseq
        %v4170 = vshrl.u32 %v4169, 7
        %v4171 = vsub.s32 4, %v4170
        %v4172 = vrot.slane %v3307, %v4171
        %v4173 = vlaneseq
        %v4174 = vshrl.u32 %v4173, 7
        %v4175 = vsub.s32 4, %v4174
        %v4176 = vrot.slane %v3310, %v4175
        %v4177 = vlaneseq
        %v4178 = vshrl.u32 %v4177, 7
        %v4179 = vsub.s32 4, %v4178
        %v4180 = vrot.slane %v3315, %v4179
        %v4181 = vlaneseq
        %v4182 = vshrl.u32 %v4181, 7
        %v4183 = vsub.s32 4, %v4182
        %v4184 = vrot.slane %v3318, %v4183
        %v4185 = vlaneseq
        %v4186 = vshrl.u32 %v4185, 7
        %v4187 = vsub.s32 4, %v4186
        %v4188 = vrot.slane %v3323, %v4187
        %v4189 = vlaneseq
        %v4190 = vshrl.u32 %v4189, 7
        %v4191 = vsub.s32 4, %v4190
        %v4192 = vrot.slane %v3326, %v4191
        %v4193 = vlaneseq
        %v4194 = vshrl.u32 %v4193, 7
        %v4195 = vsub.s32 4, %v4194
        %v4196 = vrot.slane %v3331, %v4195
        %v4197 = vlaneseq
        %v4198 = vshrl.u32 %v4197, 7
        %v4199 = vsub.s32 4, %v4198
        %v4200 = vrot.slane %v3334, %v4199
        %v4201 = vlaneseq
        %v4202 = vshrl.u32 %v4201, 7
        %v4203 = vsub.s32 4, %v4202
        %v4204 = vrot.slane %v3339, %v4203
        %v4205 = vlaneseq
        %v4206 = vshrl.u32 %v4205, 7
        %v4207 = vsub.s32 4, %v4206
        %v4208 = vrot.slane %v3342, %v4207
        %v4209 = vlaneseq
        %v4210 = vshrl.u32 %v4209, 7
        %v4211 = vsub.s32 4, %v4210
        %v4212 = vrot.slane %v3347, %v4211
        %v4213 = vlaneseq
        %v4214 = vshrl.u32 %v4213, 7
        %v4215 = vsub.s32 4, %v4214
        %v4216 = vrot.slane %v3350, %v4215
        %v4217 = vlaneseq
        %v4218 = vshrl.u32 %v4217, 7
        %v4219 = vsub.s32 4, %v4218
        %v4220 = vrot.slane %v3355, %v4219
        %v4221 = vlaneseq
        %v4222 = vshrl.u32 %v4221, 7
        %v4223 = vsub.s32 4, %v4222
        %v4224 = vrot.slane %v3358, %v4223
        %v4225 = vlaneseq
        %v4226 = vshrl.u32 %v4225, 7
        %v4227 = vsub.s32 4, %v4226
        %v4228 = vrot.slane %v3363, %v4227
        %v4229 = vlaneseq
        %v4230 = vshrl.u32 %v4229, 7
        %v4231 = vsub.s32 4, %v4230
        %v4232 = vrot.slane %v3366, %v4231
        %v4233 = vlaneseq
        %v4234 = vshrl.u32 %v4233, 7
        %v4235 = vsub.s32 4, %v4234
        %v4236 = vrot.slane %v3371, %v4235
        %v4237 = vlaneseq
        %v4238 = vshrl.u32 %v4237, 7
        %v4239 = vsub.s32 4, %v4238
        %v4240 = vrot.slane %v3374, %v4239
        %v4241 = vlaneseq
        %v4242 = vshrl.u32 %v4241, 7
        %v4243 = vsub.s32 4, %v4242
        %v4244 = vrot.slane %v3379, %v4243
        %v4245 = vlaneseq
        %v4246 = vshrl.u32 %v4245, 7
        %v4247 = vsub.s32 4, %v4246
        %v4248 = vrot.slane %v3382, %v4247
        %v4249 = vlaneseq
        %v4250 = vshrl.u32 %v4249, 7
        %v4251 = vsub.s32 4, %v4250
        %v4252 = vrot.slane %v3387, %v4251
        %v4253 = vlaneseq
        %v4254 = vshrl.u32 %v4253, 7
        %v4255 = vsub.s32 4, %v4254
        %v4256 = vrot.slane %v3390, %v4255
        %v4257 = vmul.f32 %v1857, %v4132
        %v4258 = vmul.f32 %v1861, %v4136
        %v4259 = vmul.f32 %v1865, %v4140
        %v4260 = vmul.f32 %v1869, %v4144
        %v4261 = vmul.f32 %v1873, %v4148
        %v4262 = vmul.f32 %v1877, %v4152
        %v4263 = vmul.f32 %v1881, %v4156
        %v4264 = vmul.f32 %v1885, %v4160
        %v4265 = vmul.f32 %v1889, %v4164
        %v4266 = vmul.f32 %v1893, %v4168
        %v4267 = vmul.f32 %v1897, %v4172
        %v4268 = vmul.f32 %v1901, %v4176
        %v4269 = vmul.f32 %v1905, %v4180
        %v4270 = vmul.f32 %v1909, %v4184
        %v4271 = vmul.f32 %v1913, %v4188
        %v4272 = vmul.f32 %v1917, %v4192
        %v4273 = vmul.f32 %v1921, %v4196
        %v4274 = vmul.f32 %v1925, %v4200
        %v4275 = vmul.f32 %v1929, %v4204
        %v4276 = vmul.f32 %v1933, %v4208
        %v4277 = vmul.f32 %v1937, %v4212
        %v4278 = vmul.f32 %v1941, %v4216
        %v4279 = vmul.f32 %v1945, %v4220
        %v4280 = vmul.f32 %v1949, %v4224
        %v4281 = vmul.f32 %v1953, %v4228
        %v4282 = vmul.f32 %v1957, %v4232
        %v4283 = vmul.f32 %v1961, %v4236
        %v4284 = vmul.f32 %v1965, %v4240
        %v4285 = vmul.f32 %v1969, %v4244
        %v4286 = vmul.f32 %v1973, %v4248
        %v4287 = vmul.f32 %v1977, %v4252
        %v4288 = vmul.f32 %v1981, %v4256
        %v4289 = vadd.f32 %v4097, %v4257
        %v4290 = vadd.f32 %v4098, %v4258
        %v4291 = vadd.f32 %v4099, %v4259
        %v4292 = vadd.f32 %v4100, %v4260
        %v4293 = vadd.f32 %v4101, %v4261
        %v4294 = vadd.f32 %v4102, %v4262
        %v4295 = vadd.f32 %v4103, %v4263
        %v4296 = vadd.f32 %v4104, %v4264
        %v4297 = vadd.f32 %v4105, %v4265
        %v4298 = vadd.f32 %v4106, %v4266
        %v4299 = vadd.f32 %v4107, %v4267
        %v4300 = vadd.f32 %v4108, %v4268
        %v4301 = vadd.f32 %v4109, %v4269
        %v4302 = vadd.f32 %v4110, %v4270
        %v4303 = vadd.f32 %v4111, %v4271
        %v4304 = vadd.f32 %v4112, %v4272
        %v4305 = vadd.f32 %v4113, %v4273
        %v4306 = vadd.f32 %v4114, %v4274
        %v4307 = vadd.f32 %v4115, %v4275
        %v4308 = vadd.f32 %v4116, %v4276
        %v4309 = vadd.f32 %v4117, %v4277
        %v4310 = vadd.f32 %v4118, %v4278
        %v4311 = vadd.f32 %v4119, %v4279
        %v4312 = vadd.f32 %v4120, %v4280
        %v4313 = vadd.f32 %v4121, %v4281
        %v4314 = vadd.f32 %v4122, %v4282
        %v4315 = vadd.f32 %v4123, %v4283
        %v4316 = vadd.f32 %v4124, %v4284
        %v4317 = vadd.f32 %v4125, %v4285
        %v4318 = vadd.f32 %v4126, %v4286
        %v4319 = vadd.f32 %v4127, %v4287
        %v4320 = vadd.f32 %v4128, %v4288
        %v4321 = vlaneseq
        %v4322 = vshrl.u32 %v4321, 7
        %v4323 = vsub.s32 5, %v4322
        %v4324 = vrot.slane %v3267, %v4323
        %v4325 = vlaneseq
        %v4326 = vshrl.u32 %v4325, 7
        %v4327 = vsub.s32 5, %v4326
        %v4328 = vrot.slane %v3270, %v4327
        %v4329 = vlaneseq
        %v4330 = vshrl.u32 %v4329, 7
        %v4331 = vsub.s32 5, %v4330
        %v4332 = vrot.slane %v3275, %v4331
        %v4333 = vlaneseq
        %v4334 = vshrl.u32 %v4333, 7
        %v4335 = vsub.s32 5, %v4334
        %v4336 = vrot.slane %v3278, %v4335
        %v4337 = vlaneseq
        %v4338 = vshrl.u32 %v4337, 7
        %v4339 = vsub.s32 5, %v4338
        %v4340 = vrot.slane %v3283, %v4339
        %v4341 = vlaneseq
        %v4342 = vshrl.u32 %v4341, 7
        %v4343 = vsub.s32 5, %v4342
        %v4344 = vrot.slane %v3286, %v4343
        %v4345 = vlaneseq
        %v4346 = vshrl.u32 %v4345, 7
        %v4347 = vsub.s32 5, %v4346
        %v4348 = vrot.slane %v3291, %v4347
        %v4349 = vlaneseq
        %v4350 = vshrl.u32 %v4349, 7
        %v4351 = vsub.s32 5, %v4350
        %v4352 = vrot.slane %v3294, %v4351
        %v4353 = vlaneseq
        %v4354 = vshrl.u32 %v4353, 7
        %v4355 = vsub.s32 5, %v4354
        %v4356 = vrot.slane %v3299, %v4355
        %v4357 = vlaneseq
        %v4358 = vshrl.u32 %v4357, 7
        %v4359 = vsub.s32 5, %v4358
        %v4360 = vrot.slane %v3302, %v4359
        %v4361 = vlaneseq
        %v4362 = vshrl.u32 %v4361, 7
        %v4363 = vsub.s32 5, %v4362
        %v4364 = vrot.slane %v3307, %v4363
        %v4365 = vlaneseq
        %v4366 = vshrl.u32 %v4365, 7
        %v4367 = vsub.s32 5, %v4366
        %v4368 = vrot.slane %v3310, %v4367
        %v4369 = vlaneseq
        %v4370 = vshrl.u32 %v4369, 7
        %v4371 = vsub.s32 5, %v4370
        %v4372 = vrot.slane %v3315, %v4371
        %v4373 = vlaneseq
        %v4374 = vshrl.u32 %v4373, 7
        %v4375 = vsub.s32 5, %v4374
        %v4376 = vrot.slane %v3318, %v4375
        %v4377 = vlaneseq
        %v4378 = vshrl.u32 %v4377, 7
        %v4379 = vsub.s32 5, %v4378
        %v4380 = vrot.slane %v3323, %v4379
        %v4381 = vlaneseq
        %v4382 = vshrl.u32 %v4381, 7
        %v4383 = vsub.s32 5, %v4382
        %v4384 = vrot.slane %v3326, %v4383
        %v4385 = vlaneseq
        %v4386 = vshrl.u32 %v4385, 7
        %v4387 = vsub.s32 5, %v4386
        %v4388 = vrot.slane %v3331, %v4387
        %v4389 = vlaneseq
        %v4390 = vshrl.u32 %v4389, 7
        %v4391 = vsub.s32 5, %v4390
        %v4392 = vrot.slane %v3334, %v4391
        %v4393 = vlaneseq
        %v4394 = vshrl.u32 %v4393, 7
        %v4395 = vsub.s32 5, %v4394
        %v4396 = vrot.slane %v3339, %v4395
        %v4397 = vlaneseq
        %v4398 = vshrl.u32 %v4397, 7
        %v4399 = vsub.s32 5, %v4398
        %v4400 = vrot.slane %v3342, %v4399
        %v4401 = vlaneseq
        %v4402 = vshrl.u32 %v4401, 7
        %v4403 = vsub.s32 5, %v4402
        %v4404 = vrot.slane %v3347, %v4403
        %v4405 = vlaneseq
        %v4406 = vshrl.u32 %v4405, 7
        %v4407 = vsub.s32 5, %v4406
        %v4408 = vrot.slane %v3350, %v4407
        %v4409 = vlaneseq
        %v4410 = vshrl.u32 %v4409, 7
        %v4411 = vsub.s32 5, %v4410
        %v4412 = vrot.slane %v3355, %v4411
        %v4413 = vlaneseq
        %v4414 = vshrl.u32 %v4413, 7
        %v4415 = vsub.s32 5, %v4414
        %v4416 = vrot.slane %v3358, %v4415
        %v4417 = vlaneseq
        %v4418 = vshrl.u32 %v4417, 7
        %v4419 = vsub.s32 5, %v4418
        %v4420 = vrot.slane %v3363, %v4419
        %v4421 = vlaneseq
        %v4422 = vshrl.u32 %v4421, 7
        %v4423 = vsub.s32 5, %v4422
        %v4424 = vrot.slane %v3366, %v4423
        %v4425 = vlaneseq
        %v4426 = vshrl.u32 %v4425, 7
        %v4427 = vsub.s32 5, %v4426
        %v4428 = vrot.slane %v3371, %v4427
        %v4429 = vlaneseq
        %v4430 = vshrl.u32 %v4429, 7
        %v4431 = vsub.s32 5, %v4430
        %v4432 = vrot.slane %v3374, %v4431
        %v4433 = vlaneseq
        %v4434 = vshrl.u32 %v4433, 7
        %v4435 = vsub.s32 5, %v4434
        %v4436 = vrot.slane %v3379, %v4435
        %v4437 = vlaneseq
        %v4438 = vshrl.u32 %v4437, 7
        %v4439 = vsub.s32 5, %v4438
        %v4440 = vrot.slane %v3382, %v4439
        %v4441 = vlaneseq
        %v4442 = vshrl.u32 %v4441, 7
        %v4443 = vsub.s32 5, %v4442
        %v4444 = vrot.slane %v3387, %v4443
        %v4445 = vlaneseq
        %v4446 = vshrl.u32 %v4445, 7
        %v4447 = vsub.s32 5, %v4446
        %v4448 = vrot.slane %v3390, %v4447
        %v4449 = vmul.f32 %v2177, %v4324
        %v4450 = vmul.f32 %v2181, %v4328
        %v4451 = vmul.f32 %v2185, %v4332
        %v4452 = vmul.f32 %v2189, %v4336
        %v4453 = vmul.f32 %v2193, %v4340
        %v4454 = vmul.f32 %v2197, %v4344
        %v4455 = vmul.f32 %v2201, %v4348
        %v4456 = vmul.f32 %v2205, %v4352
        %v4457 = vmul.f32 %v2209, %v4356
        %v4458 = vmul.f32 %v2213, %v4360
        %v4459 = vmul.f32 %v2217, %v4364
        %v4460 = vmul.f32 %v2221, %v4368
        %v4461 = vmul.f32 %v2225, %v4372
        %v4462 = vmul.f32 %v2229, %v4376
        %v4463 = vmul.f32 %v2233, %v4380
        %v4464 = vmul.f32 %v2237, %v4384
        %v4465 = vmul.f32 %v2241, %v4388
        %v4466 = vmul.f32 %v2245, %v4392
        %v4467 = vmul.f32 %v2249, %v4396
        %v4468 = vmul.f32 %v2253, %v4400
        %v4469 = vmul.f32 %v2257, %v4404
        %v4470 = vmul.f32 %v2261, %v4408
        %v4471 = vmul.f32 %v2265, %v4412
        %v4472 = vmul.f32 %v2269, %v4416
        %v4473 = vmul.f32 %v2273, %v4420
        %v4474 = vmul.f32 %v2277, %v4424
        %v4475 = vmul.f32 %v2281, %v4428
        %v4476 = vmul.f32 %v2285, %v4432
        %v4477 = vmul.f32 %v2289, %v4436
        %v4478 = vmul.f32 %v2293, %v4440
        %v4479 = vmul.f32 %v2297, %v4444
        %v4480 = vmul.f32 %v2301, %v4448
        %v4481 = vadd.f32 %v4289, %v4449
        %v4482 = vadd.f32 %v4290, %v4450
        %v4483 = vadd.f32 %v4291, %v4451
        %v4484 = vadd.f32 %v4292, %v4452
        %v4485 = vadd.f32 %v4293, %v4453
        %v4486 = vadd.f32 %v4294, %v4454
        %v4487 = vadd.f32 %v4295, %v4455
        %v4488 = vadd.f32 %v4296, %v4456
        %v4489 = vadd.f32 %v4297, %v4457
        %v4490 = vadd.f32 %v4298, %v4458
        %v4491 = vadd.f32 %v4299, %v4459
        %v4492 = vadd.f32 %v4300, %v4460
        %v4493 = vadd.f32 %v4301, %v4461
        %v4494 = vadd.f32 %v4302, %v4462
        %v4495 = vadd.f32 %v4303, %v4463
        %v4496 = vadd.f32 %v4304, %v4464
        %v4497 = vadd.f32 %v4305, %v4465
        %v4498 = vadd.f32 %v4306, %v4466
        %v4499 = vadd.f32 %v4307, %v4467
        %v4500 = vadd.f32 %v4308, %v4468
        %v4501 = vadd.f32 %v4309, %v4469
        %v4502 = vadd.f32 %v4310, %v4470
        %v4503 = vadd.f32 %v4311, %v4471
        %v4504 = vadd.f32 %v4312, %v4472
        %v4505 = vadd.f32 %v4313, %v4473
        %v4506 = vadd.f32 %v4314, %v4474
        %v4507 = vadd.f32 %v4315, %v4475
        %v4508 = vadd.f32 %v4316, %v4476
        %v4509 = vadd.f32 %v4317, %v4477
        %v4510 = vadd.f32 %v4318, %v4478
        %v4511 = vadd.f32 %v4319, %v4479
        %v4512 = vadd.f32 %v4320, %v4480
        %v4513 = vlaneseq
        %v4514 = vshrl.u32 %v4513, 7
        %v4515 = vsub.s32 6, %v4514
        %v4516 = vrot.slane %v3267, %v4515
        %v4517 = vlaneseq
        %v4518 = vshrl.u32 %v4517, 7
        %v4519 = vsub.s32 6, %v4518
        %v4520 = vrot.slane %v3270, %v4519
        %v4521 = vlaneseq
        %v4522 = vshrl.u32 %v4521, 7
        %v4523 = vsub.s32 6, %v4522
        %v4524 = vrot.slane %v3275, %v4523
        %v4525 = vlaneseq
        %v4526 = vshrl.u32 %v4525, 7
        %v4527 = vsub.s32 6, %v4526
        %v4528 = vrot.slane %v3278, %v4527
        %v4529 = vlaneseq
        %v4530 = vshrl.u32 %v4529, 7
        %v4531 = vsub.s32 6, %v4530
        %v4532 = vrot.slane %v3283, %v4531
        %v4533 = vlaneseq
        %v4534 = vshrl.u32 %v4533, 7
        %v4535 = vsub.s32 6, %v4534
        %v4536 = vrot.slane %v3286, %v4535
        %v4537 = vlaneseq
        %v4538 = vshrl.u32 %v4537, 7
        %v4539 = vsub.s32 6, %v4538
        %v4540 = vrot.slane %v3291, %v4539
        %v4541 = vlaneseq
        %v4542 = vshrl.u32 %v4541, 7
        %v4543 = vsub.s32 6, %v4542
        %v4544 = vrot.slane %v3294, %v4543
        %v4545 = vlaneseq
        %v4546 = vshrl.u32 %v4545, 7
        %v4547 = vsub.s32 6, %v4546
        %v4548 = vrot.slane %v3299, %v4547
        %v4549 = vlaneseq
        %v4550 = vshrl.u32 %v4549, 7
        %v4551 = vsub.s32 6, %v4550
        %v4552 = vrot.slane %v3302, %v4551
        %v4553 = vlaneseq
        %v4554 = vshrl.u32 %v4553, 7
        %v4555 = vsub.s32 6, %v4554
        %v4556 = vrot.slane %v3307, %v4555
        %v4557 = vlaneseq
        %v4558 = vshrl.u32 %v4557, 7
        %v4559 = vsub.s32 6, %v4558
        %v4560 = vrot.slane %v3310, %v4559
        %v4561 = vlaneseq
        %v4562 = vshrl.u32 %v4561, 7
        %v4563 = vsub.s32 6, %v4562
        %v4564 = vrot.slane %v3315, %v4563
        %v4565 = vlaneseq
        %v4566 = vshrl.u32 %v4565, 7
        %v4567 = vsub.s32 6, %v4566
        %v4568 = vrot.slane %v3318, %v4567
        %v4569 = vlaneseq
        %v4570 = vshrl.u32 %v4569, 7
        %v4571 = vsub.s32 6, %v4570
        %v4572 = vrot.slane %v3323, %v4571
        %v4573 = vlaneseq
        %v4574 = vshrl.u32 %v4573, 7
        %v4575 = vsub.s32 6, %v4574
        %v4576 = vrot.slane %v3326, %v4575
        %v4577 = vlaneseq
        %v4578 = vshrl.u32 %v4577, 7
        %v4579 = vsub.s32 6, %v4578
        %v4580 = vrot.slane %v3331, %v4579
        %v4581 = vlaneseq
        %v4582 = vshrl.u32 %v4581, 7
        %v4583 = vsub.s32 6, %v4582
        %v4584 = vrot.slane %v3334, %v4583
        %v4585 = vlaneseq
        %v4586 = vshrl.u32 %v4585, 7
        %v4587 = vsub.s32 6, %v4586
        %v4588 = vrot.slane %v3339, %v4587
        %v4589 = vlaneseq
        %v4590 = vshrl.u32 %v4589, 7
        %v4591 = vsub.s32 6, %v4590
        %v4592 = vrot.slane %v3342, %v4591
        %v4593 = vlaneseq
        %v4594 = vshrl.u32 %v4593, 7
        %v4595 = vsub.s32 6, %v4594
        %v4596 = vrot.slane %v3347, %v4595
        %v4597 = vlaneseq
        %v4598 = vshrl.u32 %v4597, 7
        %v4599 = vsub.s32 6, %v4598
        %v4600 = vrot.slane %v3350, %v4599
        %v4601 = vlaneseq
        %v4602 = vshrl.u32 %v4601, 7
        %v4603 = vsub.s32 6, %v4602
        %v4604 = vrot.slane %v3355, %v4603
        %v4605 = vlaneseq
        %v4606 = vshrl.u32 %v4605, 7
        %v4607 = vsub.s32 6, %v4606
        %v4608 = vrot.slane %v3358, %v4607
        %v4609 = vlaneseq
        %v4610 = vshrl.u32 %v4609, 7
        %v4611 = vsub.s32 6, %v4610
        %v4612 = vrot.slane %v3363, %v4611
        %v4613 = vlaneseq
        %v4614 = vshrl.u32 %v4613, 7
        %v4615 = vsub.s32 6, %v4614
        %v4616 = vrot.slane %v3366, %v4615
        %v4617 = vlaneseq
        %v4618 = vshrl.u32 %v4617, 7
        %v4619 = vsub.s32 6, %v4618
        %v4620 = vrot.slane %v3371, %v4619
        %v4621 = vlaneseq
        %v4622 = vshrl.u32 %v4621, 7
        %v4623 = vsub.s32 6, %v4622
        %v4624 = vrot.slane %v3374, %v4623
        %v4625 = vlaneseq
        %v4626 = vshrl.u32 %v4625, 7
        %v4627 = vsub.s32 6, %v4626
        %v4628 = vrot.slane %v3379, %v4627
        %v4629 = vlaneseq
        %v4630 = vshrl.u32 %v4629, 7
        %v4631 = vsub.s32 6, %v4630
        %v4632 = vrot.slane %v3382, %v4631
        %v4633 = vlaneseq
        %v4634 = vshrl.u32 %v4633, 7
        %v4635 = vsub.s32 6, %v4634
        %v4636 = vrot.slane %v3387, %v4635
        %v4637 = vlaneseq
        %v4638 = vshrl.u32 %v4637, 7
        %v4639 = vsub.s32 6, %v4638
        %v4640 = vrot.slane %v3390, %v4639
        %v4641 = vmul.f32 %v2497, %v4516
        %v4642 = vmul.f32 %v2501, %v4520
        %v4643 = vmul.f32 %v2505, %v4524
        %v4644 = vmul.f32 %v2509, %v4528
        %v4645 = vmul.f32 %v2513, %v4532
        %v4646 = vmul.f32 %v2517, %v4536
        %v4647 = vmul.f32 %v2521, %v4540
        %v4648 = vmul.f32 %v2525, %v4544
        %v4649 = vmul.f32 %v2529, %v4548
        %v4650 = vmul.f32 %v2533, %v4552
        %v4651 = vmul.f32 %v2537, %v4556
        %v4652 = vmul.f32 %v2541, %v4560
        %v4653 = vmul.f32 %v2545, %v4564
        %v4654 = vmul.f32 %v2549, %v4568
        %v4655 = vmul.f32 %v2553, %v4572
        %v4656 = vmul.f32 %v2557, %v4576
        %v4657 = vmul.f32 %v2561, %v4580
        %v4658 = vmul.f32 %v2565, %v4584
        %v4659 = vmul.f32 %v2569, %v4588
        %v4660 = vmul.f32 %v2573, %v4592
        %v4661 = vmul.f32 %v2577, %v4596
        %v4662 = vmul.f32 %v2581, %v4600
        %v4663 = vmul.f32 %v2585, %v4604
        %v4664 = vmul.f32 %v2589, %v4608
        %v4665 = vmul.f32 %v2593, %v4612
        %v4666 = vmul.f32 %v2597, %v4616
        %v4667 = vmul.f32 %v2601, %v4620
        %v4668 = vmul.f32 %v2605, %v4624
        %v4669 = vmul.f32 %v2609, %v4628
        %v4670 = vmul.f32 %v2613, %v4632
        %v4671 = vmul.f32 %v2617, %v4636
        %v4672 = vmul.f32 %v2621, %v4640
        %v4673 = vadd.f32 %v4481, %v4641
        %v4674 = vadd.f32 %v4482, %v4642
        %v4675 = vadd.f32 %v4483, %v4643
        %v4676 = vadd.f32 %v4484, %v4644
        %v4677 = vadd.f32 %v4485, %v4645
        %v4678 = vadd.f32 %v4486, %v4646
        %v4679 = vadd.f32 %v4487, %v4647
        %v4680 = vadd.f32 %v4488, %v4648
        %v4681 = vadd.f32 %v4489, %v4649
        %v4682 = vadd.f32 %v4490, %v4650
        %v4683 = vadd.f32 %v4491, %v4651
        %v4684 = vadd.f32 %v4492, %v4652
        %v4685 = vadd.f32 %v4493, %v4653
        %v4686 = vadd.f32 %v4494, %v4654
        %v4687 = vadd.f32 %v4495, %v4655
        %v4688 = vadd.f32 %v4496, %v4656
        %v4689 = vadd.f32 %v4497, %v4657
        %v4690 = vadd.f32 %v4498, %v4658
        %v4691 = vadd.f32 %v4499, %v4659
        %v4692 = vadd.f32 %v4500, %v4660
        %v4693 = vadd.f32 %v4501, %v4661
        %v4694 = vadd.f32 %v4502, %v4662
        %v4695 = vadd.f32 %v4503, %v4663
        %v4696 = vadd.f32 %v4504, %v4664
        %v4697 = vadd.f32 %v4505, %v4665
        %v4698 = vadd.f32 %v4506, %v4666
        %v4699 = vadd.f32 %v4507, %v4667
        %v4700 = vadd.f32 %v4508, %v4668
        %v4701 = vadd.f32 %v4509, %v4669
        %v4702 = vadd.f32 %v4510, %v4670
        %v4703 = vadd.f32 %v4511, %v4671
        %v4704 = vadd.f32 %v4512, %v4672
        %v4705 = vlaneseq
        %v4706 = vshrl.u32 %v4705, 7
        %v4707 = vsub.s32 7, %v4706
        %v4708 = vrot.slane %v3267, %v4707
        %v4709 = vlaneseq
        %v4710 = vshrl.u32 %v4709, 7
        %v4711 = vsub.s32 7, %v4710
        %v4712 = vrot.slane %v3270, %v4711
        %v4713 = vlaneseq
        %v4714 = vshrl.u32 %v4713, 7
        %v4715 = vsub.s32 7, %v4714
        %v4716 = vrot.slane %v3275, %v4715
        %v4717 = vlaneseq
        %v4718 = vshrl.u32 %v4717, 7
        %v4719 = vsub.s32 7, %v4718
        %v4720 = vrot.slane %v3278, %v4719
        %v4721 = vlaneseq
        %v4722 = vshrl.u32 %v4721, 7
        %v4723 = vsub.s32 7, %v4722
        %v4724 = vrot.slane %v3283, %v4723
        %v4725 = vlaneseq
        %v4726 = vshrl.u32 %v4725, 7
        %v4727 = vsub.s32 7, %v4726
        %v4728 = vrot.slane %v3286, %v4727
        %v4729 = vlaneseq
        %v4730 = vshrl.u32 %v4729, 7
        %v4731 = vsub.s32 7, %v4730
        %v4732 = vrot.slane %v3291, %v4731
        %v4733 = vlaneseq
        %v4734 = vshrl.u32 %v4733, 7
        %v4735 = vsub.s32 7, %v4734
        %v4736 = vrot.slane %v3294, %v4735
        %v4737 = vlaneseq
        %v4738 = vshrl.u32 %v4737, 7
        %v4739 = vsub.s32 7, %v4738
        %v4740 = vrot.slane %v3299, %v4739
        %v4741 = vlaneseq
        %v4742 = vshrl.u32 %v4741, 7
        %v4743 = vsub.s32 7, %v4742
        %v4744 = vrot.slane %v3302, %v4743
        %v4745 = vlaneseq
        %v4746 = vshrl.u32 %v4745, 7
        %v4747 = vsub.s32 7, %v4746
        %v4748 = vrot.slane %v3307, %v4747
        %v4749 = vlaneseq
        %v4750 = vshrl.u32 %v4749, 7
        %v4751 = vsub.s32 7, %v4750
        %v4752 = vrot.slane %v3310, %v4751
        %v4753 = vlaneseq
        %v4754 = vshrl.u32 %v4753, 7
        %v4755 = vsub.s32 7, %v4754
        %v4756 = vrot.slane %v3315, %v4755
        %v4757 = vlaneseq
        %v4758 = vshrl.u32 %v4757, 7
        %v4759 = vsub.s32 7, %v4758
        %v4760 = vrot.slane %v3318, %v4759
        %v4761 = vlaneseq
        %v4762 = vshrl.u32 %v4761, 7
        %v4763 = vsub.s32 7, %v4762
        %v4764 = vrot.slane %v3323, %v4763
        %v4765 = vlaneseq
        %v4766 = vshrl.u32 %v4765, 7
        %v4767 = vsub.s32 7, %v4766
        %v4768 = vrot.slane %v3326, %v4767
        %v4769 = vlaneseq
        %v4770 = vshrl.u32 %v4769, 7
        %v4771 = vsub.s32 7, %v4770
        %v4772 = vrot.slane %v3331, %v4771
        %v4773 = vlaneseq
        %v4774 = vshrl.u32 %v4773, 7
        %v4775 = vsub.s32 7, %v4774
        %v4776 = vrot.slane %v3334, %v4775
        %v4777 = vlaneseq
        %v4778 = vshrl.u32 %v4777, 7
        %v4779 = vsub.s32 7, %v4778
        %v4780 = vrot.slane %v3339, %v4779
        %v4781 = vlaneseq
        %v4782 = vshrl.u32 %v4781, 7
        %v4783 = vsub.s32 7, %v4782
        %v4784 = vrot.slane %v3342, %v4783
        %v4785 = vlaneseq
        %v4786 = vshrl.u32 %v4785, 7
        %v4787 = vsub.s32 7, %v4786
        %v4788 = vrot.slane %v3347, %v4787
        %v4789 = vlaneseq
        %v4790 = vshrl.u32 %v4789, 7
        %v4791 = vsub.s32 7, %v4790
        %v4792 = vrot.slane %v3350, %v4791
        %v4793 = vlaneseq
        %v4794 = vshrl.u32 %v4793, 7
        %v4795 = vsub.s32 7, %v4794
        %v4796 = vrot.slane %v3355, %v4795
        %v4797 = vlaneseq
        %v4798 = vshrl.u32 %v4797, 7
        %v4799 = vsub.s32 7, %v4798
        %v4800 = vrot.slane %v3358, %v4799
        %v4801 = vlaneseq
        %v4802 = vshrl.u32 %v4801, 7
        %v4803 = vsub.s32 7, %v4802
        %v4804 = vrot.slane %v3363, %v4803
        %v4805 = vlaneseq
        %v4806 = vshrl.u32 %v4805, 7
        %v4807 = vsub.s32 7, %v4806
        %v4808 = vrot.slane %v3366, %v4807
        %v4809 = vlaneseq
        %v4810 = vshrl.u32 %v4809, 7
        %v4811 = vsub.s32 7, %v4810
        %v4812 = vrot.slane %v3371, %v4811
        %v4813 = vlaneseq
        %v4814 = vshrl.u32 %v4813, 7
        %v4815 = vsub.s32 7, %v4814
        %v4816 = vrot.slane %v3374, %v4815
        %v4817 = vlaneseq
        %v4818 = vshrl.u32 %v4817, 7
        %v4819 = vsub.s32 7, %v4818
        %v4820 = vrot.slane %v3379, %v4819
        %v4821 = vlaneseq
        %v4822 = vshrl.u32 %v4821, 7
        %v4823 = vsub.s32 7, %v4822
        %v4824 = vrot.slane %v3382, %v4823
        %v4825 = vlaneseq
        %v4826 = vshrl.u32 %v4825, 7
        %v4827 = vsub.s32 7, %v4826
        %v4828 = vrot.slane %v3387, %v4827
        %v4829 = vlaneseq
        %v4830 = vshrl.u32 %v4829, 7
        %v4831 = vsub.s32 7, %v4830
        %v4832 = vrot.slane %v3390, %v4831
        %v4833 = vmul.f32 %v2817, %v4708
        %v4834 = vmul.f32 %v2821, %v4712
        %v4835 = vmul.f32 %v2825, %v4716
        %v4836 = vmul.f32 %v2829, %v4720
        %v4837 = vmul.f32 %v2833, %v4724
        %v4838 = vmul.f32 %v2837, %v4728
        %v4839 = vmul.f32 %v2841, %v4732
        %v4840 = vmul.f32 %v2845, %v4736
        %v4841 = vmul.f32 %v2849, %v4740
        %v4842 = vmul.f32 %v2853, %v4744
        %v4843 = vmul.f32 %v2857, %v4748
        %v4844 = vmul.f32 %v2861, %v4752
        %v4845 = vmul.f32 %v2865, %v4756
        %v4846 = vmul.f32 %v2869, %v4760
        %v4847 = vmul.f32 %v2873, %v4764
        %v4848 = vmul.f32 %v2877, %v4768
        %v4849 = vmul.f32 %v2881, %v4772
        %v4850 = vmul.f32 %v2885, %v4776
        %v4851 = vmul.f32 %v2889, %v4780
        %v4852 = vmul.f32 %v2893, %v4784
        %v4853 = vmul.f32 %v2897, %v4788
        %v4854 = vmul.f32 %v2901, %v4792
        %v4855 = vmul.f32 %v2905, %v4796
        %v4856 = vmul.f32 %v2909, %v4800
        %v4857 = vmul.f32 %v2913, %v4804
        %v4858 = vmul.f32 %v2917, %v4808
        %v4859 = vmul.f32 %v2921, %v4812
        %v4860 = vmul.f32 %v2925, %v4816
        %v4861 = vmul.f32 %v2929, %v4820
        %v4862 = vmul.f32 %v2933, %v4824
        %v4863 = vmul.f32 %v2937, %v4828
        %v4864 = vmul.f32 %v2941, %v4832
        %v4865 = vadd.f32 %v4673, %v4833
        %v4866 = vadd.f32 %v4674, %v4834
        %v4867 = vadd.f32 %v4675, %v4835
        %v4868 = vadd.f32 %v4676, %v4836
        %v4869 = vadd.f32 %v4677, %v4837
        %v4870 = vadd.f32 %v4678, %v4838
        %v4871 = vadd.f32 %v4679, %v4839
        %v4872 = vadd.f32 %v4680, %v4840
        %v4873 = vadd.f32 %v4681, %v4841
        %v4874 = vadd.f32 %v4682, %v4842
        %v4875 = vadd.f32 %v4683, %v4843
        %v4876 = vadd.f32 %v4684, %v4844
        %v4877 = vadd.f32 %v4685, %v4845
        %v4878 = vadd.f32 %v4686, %v4846
        %v4879 = vadd.f32 %v4687, %v4847
        %v4880 = vadd.f32 %v4688, %v4848
        %v4881 = vadd.f32 %v4689, %v4849
        %v4882 = vadd.f32 %v4690, %v4850
        %v4883 = vadd.f32 %v4691, %v4851
        %v4884 = vadd.f32 %v4692, %v4852
        %v4885 = vadd.f32 %v4693, %v4853
        %v4886 = vadd.f32 %v4694, %v4854
        %v4887 = vadd.f32 %v4695, %v4855
        %v4888 = vadd.f32 %v4696, %v4856
        %v4889 = vadd.f32 %v4697, %v4857
        %v4890 = vadd.f32 %v4698, %v4858
        %v4891 = vadd.f32 %v4699, %v4859
        %v4892 = vadd.f32 %v4700, %v4860
        %v4893 = vadd.f32 %v4701, %v4861
        %v4894 = vadd.f32 %v4702, %v4862
        %v4895 = vadd.f32 %v4703, %v4863
        %v4896 = vadd.f32 %v4704, %v4864
        %v4897 = vmax.f32 %v4865, 0.0
        %v4898 = vmax.f32 %v4866, 0.0
        %v4899 = vmax.f32 %v4867, 0.0
        %v4900 = vmax.f32 %v4868, 0.0
        %v4901 = vmax.f32 %v4869, 0.0
        %v4902 = vmax.f32 %v4870, 0.0
        %v4903 = vmax.f32 %v4871, 0.0
        %v4904 = vmax.f32 %v4872, 0.0
        %v4905 = vmax.f32 %v4873, 0.0
        %v4906 = vmax.f32 %v4874, 0.0
        %v4907 = vmax.f32 %v4875, 0.0
        %v4908 = vmax.f32 %v4876, 0.0
        %v4909 = vmax.f32 %v4877, 0.0
        %v4910 = vmax.f32 %v4878, 0.0
        %v4911 = vmax.f32 %v4879, 0.0
        %v4912 = vmax.f32 %v4880, 0.0
        %v4913 = vmax.f32 %v4881, 0.0
        %v4914 = vmax.f32 %v4882, 0.0
        %v4915 = vmax.f32 %v4883, 0.0
        %v4916 = vmax.f32 %v4884, 0.0
        %v4917 = vmax.f32 %v4885, 0.0
        %v4918 = vmax.f32 %v4886, 0.0
        %v4919 = vmax.f32 %v4887, 0.0
        %v4920 = vmax.f32 %v4888, 0.0
        %v4921 = vmax.f32 %v4889, 0.0
        %v4922 = vmax.f32 %v4890, 0.0
        %v4923 = vmax.f32 %v4891, 0.0
        %v4924 = vmax.f32 %v4892, 0.0
        %v4925 = vmax.f32 %v4893, 0.0
        %v4926 = vmax.f32 %v4894, 0.0
        %v4927 = vmax.f32 %v4895, 0.0
        %v4928 = vmax.f32 %v4896, 0.0
        %v4929 = vsel %vm3183, %v4897, 0.0
        %v4930 = vrot.slane %v4929, 4
        %v4931 = vadd.f32 %v4929, %v4930
        %v4932 = vrot.slane %v4931, 2
        %v4933 = vadd.f32 %v4931, %v4932
        %v4934 = vrot.slane %v4933, 1
        %v4935 = vadd.f32 %v4933, %v4934
        %v4936 = vsel %vm3183, %v4898, 0.0
        %v4937 = vrot.slane %v4936, 4
        %v4938 = vadd.f32 %v4936, %v4937
        %v4939 = vrot.slane %v4938, 2
        %v4940 = vadd.f32 %v4938, %v4939
        %v4941 = vrot.slane %v4940, 1
        %v4942 = vadd.f32 %v4940, %v4941
        %v4943 = vsel %vm3183, %v4899, 0.0
        %v4944 = vrot.slane %v4943, 4
        %v4945 = vadd.f32 %v4943, %v4944
        %v4946 = vrot.slane %v4945, 2
        %v4947 = vadd.f32 %v4945, %v4946
        %v4948 = vrot.slane %v4947, 1
        %v4949 = vadd.f32 %v4947, %v4948
        %v4950 = vsel %vm3183, %v4900, 0.0
        %v4951 = vrot.slane %v4950, 4
        %v4952 = vadd.f32 %v4950, %v4951
        %v4953 = vrot.slane %v4952, 2
        %v4954 = vadd.f32 %v4952, %v4953
        %v4955 = vrot.slane %v4954, 1
        %v4956 = vadd.f32 %v4954, %v4955
        %v4957 = vsel %vm3183, %v4901, 0.0
        %v4958 = vrot.slane %v4957, 4
        %v4959 = vadd.f32 %v4957, %v4958
        %v4960 = vrot.slane %v4959, 2
        %v4961 = vadd.f32 %v4959, %v4960
        %v4962 = vrot.slane %v4961, 1
        %v4963 = vadd.f32 %v4961, %v4962
        %v4964 = vsel %vm3183, %v4902, 0.0
        %v4965 = vrot.slane %v4964, 4
        %v4966 = vadd.f32 %v4964, %v4965
        %v4967 = vrot.slane %v4966, 2
        %v4968 = vadd.f32 %v4966, %v4967
        %v4969 = vrot.slane %v4968, 1
        %v4970 = vadd.f32 %v4968, %v4969
        %v4971 = vsel %vm3183, %v4903, 0.0
        %v4972 = vrot.slane %v4971, 4
        %v4973 = vadd.f32 %v4971, %v4972
        %v4974 = vrot.slane %v4973, 2
        %v4975 = vadd.f32 %v4973, %v4974
        %v4976 = vrot.slane %v4975, 1
        %v4977 = vadd.f32 %v4975, %v4976
        %v4978 = vsel %vm3183, %v4904, 0.0
        %v4979 = vrot.slane %v4978, 4
        %v4980 = vadd.f32 %v4978, %v4979
        %v4981 = vrot.slane %v4980, 2
        %v4982 = vadd.f32 %v4980, %v4981
        %v4983 = vrot.slane %v4982, 1
        %v4984 = vadd.f32 %v4982, %v4983
        %v4985 = vsel %vm3183, %v4905, 0.0
        %v4986 = vrot.slane %v4985, 4
        %v4987 = vadd.f32 %v4985, %v4986
        %v4988 = vrot.slane %v4987, 2
        %v4989 = vadd.f32 %v4987, %v4988
        %v4990 = vrot.slane %v4989, 1
        %v4991 = vadd.f32 %v4989, %v4990
        %v4992 = vsel %vm3183, %v4906, 0.0
        %v4993 = vrot.slane %v4992, 4
        %v4994 = vadd.f32 %v4992, %v4993
        %v4995 = vrot.slane %v4994, 2
        %v4996 = vadd.f32 %v4994, %v4995
        %v4997 = vrot.slane %v4996, 1
        %v4998 = vadd.f32 %v4996, %v4997
        %v4999 = vsel %vm3183, %v4907, 0.0
        %v5000 = vrot.slane %v4999, 4
        %v5001 = vadd.f32 %v4999, %v5000
        %v5002 = vrot.slane %v5001, 2
        %v5003 = vadd.f32 %v5001, %v5002
        %v5004 = vrot.slane %v5003, 1
        %v5005 = vadd.f32 %v5003, %v5004
        %v5006 = vsel %vm3183, %v4908, 0.0
        %v5007 = vrot.slane %v5006, 4
        %v5008 = vadd.f32 %v5006, %v5007
        %v5009 = vrot.slane %v5008, 2
        %v5010 = vadd.f32 %v5008, %v5009
        %v5011 = vrot.slane %v5010, 1
        %v5012 = vadd.f32 %v5010, %v5011
        %v5013 = vsel %vm3183, %v4909, 0.0
        %v5014 = vrot.slane %v5013, 4
        %v5015 = vadd.f32 %v5013, %v5014
        %v5016 = vrot.slane %v5015, 2
        %v5017 = vadd.f32 %v5015, %v5016
        %v5018 = vrot.slane %v5017, 1
        %v5019 = vadd.f32 %v5017, %v5018
        %v5020 = vsel %vm3183, %v4910, 0.0
        %v5021 = vrot.slane %v5020, 4
        %v5022 = vadd.f32 %v5020, %v5021
        %v5023 = vrot.slane %v5022, 2
        %v5024 = vadd.f32 %v5022, %v5023
        %v5025 = vrot.slane %v5024, 1
        %v5026 = vadd.f32 %v5024, %v5025
        %v5027 = vsel %vm3183, %v4911, 0.0
        %v5028 = vrot.slane %v5027, 4
        %v5029 = vadd.f32 %v5027, %v5028
        %v5030 = vrot.slane %v5029, 2
        %v5031 = vadd.f32 %v5029, %v5030
        %v5032 = vrot.slane %v5031, 1
        %v5033 = vadd.f32 %v5031, %v5032
        %v5034 = vsel %vm3183, %v4912, 0.0
        %v5035 = vrot.slane %v5034, 4
        %v5036 = vadd.f32 %v5034, %v5035
        %v5037 = vrot.slane %v5036, 2
        %v5038 = vadd.f32 %v5036, %v5037
        %v5039 = vrot.slane %v5038, 1
        %v5040 = vadd.f32 %v5038, %v5039
        %v5041 = vsel %vm3183, %v4913, 0.0
        %v5042 = vrot.slane %v5041, 4
        %v5043 = vadd.f32 %v5041, %v5042
        %v5044 = vrot.slane %v5043, 2
        %v5045 = vadd.f32 %v5043, %v5044
        %v5046 = vrot.slane %v5045, 1
        %v5047 = vadd.f32 %v5045, %v5046
        %v5048 = vsel %vm3183, %v4914, 0.0
        %v5049 = vrot.slane %v5048, 4
        %v5050 = vadd.f32 %v5048, %v5049
        %v5051 = vrot.slane %v5050, 2
        %v5052 = vadd.f32 %v5050, %v5051
        %v5053 = vrot.slane %v5052, 1
        %v5054 = vadd.f32 %v5052, %v5053
        %v5055 = vsel %vm3183, %v4915, 0.0
        %v5056 = vrot.slane %v5055, 4
        %v5057 = vadd.f32 %v5055, %v5056
        %v5058 = vrot.slane %v5057, 2
        %v5059 = vadd.f32 %v5057, %v5058
        %v5060 = vrot.slane %v5059, 1
        %v5061 = vadd.f32 %v5059, %v5060
        %v5062 = vsel %vm3183, %v4916, 0.0
        %v5063 = vrot.slane %v5062, 4
        %v5064 = vadd.f32 %v5062, %v5063
        %v5065 = vrot.slane %v5064, 2
        %v5066 = vadd.f32 %v5064, %v5065
        %v5067 = vrot.slane %v5066, 1
        %v5068 = vadd.f32 %v5066, %v5067
        %v5069 = vsel %vm3183, %v4917, 0.0
        %v5070 = vrot.slane %v5069, 4
        %v5071 = vadd.f32 %v5069, %v5070
        %v5072 = vrot.slane %v5071, 2
        %v5073 = vadd.f32 %v5071, %v5072
        %v5074 = vrot.slane %v5073, 1
        %v5075 = vadd.f32 %v5073, %v5074
        %v5076 = vsel %vm3183, %v4918, 0.0
        %v5077 = vrot.slane %v5076, 4
        %v5078 = vadd.f32 %v5076, %v5077
        %v5079 = vrot.slane %v5078, 2
        %v5080 = vadd.f32 %v5078, %v5079
        %v5081 = vrot.slane %v5080, 1
        %v5082 = vadd.f32 %v5080, %v5081
        %v5083 = vsel %vm3183, %v4919, 0.0
        %v5084 = vrot.slane %v5083, 4
        %v5085 = vadd.f32 %v5083, %v5084
        %v5086 = vrot.slane %v5085, 2
        %v5087 = vadd.f32 %v5085, %v5086
        %v5088 = vrot.slane %v5087, 1
        %v5089 = vadd.f32 %v5087, %v5088
        %v5090 = vsel %vm3183, %v4920, 0.0
        %v5091 = vrot.slane %v5090, 4
        %v5092 = vadd.f32 %v5090, %v5091
        %v5093 = vrot.slane %v5092, 2
        %v5094 = vadd.f32 %v5092, %v5093
        %v5095 = vrot.slane %v5094, 1
        %v5096 = vadd.f32 %v5094, %v5095
        %v5097 = vsel %vm3183, %v4921, 0.0
        %v5098 = vrot.slane %v5097, 4
        %v5099 = vadd.f32 %v5097, %v5098
        %v5100 = vrot.slane %v5099, 2
        %v5101 = vadd.f32 %v5099, %v5100
        %v5102 = vrot.slane %v5101, 1
        %v5103 = vadd.f32 %v5101, %v5102
        %v5104 = vsel %vm3183, %v4922, 0.0
        %v5105 = vrot.slane %v5104, 4
        %v5106 = vadd.f32 %v5104, %v5105
        %v5107 = vrot.slane %v5106, 2
        %v5108 = vadd.f32 %v5106, %v5107
        %v5109 = vrot.slane %v5108, 1
        %v5110 = vadd.f32 %v5108, %v5109
        %v5111 = vsel %vm3183, %v4923, 0.0
        %v5112 = vrot.slane %v5111, 4
        %v5113 = vadd.f32 %v5111, %v5112
        %v5114 = vrot.slane %v5113, 2
        %v5115 = vadd.f32 %v5113, %v5114
        %v5116 = vrot.slane %v5115, 1
        %v5117 = vadd.f32 %v5115, %v5116
        %v5118 = vsel %vm3183, %v4924, 0.0
        %v5119 = vrot.slane %v5118, 4
        %v5120 = vadd.f32 %v5118, %v5119
        %v5121 = vrot.slane %v5120, 2
        %v5122 = vadd.f32 %v5120, %v5121
        %v5123 = vrot.slane %v5122, 1
        %v5124 = vadd.f32 %v5122, %v5123
        %v5125 = vsel %vm3183, %v4925, 0.0
        %v5126 = vrot.slane %v5125, 4
        %v5127 = vadd.f32 %v5125, %v5126
        %v5128 = vrot.slane %v5127, 2
        %v5129 = vadd.f32 %v5127, %v5128
        %v5130 = vrot.slane %v5129, 1
        %v5131 = vadd.f32 %v5129, %v5130
        %v5132 = vsel %vm3183, %v4926, 0.0
        %v5133 = vrot.slane %v5132, 4
        %v5134 = vadd.f32 %v5132, %v5133
        %v5135 = vrot.slane %v5134, 2
        %v5136 = vadd.f32 %v5134, %v5135
        %v5137 = vrot.slane %v5136, 1
        %v5138 = vadd.f32 %v5136, %v5137
        %v5139 = vsel %vm3183, %v4927, 0.0
        %v5140 = vrot.slane %v5139, 4
        %v5141 = vadd.f32 %v5139, %v5140
        %v5142 = vrot.slane %v5141, 2
        %v5143 = vadd.f32 %v5141, %v5142
        %v5144 = vrot.slane %v5143, 1
        %v5145 = vadd.f32 %v5143, %v5144
        %v5146 = vsel %vm3183, %v4928, 0.0
        %v5147 = vrot.slane %v5146, 4
        %v5148 = vadd.f32 %v5146, %v5147
        %v5149 = vrot.slane %v5148, 2
        %v5150 = vadd.f32 %v5148, %v5149
        %v5151 = vrot.slane %v5150, 1
        %v5152 = vadd.f32 %v5150, %v5151
        %v5153 = vmul.f32 %v4935, 0.125
        %v5154 = vmul.f32 %v4942, 0.125
        %v5155 = vmul.f32 %v4949, 0.125
        %v5156 = vmul.f32 %v4956, 0.125
        %v5157 = vmul.f32 %v4963, 0.125
        %v5158 = vmul.f32 %v4970, 0.125
        %v5159 = vmul.f32 %v4977, 0.125
        %v5160 = vmul.f32 %v4984, 0.125
        %v5161 = vmul.f32 %v4991, 0.125
        %v5162 = vmul.f32 %v4998, 0.125
        %v5163 = vmul.f32 %v5005, 0.125
        %v5164 = vmul.f32 %v5012, 0.125
        %v5165 = vmul.f32 %v5019, 0.125
        %v5166 = vmul.f32 %v5026, 0.125
        %v5167 = vmul.f32 %v5033, 0.125
        %v5168 = vmul.f32 %v5040, 0.125
        %v5169 = vmul.f32 %v5047, 0.125
        %v5170 = vmul.f32 %v5054, 0.125
        %v5171 = vmul.f32 %v5061, 0.125
        %v5172 = vmul.f32 %v5068, 0.125
        %v5173 = vmul.f32 %v5075, 0.125
        %v5174 = vmul.f32 %v5082, 0.125
        %v5175 = vmul.f32 %v5089, 0.125
        %v5176 = vmul.f32 %v5096, 0.125
        %v5177 = vmul.f32 %v5103, 0.125
        %v5178 = vmul.f32 %v5110, 0.125
        %v5179 = vmul.f32 %v5117, 0.125
        %v5180 = vmul.f32 %v5124, 0.125
        %v5181 = vmul.f32 %v5131, 0.125
        %v5182 = vmul.f32 %v5138, 0.125
        %v5183 = vmul.f32 %v5145, 0.125
        %v5184 = vmul.f32 %v5152, 0.125
        %v5185 = vld [vmem:[%s4] sm:$0xff]
        %v5186 = vld [vmem:[%s4 + $0x8] sm:$0xff]
        %v5187 = vld [vmem:[%s4 + $0x10] sm:$0xff]
        %v5188 = vld [vmem:[%s4 + $0x18] sm:$0xff]
        %v5189 = vpack.c.bf16 %v5186, %v5185
        %v5190 = vpack.c.bf16 %v5188, %v5187
        %v5191 = vld [vmem:[%s4 + $0x20] sm:$0x1]
        %v5192 = vpack.c.bf16 %v5153, %v5153
        %v5193 = vpack.c.bf16 %v5154, %v5154
        %v5194 = vpack.c.bf16 %v5155, %v5155
        %v5195 = vpack.c.bf16 %v5156, %v5156
        %v5196 = vpack.c.bf16 %v5157, %v5157
        %v5197 = vpack.c.bf16 %v5158, %v5158
        %v5198 = vpack.c.bf16 %v5159, %v5159
        %v5199 = vpack.c.bf16 %v5160, %v5160
        %v5200 = vpack.c.bf16 %v5161, %v5161
        %v5201 = vpack.c.bf16 %v5162, %v5162
        %v5202 = vpack.c.bf16 %v5163, %v5163
        %v5203 = vpack.c.bf16 %v5164, %v5164
        %v5204 = vpack.c.bf16 %v5165, %v5165
        %v5205 = vpack.c.bf16 %v5166, %v5166
        %v5206 = vpack.c.bf16 %v5167, %v5167
        %v5207 = vpack.c.bf16 %v5168, %v5168
        %v5208 = vpack.c.bf16 %v5169, %v5169
        %v5209 = vpack.c.bf16 %v5170, %v5170
        %v5210 = vpack.c.bf16 %v5171, %v5171
        %v5211 = vpack.c.bf16 %v5172, %v5172
        %v5212 = vpack.c.bf16 %v5173, %v5173
        %v5213 = vpack.c.bf16 %v5174, %v5174
        %v5214 = vpack.c.bf16 %v5175, %v5175
        %v5215 = vpack.c.bf16 %v5176, %v5176
        %v5216 = vpack.c.bf16 %v5177, %v5177
        %v5217 = vpack.c.bf16 %v5178, %v5178
        %v5218 = vpack.c.bf16 %v5179, %v5179
        %v5219 = vpack.c.bf16 %v5180, %v5180
        %v5220 = vpack.c.bf16 %v5181, %v5181
        %v5221 = vpack.c.bf16 %v5182, %v5182
        %v5222 = vpack.c.bf16 %v5183, %v5183
        %v5223 = vpack.c.bf16 %v5184, %v5184
        %v5224 = vlaneseq
        %v5225 = vshrl.u32 %v5224, 7
        %v5226 = vsub.s32 0, %v5225
        %v5227 = vrot.slane %v5191, %v5226
        %v5260 = vunpack.c.l.b16 %v5192
        %v5261 = vunpack.c.l.b16 %v5193
        %v5262 = vunpack.c.l.b16 %v5194
        %v5263 = vunpack.c.l.b16 %v5195
        %v5264 = vunpack.c.l.b16 %v5196
        %v5265 = vunpack.c.l.b16 %v5197
        %v5266 = vunpack.c.l.b16 %v5198
        %v5267 = vunpack.c.l.b16 %v5199
        %v5268 = vunpack.c.l.b16 %v5200
        %v5269 = vunpack.c.l.b16 %v5201
        %v5270 = vunpack.c.l.b16 %v5202
        %v5271 = vunpack.c.l.b16 %v5203
        %v5272 = vunpack.c.l.b16 %v5204
        %v5273 = vunpack.c.l.b16 %v5205
        %v5274 = vunpack.c.l.b16 %v5206
        %v5275 = vunpack.c.l.b16 %v5207
        %v5276 = vunpack.c.l.b16 %v5208
        %v5277 = vunpack.c.l.b16 %v5209
        %v5278 = vunpack.c.l.b16 %v5210
        %v5279 = vunpack.c.l.b16 %v5211
        %v5280 = vunpack.c.l.b16 %v5212
        %v5281 = vunpack.c.l.b16 %v5213
        %v5282 = vunpack.c.l.b16 %v5214
        %v5283 = vunpack.c.l.b16 %v5215
        %v5284 = vunpack.c.l.b16 %v5216
        %v5285 = vunpack.c.l.b16 %v5217
        %v5286 = vunpack.c.l.b16 %v5218
        %v5287 = vunpack.c.l.b16 %v5219
        %v5288 = vunpack.c.l.b16 %v5220
        %v5289 = vunpack.c.l.b16 %v5221
        %v5290 = vunpack.c.l.b16 %v5222
        %v5291 = vunpack.c.l.b16 %v5223
        %vm5292 = vcmask 1041409
        %v5293 = vsel %vm5292, %v5261, %v5260
        %vm5294 = vcmask 1042434
        %v5295 = vsel %vm5294, %v5262, %v5293
        %vm5296 = vcmask 1043459
        %v5297 = vsel %vm5296, %v5263, %v5295
        %vm5298 = vcmask 1044484
        %v5299 = vsel %vm5298, %v5264, %v5297
        %vm5300 = vcmask 1045509
        %v5301 = vsel %vm5300, %v5265, %v5299
        %vm5302 = vcmask 1046534
        %v5303 = vsel %vm5302, %v5266, %v5301
        %vm5304 = vcmask 1047559
        %v5305 = vsel %vm5304, %v5267, %v5303
        %v5306 = vsel %vm5292, %v5269, %v5268
        %v5307 = vsel %vm5294, %v5270, %v5306
        %v5308 = vsel %vm5296, %v5271, %v5307
        %v5309 = vsel %vm5298, %v5272, %v5308
        %v5310 = vsel %vm5300, %v5273, %v5309
        %v5311 = vsel %vm5302, %v5274, %v5310
        %v5312 = vsel %vm5304, %v5275, %v5311
        %v5313 = vsel %vm5292, %v5277, %v5276
        %v5314 = vsel %vm5294, %v5278, %v5313
        %v5315 = vsel %vm5296, %v5279, %v5314
        %v5316 = vsel %vm5298, %v5280, %v5315
        %v5317 = vsel %vm5300, %v5281, %v5316
        %v5318 = vsel %vm5302, %v5282, %v5317
        %v5319 = vsel %vm5304, %v5283, %v5318
        %v5320 = vsel %vm5292, %v5285, %v5284
        %v5321 = vsel %vm5294, %v5286, %v5320
        %v5322 = vsel %vm5296, %v5287, %v5321
        %v5323 = vsel %vm5298, %v5288, %v5322
        %v5324 = vsel %vm5300, %v5289, %v5323
        %v5325 = vsel %vm5302, %v5290, %v5324
        %v5326 = vsel %vm5304, %v5291, %v5325
        %v5327 = vpack.c.b16 %v5312, %v5305
        %v5328 = vpack.c.b16 %v5326, %v5319
        %v5330 = vsel %vm3183, %v5327, 0
        %v5333 = vsel %vm3183, %v5328, 0
        %5335 = vmatprep.subr.bf16.mxu0 0
        %5336 = vmatpush1.bf16.msra.mxu0 %v5189
        %5337 = vmatprep.subr.bf16.mxu0 0
        %5338 = vmatpush1.bf16.msra.mxu0 %v5190
        %5339 = vmatprep.subr.bf16.mxu0 0
        %5340 = vmatpush1.bf16.msra.mxu0 0
        %5341 = vmatprep.subr.bf16.mxu0 0
        %5342 = vmatpush1.bf16.msra.mxu0 0
        %5343 = vmatprep.subr.bf16.mxu0 0
        %5344 = vmatpush1.bf16.msra.mxu0 0
        %5345 = vmatprep.subr.bf16.mxu0 0
        %5346 = vmatpush1.bf16.msra.mxu0 0
        %5347 = vmatprep.subr.bf16.mxu0 0
        %5348 = vmatpush1.bf16.msra.mxu0 0
        %5349 = vmatprep.subr.bf16.mxu0 0
        %5350 = vmatpush1.bf16.msra.mxu0 0
        %5351 = vmatprep.subr.bf16.mxu0 0
        %5352 = vmatpush1.bf16.msra.mxu0 0
        %5353 = vmatprep.subr.bf16.mxu0 0
        %5354 = vmatpush1.bf16.msra.mxu0 0
        %5355 = vmatprep.subr.bf16.mxu0 0
        %5356 = vmatpush1.bf16.msra.mxu0 0
        %5357 = vmatprep.subr.bf16.mxu0 0
        %5358 = vmatpush1.bf16.msra.mxu0 0
        %5359 = vmatprep.subr.bf16.mxu0 0
        %5360 = vmatpush1.bf16.msra.mxu0 0
        %5361 = vmatprep.subr.bf16.mxu0 0
        %5362 = vmatpush1.bf16.msra.mxu0 0
        %5363 = vmatprep.subr.bf16.mxu0 0
        %5364 = vmatpush1.bf16.msra.mxu0 0
        %5365 = vmatprep.subr.bf16.mxu0 0
        %5366 = vmatpush1.bf16.msra.mxu0 0
        %5367 = vmatprep.mubr.bf16.mxu0 0
        %5368 = vmatmul.mubr.bf16.gmra.mrb[0].mxu0 %v5330
        %v5369 = vpop.f32.mrb[0].mxu0
        %v5370 = vadd.f32 %v5227, %v5369
        %v5371 = vpop.f32.mrb[0].mxu0
        %v5372 = vpop.f32.mrb[0].mxu0
        %v5373 = vadd.f32 %v5227, %v5372
        %v5374 = vpop.f32.mrb[0].mxu0
        %5375 = vmatprep.mubr.bf16.mxu0 0
        %5376 = vmatmul.mubr.bf16.gmra.mrb[0].mxu0 %v5333
        %v5377 = vpop.f32.mrb[0].mxu0
        %v5378 = vadd.f32 %v5227, %v5377
        %v5379 = vpop.f32.mrb[0].mxu0
        %v5380 = vpop.f32.mrb[0].mxu0
        %v5381 = vadd.f32 %v5227, %v5380
        %v5382 = vpop.f32.mrb[0].mxu0
        %5383 = vdwg.mxu0
        %v5384 = vmax.f32 %v5370, 0.0
        %v5385 = vmax.f32 %v5373, 0.0
        %v5386 = vmax.f32 %v5378, 0.0
        %v5387 = vmax.f32 %v5381, 0.0
        %v5388 = vld [vmem:[%s5] sm:$0xff]
        %v5389 = vpack.c.bf16 %v5388, %v5388
        %v5390 = vld [vmem:[%s5 + $0x8] sm:$0x1]
        %v5391 = vpack.c.bf16 %v5385, %v5384
        %v5392 = vpack.c.bf16 %v5387, %v5386
        %v5393 = vlaneseq
        %v5394 = vshrl.u32 %v5393, 7
        %v5395 = vsub.s32 0, %v5394
        %v5396 = vrot.slane %v5390, %v5395
        %vm5397 = vcmask 64512
        %v5399 = vsel %vm5397, %v5391, 0
        %v5402 = vsel %vm5397, %v5392, 0
        %vm5404 = vcmask 1043456
        %v5406 = vsel %vm5404, %v5389, 0
        %5408 = vmatprep.subr.bf16.mxu0 0
        %5409 = vmatpush1.bf16.msra.mxu0 %v5406
        %5410 = vmatprep.subr.bf16.mxu0 0
        %5411 = vmatpush1.bf16.msra.mxu0 0
        %5412 = vmatprep.subr.bf16.mxu0 0
        %5413 = vmatpush1.bf16.msra.mxu0 0
        %5414 = vmatprep.subr.bf16.mxu0 0
        %5415 = vmatpush1.bf16.msra.mxu0 0
        %5416 = vmatprep.subr.bf16.mxu0 0
        %5417 = vmatpush1.bf16.msra.mxu0 0
        %5418 = vmatprep.subr.bf16.mxu0 0
        %5419 = vmatpush1.bf16.msra.mxu0 0
        %5420 = vmatprep.subr.bf16.mxu0 0
        %5421 = vmatpush1.bf16.msra.mxu0 0
        %5422 = vmatprep.subr.bf16.mxu0 0
        %5423 = vmatpush1.bf16.msra.mxu0 0
        %5424 = vmatprep.subr.bf16.mxu0 0
        %5425 = vmatpush1.bf16.msra.mxu0 0
        %5426 = vmatprep.subr.bf16.mxu0 0
        %5427 = vmatpush1.bf16.msra.mxu0 0
        %5428 = vmatprep.subr.bf16.mxu0 0
        %5429 = vmatpush1.bf16.msra.mxu0 0
        %5430 = vmatprep.subr.bf16.mxu0 0
        %5431 = vmatpush1.bf16.msra.mxu0 0
        %5432 = vmatprep.subr.bf16.mxu0 0
        %5433 = vmatpush1.bf16.msra.mxu0 0
        %5434 = vmatprep.subr.bf16.mxu0 0
        %5435 = vmatpush1.bf16.msra.mxu0 0
        %5436 = vmatprep.subr.bf16.mxu0 0
        %5437 = vmatpush1.bf16.msra.mxu0 0
        %5438 = vmatprep.subr.bf16.mxu0 0
        %5439 = vmatpush1.bf16.msra.mxu0 0
        %5440 = vmatprep.mubr.bf16.mxu0 0
        %5441 = vmatmul.mubr.bf16.gmra.mrb[0].mxu0 %v5399
        %v5442 = vpop.f32.mrb[0].mxu0
        %v5443 = vadd.f32 %v5396, %v5442
        %v5444 = vpop.f32.mrb[0].mxu0
        %v5445 = vpop.f32.mrb[0].mxu0
        %v5446 = vadd.f32 %v5396, %v5445
        %v5447 = vpop.f32.mrb[0].mxu0
        %5448 = vmatprep.mubr.bf16.mxu0 0
        %5449 = vmatmul.mubr.bf16.gmra.mrb[0].mxu0 %v5402
        %v5450 = vpop.f32.mrb[0].mxu0
        %v5451 = vadd.f32 %v5396, %v5450
        %v5452 = vpop.f32.mrb[0].mxu0
        %v5453 = vpop.f32.mrb[0].mxu0
        %v5454 = vadd.f32 %v5396, %v5453
        %v5455 = vpop.f32.mrb[0].mxu0
        %5456 = vdwg.mxu0
        %5457 = vst [vmem:[%s261] sm:$0xff] %v5443
        %5458 = vst [vmem:[%s261 + $0x8] sm:$0xff] %v5446
        %5459 = vst [vmem:[%s261 + $0x10] sm:$0xff] %v5451
        %5460 = vst [vmem:[%s261 + $0x18] sm:$0xff] %v5454
        %s5461 = sand.u32 %s164, 1
        %s5462 = scalar_lea.sflag [#allocation3], %s5461
        %s5463 = sand.u32 %s164, 1
        %s5464 = smul.addr %s5463, 32
        %s5465 = scalar_lea.vmem [#allocation2], %s5464
        // Predicated region
        $region45: #{tpu_custom_call.1} parent=43 // pred_check
          %p5466 = pneg %p174
        $region46: #{tpu_custom_call.1} parent=43 // pred_check_branch
          %5468 = sbr.rel (%p5466) target = $region48
        $region47: #{tpu_custom_call.1} parent=43 // pred_region
          %s5469 = smul.u32 4, %s20
          %s5471 = ssub.s32 512, 512
          %5472 = vsyncadd %s5462, %s5471
          %s5473 = smul.addr %s5469, 128
          %s5474 = scalar_lea.hbm %s6, %s5473
          %s5475 = sshll.u32 %s5465, 4
          %s5476 = int_to_ptr.vmem [resolvable:$true] %s5475
          %5481 = dma.vmem_to_hbm [thread:$0]  %s5476, 512, %s5474, %s5462, 128, 128, 8
        $region48: #{tpu_custom_call.1} parent=43 // pred_fallthru
          _
      $region44: #{tpu_custom_call.1} parent=5 // pred_fallthru
        _
      %p5482 = scmp.le.s32.totalorder 2, %s15
      // Predicated region
      $region49: #{tpu_custom_call.1} parent=5 // pred_check
        %p5483 = pneg %p5482
      $region50: #{tpu_custom_call.1} parent=5 // pred_check_branch
        %5485 = sbr.rel (%p5483) target = $region52
      $region51: #{tpu_custom_call.1} parent=5 // pred_region
        %s5486 = ssub.s32 %s15, 2
        // Predicated region
        $region53: #{tpu_custom_call.1} parent=51 // pred_check
          %p5487 = pneg %p180
        $region54: #{tpu_custom_call.1} parent=51 // pred_check_branch
          %5489 = sbr.rel (%p5487) target = $region56
        $region55: #{tpu_custom_call.1} parent=51 // pred_region
          %s5490 = sand.u32 %s165, 1
          %s5491 = scalar_lea.sflag [#allocation3], %s5490
          %s5492 = sand.u32 %s165, 1
          %s5493 = smul.addr %s5492, 32
          %s5494 = scalar_lea.vmem [#allocation2], %s5493
          %5495 = dma.done %s5491, 512
        $region56: #{tpu_custom_call.1} parent=51 // pred_fallthru
          _
      $region52: #{tpu_custom_call.1} parent=5 // pred_fallthru
        _
    $region6: #{tpu_custom_call.1} parent=1 // loop_footer
      %s19 = sadd.s32 1, %s15
    $region7: #{tpu_custom_call.1} parent=1 // loop_footer_branch
      %14 = sbr.rel target = $region3
    $region8: #{tpu_custom_call.1} parent=1 // loop_exit
      _
    %5496 = vsyncpa [#allocation3], 1
    %s5497 = scalar_lea.sflag [#allocation3], 1
    %5498 = vsyncpa %s5497, 1

</llo_original>
